<compile_context>
chip_gen: v7x
topology: tpu7x:2x2x1
jax: 0.10.0
libtpu: 0.0.40
codegen_flags: <defaults>
</compile_context>

<pallas_src>
import functools

import jax
import jax.numpy as jnp
import numpy as np
from jax.experimental import pallas as pl
from jax.experimental.pallas import tpu as pltpu


def _pinv_decode_kernel(x_ref, w_ref, o_ref, *, dup, cs, tt):
    """One (batch, time-tile) step of the transpose-conv.

    x_ref : (1, 1, n_bases, tt + dup - 1)  bf16  tile frames + left halo (time on lanes)
    w_ref : (dup*cs, n_bases)              bf16  pinv taps, rows ordered (d, c, r)
    o_ref : (1, cs, tt)                    f32   output groups, cs = Cin * stride
    """
    halo = dup - 1
    x = x_ref[0, 0, :, :]                 # (n_bases, tt + halo)
    w = w_ref[...]                        # (dup*cs, n_bases)

    # Hot path: one MXU pass producing every tap of every frame in this tile.
    frames = jnp.dot(w, x, preferred_element_type=jnp.float32)   # (dup*cs, tt+halo) f32

    # Overlap-add over taps d: output group q (global s = tile_start + q) takes frame
    # s - d, which is column (q + halo - d) of the extended tile.  All shifts are
    # static lane slices -> pure register accumulation, one dense store at the end.
    acc = frames[0:cs, halo:halo + tt]
    for d in range(1, dup):               # dup = kernel_size // stride, small & static
        acc = acc + frames[d * cs:(d + 1) * cs, halo - d:halo - d + tt]

    o_ref[0, :, :] = acc


@functools.partial(jax.jit, static_argnames=("kernel_size", "stride", "t_tile"))
def pinv_encoder_forward(x, weight, kernel_size, stride, t_tile=512):
    """x: (B, n_bases, T) f32 [NCL];  weight: (n_bases, Cin, kernel_size) f32.

    Returns conv_transpose1d(x, pinv_weight, stride): (B, Cin, (T-1)*stride + K) f32.
    """
    n_bases, cin, K = weight.shape
    assert K == kernel_size
    if n_bases < K:
        raise ValueError("out_channels must be >= kernel_size for the left inverse.")
    assert K % stride == 0, "overlap-add decomposition assumes kernel_size % stride == 0"
    dup = K // stride
    halo = dup - 1
    cs = cin * stride

    B, _, T = x.shape
    s_out = T + halo                       # number of stride-wide output groups
    L = (T - 1) * stride + K               # = s_out * stride

    # ---- time tiling: large lane-dense tiles; multiple of 128 when tiled ----------
    if s_out <= t_tile:
        tt, n_tiles = s_out, 1
    else:
        tt = max(128, (t_tile // 128) * 128)
        n_tiles = pl.cdiv(s_out, tt)
    G = n_tiles * tt                       # output groups actually computed (>= s_out)

    # ---- glue: pseudo-inverse of the encoder bases (SVD; no Pallas equivalent) ----
    w_perm = jnp.transpose(weight, (1, 0, 2))                          # (Cin, n_bases, K)
    w_pinv = jnp.transpose(jnp.linalg.pinv(w_perm), (2, 0, 1)) / dup   # (n_bases, Cin, K)
    # Rows ordered (d, c, r) with tap k = d*stride + r:
    #   W2[d*cs + c*stride + r, n] = w_pinv[n, c, d*stride + r]
    w2 = jnp.transpose(w_pinv.reshape(n_bases, cin, dup, stride),
                       (2, 1, 3, 0)).reshape(dup * cs, n_bases)
    w2 = w2.astype(jnp.bfloat16)           # bf16 MXU inputs, f32 accumulation/output

    # ---- input windows: tile frames + left halo; NCL preserved, time on lanes -----
    x_bf = x.astype(jnp.bfloat16)
    x_pl = jnp.pad(x_bf, ((0, 0), (0, 0), (halo, G - T)))      # (B, n_bases, halo + G)
    windows = jnp.stack(
        [x_pl[:, :, i * tt:i * tt + tt + halo] for i in range(n_tiles)], axis=1
    )                                                          # (B, n_tiles, n_bases, tt+halo)

    kernel = functools.partial(_pinv_decode_kernel, dup=dup, cs=cs, tt=tt)
    out_k = pl.pallas_call(
        kernel,
        out_shape=jax.ShapeDtypeStruct((B, cs, G), jnp.float32),
        grid=(B, n_tiles),
        in_specs=[
            pl.BlockSpec((1, 1, n_bases, tt + halo), lambda b, i: (b, i, 0, 0)),
            # Tiny weight: block-invariant spec -> fetched once, stays resident.
            pl.BlockSpec((dup * cs, n_bases), lambda b, i: (0, 0)),
        ],
        out_specs=pl.BlockSpec((1, cs, tt), lambda b, i: (b, 0, i)),
        compiler_params=pltpu.CompilerParams(
            dimension_semantics=("parallel", "parallel"),     # both axes megacore-safe
            vmem_limit_bytes=32 * 1024 * 1024,                # explicit budget (v7x-safe)
        ),
    )(windows, w2)

    # ---- glue: (c*stride + r, s) -> NCL (c, s*stride + r); one fused XLA pass -----
    out = out_k.reshape(B, cin, stride, G)
    out = jnp.transpose(out, (0, 1, 3, 2)).reshape(B, cin, G * stride)
    return out[:, :, :L]


def _reference(x, weight, kernel_size, stride):
    """Pure-JAX f32 reference for conv_transpose1d with the pinverse weight."""
    n_bases, cin, K = weight.shape
    dup = K // stride
    w_perm = jnp.transpose(weight, (1, 0, 2))
    wp = jnp.transpose(jnp.linalg.pinv(w_perm), (2, 0, 1)) / dup   # (n_bases, Cin, K)
    B, _, T = x.shape
    L = (T - 1) * stride + K
    frames = jnp.einsum("bnt,nck->bckt", x, wp)                    # (B, Cin, K, T)
    out = jnp.zeros((B, cin, L), jnp.float32)
    for k in range(K):                                             # K is small & static
        out = out.at[:, :, k:k + (T - 1) * stride + 1:stride].add(frames[:, :, k, :])
    return out


if __name__ == "__main__":
    # Shapes consistent with the module: Encoder Conv1d(in_channels=2, n_bases=32,
    # kernel_size=16, stride=8); latent code (B=2, n_bases=32, T=300).
    # t_tile=128 exercises the multi-tile + halo path: grid = (2, 3).
    B, in_channels, n_bases, kernel_size, stride, T = 2, 2, 32, 16, 8, 300

    key = jax.random.PRNGKey(0)
    k_w, k_x = jax.random.split(key)
    weight = jax.random.normal(k_w, (n_bases, in_channels, kernel_size), jnp.float32)
    x = jax.random.normal(k_x, (B, n_bases, T), jnp.float32)

    out = jax.block_until_ready(
        pinv_encoder_forward(x, weight, kernel_size, stride, t_tile=128))

    ref = jax.block_until_ready(_reference(x, weight, kernel_size, stride))
    assert out.shape == (B, in_channels, (T - 1) * stride + kernel_size), out.shape
    # bf16 MXU inputs vs. all-f32 reference -> modest tolerance.
    assert np.allclose(np.asarray(out), np.asarray(ref), rtol=5e-2, atol=5e-2), (
        float(np.max(np.abs(np.asarray(out) - np.asarray(ref)))))
    print("KERNEL_OK")
</pallas_src>

<mosaic_0001>
module attributes {stable_mosaic.version = 11 : i64} {
  func.func @_pinv_decode_kernel(%arg0: i32, %arg1: i32, %arg2: memref<1x1x32x129xbf16, #tpu.memory_space<vmem>>, %arg3: memref<32x32xbf16, #tpu.memory_space<vmem>>, %arg4: memref<1x16x128xf32, #tpu.memory_space<vmem>>) attributes {dimension_semantics = [#tpu.dimension_semantics<parallel>, #tpu.dimension_semantics<parallel>], iteration_bounds = array<i64: 2, 3>, scalar_prefetch = 0 : i64, scratch_operands = 0 : i64, tpu.core_type = #tpu.core_type<tc>, window_params = [{transform_indices = @transform_0, window_bounds = array<i64: 1, 1, 32, 129>}, {pipeline_mode = #tpu.pipeline_mode<synchronous>, transform_indices = @transform_1, window_bounds = array<i64: 32, 32>}, {transform_indices = @transform_2, window_bounds = array<i64: 1, 16, 128>}]} {
    %c0 = arith.constant 0 : index
    %c0_0 = arith.constant 0 : index
    %c0_1 = arith.constant 0 : index
    %c0_2 = arith.constant 0 : index
    %0 = vector.load %arg2[%c0, %c0_0, %c0_1, %c0_2] : memref<1x1x32x129xbf16, #tpu.memory_space<vmem>>, vector<1x1x32x129xbf16>
    %1 = vector.shape_cast %0 : vector<1x1x32x129xbf16> to vector<32x129xbf16>
    %c0_3 = arith.constant 0 : index
    %c0_4 = arith.constant 0 : index
    %2 = vector.load %arg3[%c0_3, %c0_4] : memref<32x32xbf16, #tpu.memory_space<vmem>>, vector<32x32xbf16>
    %cst = arith.constant dense<0.000000e+00> : vector<32x129xf32>
    %3 = tpu.matmul %2, %1, %cst {dimension_numbers = #tpu.dot_dimension_numbers<[1], [0], [0], [1], [0, 0, 1, 1], [], []>} : vector<32x32xbf16>, vector<32x129xbf16>, vector<32x129xf32> -> vector<32x129xf32>
    %4 = vector.extract_strided_slice %3 {offsets = [0, 1], sizes = [16, 128], strides = [1, 1]} : vector<32x129xf32> to vector<16x128xf32>
    %5 = vector.extract_strided_slice %3 {offsets = [16, 0], sizes = [16, 128], strides = [1, 1]} : vector<32x129xf32> to vector<16x128xf32>
    %6 = arith.addf %4, %5 : vector<16x128xf32>
    %c0_5 = arith.constant 0 : index
    %c0_6 = arith.constant 0 : index
    %c0_7 = arith.constant 0 : index
    %7 = vector.load %arg4[%c0_5, %c0_6, %c0_7] : memref<1x16x128xf32, #tpu.memory_space<vmem>>, vector<1x16x128xf32>
    %8 = vector.shape_cast %7 : vector<1x16x128xf32> to vector<16x128xf32>
    %9 = vector.shape_cast %6 : vector<16x128xf32> to vector<1x16x128xf32>
    tpu.vector_store %arg4[%c0_5, %c0_6, %c0_7], %9 {strides = array<i32>} : memref<1x16x128xf32, #tpu.memory_space<vmem>>, vector<1x16x128xf32>,
    return
  }
  func.func @transform_0(%arg0: i32, %arg1: i32) -> (i32, i32, i32, i32) {
    %c0_i32 = arith.constant 0 : i32
    %c0_i32_0 = arith.constant 0 : i32
    %c0_i32_1 = arith.constant 0 : i32
    return %arg0, %arg1, %c0_i32, %c0_i32_0 : i32, i32, i32, i32
  }
  func.func @transform_1(%arg0: i32, %arg1: i32) -> (i32, i32) {
    %c0_i32 = arith.constant 0 : i32
    %c0_i32_0 = arith.constant 0 : i32
    %c0_i32_1 = arith.constant 0 : i32
    return %c0_i32, %c0_i32_0 : i32, i32
  }
  func.func @transform_2(%arg0: i32, %arg1: i32) -> (i32, i32, i32) {
    %c0_i32 = arith.constant 0 : i32
    %c0_i32_0 = arith.constant 0 : i32
    return %arg0, %c0_i32, %arg1 : i32, i32, i32
  }
}

</mosaic_0001>

<llo_original>
// kernel: custom-call.39
$region0: #{custom-call.39}
  %s0 = inlined_call_operand.hbm [shape: pred[2], index: 0, kind: output, shape index: {}]

// kernel: custom-call.37
$region0: #{custom-call.37}
  %s0 = inlined_call_operand.vmem [shape: f32[2,32,16], index: 0, kind: input, shape index: {}]
  %s1 = inlined_call_operand.vmem [shape: f32[2,32,16], index: 1, kind: output, shape index: {0}]
  %s2 = inlined_call_operand.vmem [shape: f32[2,16], index: 2, kind: output, shape index: {1}]
  %3 = xla_tuple %s1, %s2
  $region1: #{custom-call.37} parent=0
    #allocation0 [shape = 'u8[32768]{0}', space=vmem, size = 0x8000, scoped, tag = 'operand span for operand 0']
    #allocation1 [shape = 'u8[32768]{0}', space=vmem, size = 0x8000, scoped, tag = 'operand span for operand 1']
    #allocation2 [shape = 'u8[4096]{0}', space=vmem, size = 0x1000, scoped, tag = 'operand span for operand 2']
    #allocation3 [shape = 'u8[2048]{0}', space=vmem, size = 0x800, scoped, tag = 'packed  for operand 2']
    loop: start=0, step=1, limit=4
    $region2: #{custom-call.37} parent=1 // loop_pre_header
      _
    $region3: #{custom-call.37} parent=1 // loop_header
      %s5 = sphi 0, %s9
      %p6 = scmp.ge.s32.totalorder %s5, 4
      %s12 = sphi 0, %s31
      %s13 = sphi 0, %s27
      %s14 = sphi 0, %s23
      %s15 = sphi 0, %s12
      %s16 = sphi 0, %s13
      %s17 = sphi 0, %s14
      %s18 = sphi 0, %s15
      %s19 = sphi 0, %s16
      %s20 = sphi 0, %s17
      %s46 = sphi 0, %s48
      %s49 = sphi 0, %s46
      %s50 = sphi 0, %s49
      %s66 = sphi 0, %s50
    $region4: #{custom-call.37} parent=1 // loop_header_branch
      %8 = sbr.rel (%p6) target = $region8
    $region5: #{custom-call.37} parent=1 // loop_body
      %s10 = ssub.s32 %s5, 1
      %s11 = ssub.s32 %s5, 2
      %s21 = sadd.s32 1, %s14
      %p22 = scmp.ge.s32.totalorder %s21, 1
      %s23 = scalar_select %p22, 0, %s21
      %s24 = sadd.s32 1, %s13
      %s25 = scalar_select %p22, %s24, %s13
      %p26 = scmp.ge.s32.totalorder %s25, 1
      %s27 = scalar_select %p26, 0, %s25
      %s28 = sadd.s32 1, %s12
      %s29 = scalar_select %p26, %s28, %s12
      %p30 = scmp.ge.s32.totalorder %s29, 2
      %s31 = scalar_select %p30, 0, %s29
      %p32 = scmp.lt.s32.totalorder %s12, 0
      %s33 = ssub.s32 0, %s12
      %s34 = scalar_select %p32, %s33, %s12
      %s35 = sshrl.u32 %s34, 3
      %s36 = ssub.s32 0, %s35
      %s37 = scalar_select %p32, %s36, %s35
      %p38 = scmp.lt.s32.totalorder %s31, 0
      %s39 = ssub.s32 0, %s31
      %s40 = scalar_select %p38, %s39, %s31
      %s41 = sshrl.u32 %s40, 3
      %s42 = ssub.s32 0, %s41
      %s43 = scalar_select %p38, %s42, %s41
      %s44 = ssub.s32 %s37, %s43
      %p45 = scmp.eq.s32.totalorder %s44, 0
      %s47 = sadd.s32 %s46, 1
      %s48 = scalar_select %p45, %s46, %s47
      %p51 = pneg %p45
      %p52 = scmp.eq.s32.totalorder %s5, 1
      %p53 = por %p51, %p52
      %p54 = scmp.ne.s32.totalorder %s46, %s49
      %p55 = scmp.eq.s32.totalorder %s5, 0
      %p56 = por %p54, %p55
      %p57 = scmp.ne.s32.totalorder %s46, %s49
      %p58 = scmp.eq.s32.totalorder %s10, 1
      %p59 = por %p57, %p58
      %p60 = scmp.ne.s32.totalorder %s49, %s50
      %p61 = scmp.eq.s32.totalorder %s10, 0
      %p62 = por %p60, %p61
      %p63 = scmp.ne.s32.totalorder %s49, %s50
      %p64 = scmp.eq.s32.totalorder %s11, 1
      %p65 = por %p63, %p64
      %p67 = scmp.ne.s32.totalorder %s50, %s66
      %p68 = scmp.eq.s32.totalorder %s11, 0
      %p69 = por %p67, %p68
      %p70 = scmp.le.s32.totalorder 1, %s5
      %p71 = scmp.lt.s32.totalorder %s5, 3
      %p72 = pnand %p70, %p71
      %p73 = pneg %p72
      // Predicated region
      $region9: #{custom-call.37} parent=5 // pred_check
        _
      $region10: #{custom-call.37} parent=5 // pred_check_branch
        %75 = sbr.rel (%p72) target = $region12
      $region11: #{custom-call.37} parent=5 // pred_region
        %s76 = ssub.s32 %s5, 1
      $region12: #{custom-call.37} parent=5 // pred_fallthru
        _
      %p77 = scmp.lt.s32.totalorder %s5, 2
      // Predicated region
      $region13: #{custom-call.37} parent=5 // pred_check
        %p78 = pneg %p77
      $region14: #{custom-call.37} parent=5 // pred_check_branch
        %80 = sbr.rel (%p78) target = $region16
      $region15: #{custom-call.37} parent=5 // pred_region
        %s81 = sand.u32 %s5, 1
        %s82 = sand.u32 %s5, 1
        %s83 = smul.addr %s82, 32
        %s84 = scalar_lea.vmem [#allocation0], %s83
        %s85 = smul.u32 4, %s13
        %s86 = sadd.s32 %s14, %s85
        %s87 = smul.addr %s12, 4
        %s88 = sadd.s32 %s86, %s87
        %s89 = smul.addr %s88, 8
        %s90 = scalar_lea.vmem %s0, %s89
        // Predicated region
        $region17: #{custom-call.37} parent=15 // pred_check
          _
        $region18: #{custom-call.37} parent=15 // pred_check_branch
          %92 = sbr.rel (0) target = $region20
        $region19: #{custom-call.37} parent=15 // pred_region
          // Predicated region
          $region21: #{custom-call.37} parent=19 // pred_check
            _
          $region22: #{custom-call.37} parent=19 // pred_check_branch
            %94 = sbr.rel (0) target = $region24
          $region23: #{custom-call.37} parent=19 // pred_region
            // Predicated region
            $region36: #{custom-call.37} parent=23 // pred_check
              _
            $region37: #{custom-call.37} parent=23 // pred_check_branch
              %115 = sbr.rel (0) target = $region39
            $region38: #{custom-call.37} parent=23 // pred_region
              loop: start=0, step=1, limit=1
              $region40: #{custom-call.37} parent=38 // loop_pre_header
                _
              $region41: #{custom-call.37} parent=38 // loop_header
                %s117 = sphi 0, %s121
                %p118 = scmp.ge.s32.totalorder %s117, 1
                %s122 = sphi %s90, %s90
                %s123 = sphi %s84, %s84
              $region42: #{custom-call.37} parent=38 // loop_header_branch
                %120 = sbr.rel (%p118) target = $region46
              $region43: #{custom-call.37} parent=38 // loop_body
                %v124 = vld [vmem:[%s122] sm:$0xff]
                %125 = vst [vmem:[%s123] sm:$0xff] %v124
                %v126 = vld [vmem:[%s122 + $0x8] sm:$0xff]
                %127 = vst [vmem:[%s123 + $0x8] sm:$0xff] %v126
                %v128 = vld [vmem:[%s122 + $0x10] sm:$0xff]
                %129 = vst [vmem:[%s123 + $0x10] sm:$0xff] %v128
                %v130 = vld [vmem:[%s122 + $0x18] sm:$0xff]
                %131 = vst [vmem:[%s123 + $0x18] sm:$0xff] %v130
              $region44: #{custom-call.37} parent=38 // loop_footer
                %s121 = sadd.s32 1, %s117
              $region45: #{custom-call.37} parent=38 // loop_footer_branch
                %116 = sbr.rel target = $region41
              $region46: #{custom-call.37} parent=38 // loop_exit
                _
            $region39: #{custom-call.37} parent=23 // pred_fallthru
              _
            // Predicated region
            $region47: #{custom-call.37} parent=23 // pred_check
              _
            $region48: #{custom-call.37} parent=23 // pred_check_branch
              %133 = sbr.rel target = $region50
            $region49: #{custom-call.37} parent=23 // pred_region
              _
            $region50: #{custom-call.37} parent=23 // pred_fallthru
              _
          $region24: #{custom-call.37} parent=19 // pred_fallthru
            _
          // Predicated region
          $region25: #{custom-call.37} parent=19 // pred_check
            _
          $region26: #{custom-call.37} parent=19 // pred_check_branch
            %96 = sbr.rel target = $region28
          $region27: #{custom-call.37} parent=19 // pred_region
            loop: start=0, step=1, limit=1
            $region29: #{custom-call.37} parent=27 // loop_pre_header
              _
            $region30: #{custom-call.37} parent=27 // loop_header
              %s99 = sphi 0, %s103
              %p100 = scmp.ge.s32.totalorder %s99, 1
              %s104 = sphi %s90, %s90
              %s105 = sphi %s84, %s84
            $region31: #{custom-call.37} parent=27 // loop_header_branch
              %102 = sbr.rel (%p100) target = $region35
            $region32: #{custom-call.37} parent=27 // loop_body
              %v106 = vld [vmem:[%s104] sm:$0xff]
              %107 = vst [vmem:[%s105] sm:$0xff] %v106
              %v108 = vld [vmem:[%s104 + $0x8] sm:$0xff]
              %109 = vst [vmem:[%s105 + $0x8] sm:$0xff] %v108
              %v110 = vld [vmem:[%s104 + $0x10] sm:$0xff]
              %111 = vst [vmem:[%s105 + $0x10] sm:$0xff] %v110
              %v112 = vld [vmem:[%s104 + $0x18] sm:$0xff]
              %113 = vst [vmem:[%s105 + $0x18] sm:$0xff] %v112
            $region33: #{custom-call.37} parent=27 // loop_footer
              %s103 = sadd.s32 1, %s99
            $region34: #{custom-call.37} parent=27 // loop_footer_branch
              %98 = sbr.rel target = $region30
            $region35: #{custom-call.37} parent=27 // loop_exit
              _
          $region28: #{custom-call.37} parent=19 // pred_fallthru
            _
        $region20: #{custom-call.37} parent=15 // pred_fallthru
          _
        %134 = vnop
      $region16: #{custom-call.37} parent=5 // pred_fallthru
        _
      %p135 = scmp.le.s32.totalorder 1, %s5
      %p136 = scmp.lt.s32.totalorder %s5, 3
      %p137 = pnand %p135, %p136
      %p138 = pneg %p137
      // Predicated region
      $region51: #{custom-call.37} parent=5 // pred_check
        _
      $region52: #{custom-call.37} parent=5 // pred_check_branch
        %140 = sbr.rel (%p137) target = $region54
      $region53: #{custom-call.37} parent=5 // pred_region
        #allocation4 [shape = 'f32[32,128]{1,0}', space=vmem, size = 0x4000, scoped, tag = 'scratch for Householder reflectors']
        %s141 = ssub.s32 %s5, 1
        %s142 = sand.u32 %s10, 1
        %s143 = sand.u32 %s10, 1
        %s144 = smul.addr %s143, 32
        %s145 = scalar_lea.vmem [#allocation0], %s144
        %s146 = sand.u32 %s10, 1
        %s147 = sand.u32 %s10, 1
        %s148 = smul.addr %s147, 32
        %s149 = scalar_lea.vmem [#allocation0], %s148
        %s150 = sand.u32 %s10, 1
        %s151 = sand.u32 %s10, 1
        %s152 = smul.addr %s151, 32
        %s153 = scalar_lea.vmem [#allocation1], %s152
        %p154 = pneg %p62
        %p155 = pneg %p59
        %s156 = sand.u32 %s49, 1
        %s157 = sand.u32 %s49, 1
        %s158 = smul.addr %s157, 2
        %s159 = scalar_lea.vmem [#allocation3], %s158
        %s160 = smul.u32 4, %s16
        %s161 = smul.u32 4, %s16
        %p162 = scmp.lt.s32.totalorder %s15, 0
        %s163 = ssub.s32 0, %s15
        %s164 = scalar_select %p162, %s163, %s15
        %s165 = sshrl.u32 %s164, 3
        %s166 = ssub.s32 0, %s165
        %s167 = scalar_select %p162, %s166, %s165
        %s168 = sand.u32 %s15, 7
        %s169 = scalar_lea.vmem [#allocation2], %s168
        %v170 = vld [vmem:[%s145] sm:$0xff]
        %171 = vst [vmem:[%s153] sm:$0xff] %v170
        %s172 = scalar_lea.vmem %s153, 8 [#allocation1]
        %s173 = scalar_lea.vmem %s145, 8 [#allocation0]
        %v174 = vld [vmem:[%s173] sm:$0xff]
        %175 = vst [vmem:[%s172] sm:$0xff] %v174
        %s176 = scalar_lea.vmem %s153, 16 [#allocation1]
        %s177 = scalar_lea.vmem %s145, 16 [#allocation0]
        %v178 = vld [vmem:[%s177] sm:$0xff]
        %179 = vst [vmem:[%s176] sm:$0xff] %v178
        %s180 = scalar_lea.vmem %s153, 24 [#allocation1]
        %s181 = scalar_lea.vmem %s145, 24 [#allocation0]
        %v182 = vld [vmem:[%s181] sm:$0xff]
        %183 = vst [vmem:[%s180] sm:$0xff] %v182
        %184 = vst [vmem:[%s169] sm:$0x1] 0.0
        loop: start=0, step=1, limit=16
        $region55: #{custom-call.37} parent=53 // loop_pre_header
          _
        $region56: #{custom-call.37} parent=53 // loop_header
          %s186 = sphi 0, %s190
          %p187 = scmp.ge.s32.totalorder %s186, 16
        $region57: #{custom-call.37} parent=53 // loop_header_branch
          %189 = sbr.rel (%p187) target = $region61
        $region58: #{custom-call.37} parent=53 // loop_body
          %v191 = vld [vmem:[%s153] sm:$0xff]
          %v192 = vlaneseq
          %v193 = vshrl.u32 %v192, 7
          %v195 = vstv %s186
          %vm196 = vcmp.gt.s32.totalorder %v193, %v195
          %v197 = vsel %vm196, %v191, 0.0
          %v198 = vmul.f32 %v197, %v197
          %s199 = scalar_lea.vmem %s153, 8 [#allocation1]
          %v200 = vld [vmem:[%s199] sm:$0xff]
          %v201 = vlaneseq
          %v202 = vshrl.u32 %v201, 7
          %v203 = vadd.s32 %v202, 8
          %v204 = vstv %s186
          %vm205 = vcmp.gt.s32.totalorder %v203, %v204
          %v206 = vsel %vm205, %v200, 0.0
          %v207 = vmul.f32 %v206, %v206
          %v208 = vadd.f32 %v198, %v207
          %s209 = scalar_lea.vmem %s153, 16 [#allocation1]
          %v210 = vld [vmem:[%s209] sm:$0xff]
          %v211 = vlaneseq
          %v212 = vshrl.u32 %v211, 7
          %v213 = vadd.s32 %v212, 16
          %v214 = vstv %s186
          %vm215 = vcmp.gt.s32.totalorder %v213, %v214
          %v216 = vsel %vm215, %v210, 0.0
          %v217 = vmul.f32 %v216, %v216
          %v218 = vadd.f32 %v208, %v217
          %s219 = scalar_lea.vmem %s153, 24 [#allocation1]
          %v220 = vld [vmem:[%s219] sm:$0xff]
          %v221 = vlaneseq
          %v222 = vshrl.u32 %v221, 7
          %v223 = vadd.s32 %v222, 24
          %v224 = vstv %s186
          %vm225 = vcmp.gt.s32.totalorder %v223, %v224
          %vm226 = vcmp.lt.s32.totalorder %v223, 32
          %vm227 = vmand %vm225, %vm226
          %v228 = vsel %vm227, %v220, 0.0
          %v229 = vmul.f32 %v228, %v228
          %v230 = vadd.f32 %v218, %v229
          %v231 = vrot.slane %v230, 4
          %v232 = vadd.f32 %v230, %v231
          %v233 = vrot.slane %v232, 2
          %v234 = vadd.f32 %v232, %v233
          %v235 = vrot.slane %v234, 1
          %v236 = vadd.f32 %v234, %v235
          %v237 = vrsqrt.pop %v236
          %v238 = vmul.f32 %v236, %v237
          %vm239 = vcmp.eq.f32.partialorder %v236, inf
          %v240 = vsel %vm239, %v236, %v238
          %vm241 = vcmp.eq.f32.partialorder %v236, 0.0
          %v242 = vand.u32 %v236, 2147483648
          %v243 = vsel %vm241, %v242, %v240
          %vm244 = vcmp.eq.f32.partialorder %v236, 0.0
          %s245 = sshrl.u32 %s186, 3
          %s246 = sand.u32 %s186, 7
          %s247 = smul.addr %s245, 8
          %s248 = sadd.s32 %s246, %s247
          %s249 = scalar_lea.vmem %s153, %s248 [#allocation1]
          %v250 = vld [vmem:[%s249] ss:$0 sm:$0xff]
          %v251 = vand.u32 2147483647, %v250
          %v252 = vmax.f32 %v251, 0.0
          %v253 = vand.u32 2147483647, %v243
          %v254 = vmax.f32 %v252, %v253
          %v255 = vrcp.pop %v254
          %v256 = vmul.f32 %v251, %v255
          %v257 = vmul.f32 %v256, %v256
          %v258 = vrcp.pop %v254
          %v259 = vmul.f32 0.0, %v258
          %v260 = vmul.f32 %v259, %v259
          %v261 = vadd.f32 %v257, %v260
          %v262 = vrcp.pop %v254
          %v263 = vmul.f32 %v253, %v262
          %v264 = vmul.f32 %v263, %v263
          %v265 = vadd.f32 %v261, %v264
          %vm266 = vcmp.eq.f32.partialorder %v254, 0.0
          %v267 = vrsqrt.pop %v265
          %v268 = vmul.f32 %v265, %v267
          %vm269 = vcmp.eq.f32.partialorder %v265, inf
          %v270 = vsel %vm269, %v265, %v268
          %vm271 = vcmp.eq.f32.partialorder %v265, 0.0
          %v272 = vand.u32 %v265, 2147483648
          %v273 = vsel %vm271, %v272, %v270
          %v274 = vmul.f32 %v254, %v273
          %v275 = vsel %vm266, 0.0, %v274
          %vm276 = vcmp.lt.f32.partialorder %v250, 0.0
          %v277 = vxor.u32 %v275, 2147483648
          %v278 = vsel %vm276, %v275, %v277
          %v279 = vsub.f32 %v278, %v250
          %v280 = vrcp.pop %v278
          %v281 = vmul.f32 %v279, %v280
          %v282 = vsel %vm244, %v250, %v278
          %v283 = vsel %vm244, 0.0, %v281
          %v284 = vsub.f32 %v250, %v282
          %s285 = smov %s153
          %v286 = vlaneseq
          %v287 = vshrl.u32 %v286, 7
          %v288 = vmov %v287
          %v289 = vld [vmem:[%s285] sm:$0xff]
          %v291 = vstv %s186
          %vm292 = vcmp.gt.s32.totalorder %v288, %v291
          %v293 = vsel %vm292, %v289, 0.0
          %v294 = vrcp.pop %v284
          %v295 = vmul.f32 %v293, %v294
          %v296 = vsel %vm244, 0.0, %v295
          %v297 = vstv %s186
          %v298 = vlaneseq
          %v299 = vand.u32 %v298, 127
          %vm300 = vcmp.eq.s32.totalorder %v299, %v297
          %v301 = vsel %vm300, %v296, 0.0
          %302 = vadd.xlane.f32.xlu0 %v301
          %v303 = vpop.xlane.xlu0 %302
          %304 = vst [vmem:[#allocation4] sm:$0xff] %v303
          %s305 = scalar_lea.vmem %s285, 8
          %v306 = vld [vmem:[%s305] sm:$0xff]
          %v307 = vadd.s32 %v288, 8
          %v308 = vstv %s186
          %vm309 = vcmp.gt.s32.totalorder %v307, %v308
          %v310 = vsel %vm309, %v306, 0.0
          %v311 = vrcp.pop %v284
          %v312 = vmul.f32 %v310, %v311
          %v313 = vsel %vm244, 0.0, %v312
          %v314 = vstv %s186
          %v315 = vlaneseq
          %v316 = vand.u32 %v315, 127
          %vm317 = vcmp.eq.s32.totalorder %v316, %v314
          %v318 = vsel %vm317, %v313, 0.0
          %319 = vadd.xlane.f32.xlu0 %v318
          %v320 = vpop.xlane.xlu0 %319
          %s321 = scalar_lea.vmem [#allocation4], 8
          %322 = vst [vmem:[%s321] sm:$0xff] %v320
          %s323 = scalar_lea.vmem %s285, 16
          %v324 = vld [vmem:[%s323] sm:$0xff]
          %v325 = vadd.s32 %v288, 16
          %v326 = vstv %s186
          %vm327 = vcmp.gt.s32.totalorder %v325, %v326
          %v328 = vsel %vm327, %v324, 0.0
          %v329 = vrcp.pop %v284
          %v330 = vmul.f32 %v328, %v329
          %v331 = vsel %vm244, 0.0, %v330
          %v332 = vstv %s186
          %v333 = vlaneseq
          %v334 = vand.u32 %v333, 127
          %vm335 = vcmp.eq.s32.totalorder %v334, %v332
          %v336 = vsel %vm335, %v331, 0.0
          %337 = vadd.xlane.f32.xlu0 %v336
          %v338 = vpop.xlane.xlu0 %337
          %s339 = scalar_lea.vmem [#allocation4], 16
          %340 = vst [vmem:[%s339] sm:$0xff] %v338
          %s341 = scalar_lea.vmem %s285, 24
          %v342 = vld [vmem:[%s341] sm:$0xff]
          %v343 = vadd.s32 %v288, 24
          %v344 = vstv %s186
          %vm345 = vcmp.gt.s32.totalorder %v343, %v344
          %vm346 = vcmp.lt.s32.totalorder %v343, 32
          %vm347 = vmand %vm345, %vm346
          %v348 = vsel %vm347, %v342, 0.0
          %v349 = vrcp.pop %v284
          %v350 = vmul.f32 %v348, %v349
          %v351 = vsel %vm244, 0.0, %v350
          %v352 = vstv %s186
          %v353 = vlaneseq
          %v354 = vand.u32 %v353, 127
          %vm355 = vcmp.eq.s32.totalorder %v354, %v352
          %v356 = vsel %vm355, %v351, 0.0
          %357 = vadd.xlane.f32.xlu0 %v356
          %v358 = vpop.xlane.xlu0 %357
          %s359 = scalar_lea.vmem [#allocation4], 24
          %360 = vst [vmem:[%s359] sm:$0xff] %v358
          %s361 = scalar_lea.vmem [#allocation4], %s186
          %362 = vst [vmem:[%s361] sm:$0x1] 1.0
          %v363 = vstv %s186
          %v364 = vlaneseq
          %v365 = vand.u32 %v364, 127
          %vm366 = vcmp.eq.s32.totalorder %v365, %v363
          %v367 = vsel %vm366, %v283, 0.0
          %368 = vadd.xlane.f32.xlu0 %v367
          %v369 = vpop.xlane.xlu0 %368
          %v370 = vstv %s186
          %v371 = vlaneseq
          %v372 = vand.u32 %v371, 127
          %vm373 = vcmp.eq.s32.totalorder %v372, %v370
          %v374 = vld [vmem:[%s169] ss:$0 sm:$0xff]
          %v375 = vsel %vm373, %v369, %v374
          %376 = vst [vmem:[%s169] sm:$0x1] %v375
          %s377 = smov %s153
          %s378 = smov [#allocation4]
          %v379 = vlaneseq
          %v380 = vshrl.u32 %v379, 7
          %v381 = vmov %v380
          %v383 = vld [vmem:[%s378] sm:$0xff]
          %v384 = vld [vmem:[%s377] sm:$0xff]
          %v385 = vmul.f32 %v383, %v384
          %v386 = vadd.s32 %v381, 8
          %s387 = scalar_lea.vmem %s378, 8
          %v388 = vld [vmem:[%s387] sm:$0xff]
          %s389 = scalar_lea.vmem %s377, 8
          %v390 = vld [vmem:[%s389] sm:$0xff]
          %v391 = vmul.f32 %v388, %v390
          %v392 = vadd.f32 %v385, %v391
          %v393 = vadd.s32 %v381, 16
          %s394 = scalar_lea.vmem %s378, 16
          %v395 = vld [vmem:[%s394] sm:$0xff]
          %s396 = scalar_lea.vmem %s377, 16
          %v397 = vld [vmem:[%s396] sm:$0xff]
          %v398 = vmul.f32 %v395, %v397
          %v399 = vadd.f32 %v392, %v398
          %v400 = vadd.s32 %v381, 24
          %s401 = scalar_lea.vmem %s378, 24
          %v402 = vld [vmem:[%s401] sm:$0xff]
          %s403 = scalar_lea.vmem %s377, 24
          %v404 = vld [vmem:[%s403] sm:$0xff]
          %v405 = vmul.f32 %v402, %v404
          %vm406 = vcmp.lt.s32.totalorder %v400, 32
          %v407 = vsel %vm406, %v405, 0.0
          %v408 = vadd.f32 %v399, %v407
          %v409 = vrot.slane %v408, 4
          %v410 = vadd.f32 %v408, %v409
          %v411 = vrot.slane %v410, 2
          %v412 = vadd.f32 %v410, %v411
          %v413 = vrot.slane %v412, 1
          %v414 = vadd.f32 %v412, %v413
          %s415 = smov %s377
          %s416 = smov %s378
          %v417 = vlaneseq
          %v418 = vshrl.u32 %v417, 7
          %v419 = vmov %v418
          %v420 = vmul.f32 %v414, %v369
          %v422 = vlaneseq
          %v423 = vand.u32 %v422, 127
          %v424 = vld [vmem:[%s416] sm:$0xff]
          %v425 = vmul.f32 %v424, %v420
          %v426 = vld [vmem:[%s415] sm:$0xff]
          %v427 = vstv %s186
          %vm428 = vcmp.gt.s32.totalorder %v423, %v427
          %v429 = vsub.f32 %v426, %v425
          %v430 = vsel %vm428, %v429, %v426
          %v431 = vstv %s186
          %v432 = vlaneseq
          %v433 = vand.u32 %v432, 127
          %vm434 = vcmp.eq.s32.totalorder %v433, %v431
          %v435 = vstv %s186
          %vm436 = vcmp.ge.s32.totalorder %v419, %v435
          %vm437 = vmand %vm434, %vm436
          %v438 = vsel %vm437, %v424, %v430
          %439 = vst [vmem:[%s415] sm:$0xff] %v438
          %v440 = vadd.s32 %v419, 8
          %v441 = vlaneseq
          %v442 = vand.u32 %v441, 127
          %s443 = scalar_lea.vmem %s416, 8
          %v444 = vld [vmem:[%s443] sm:$0xff]
          %v445 = vmul.f32 %v444, %v420
          %s446 = scalar_lea.vmem %s415, 8
          %v447 = vld [vmem:[%s446] sm:$0xff]
          %v448 = vstv %s186
          %vm449 = vcmp.gt.s32.totalorder %v442, %v448
          %v450 = vsub.f32 %v447, %v445
          %v451 = vsel %vm449, %v450, %v447
          %v452 = vstv %s186
          %v453 = vlaneseq
          %v454 = vand.u32 %v453, 127
          %vm455 = vcmp.eq.s32.totalorder %v454, %v452
          %v456 = vstv %s186
          %vm457 = vcmp.ge.s32.totalorder %v440, %v456
          %vm458 = vmand %vm455, %vm457
          %v459 = vsel %vm458, %v444, %v451
          %460 = vst [vmem:[%s446] sm:$0xff] %v459
          %v461 = vadd.s32 %v419, 16
          %v462 = vlaneseq
          %v463 = vand.u32 %v462, 127
          %s464 = scalar_lea.vmem %s416, 16
          %v465 = vld [vmem:[%s464] sm:$0xff]
          %v466 = vmul.f32 %v465, %v420
          %s467 = scalar_lea.vmem %s415, 16
          %v468 = vld [vmem:[%s467] sm:$0xff]
          %v469 = vstv %s186
          %vm470 = vcmp.gt.s32.totalorder %v463, %v469
          %v471 = vsub.f32 %v468, %v466
          %v472 = vsel %vm470, %v471, %v468
          %v473 = vstv %s186
          %v474 = vlaneseq
          %v475 = vand.u32 %v474, 127
          %vm476 = vcmp.eq.s32.totalorder %v475, %v473
          %v477 = vstv %s186
          %vm478 = vcmp.ge.s32.totalorder %v461, %v477
          %vm479 = vmand %vm476, %vm478
          %v480 = vsel %vm479, %v465, %v472
          %481 = vst [vmem:[%s467] sm:$0xff] %v480
          %v482 = vadd.s32 %v419, 24
          %v483 = vlaneseq
          %v484 = vand.u32 %v483, 127
          %s485 = scalar_lea.vmem %s416, 24
          %v486 = vld [vmem:[%s485] sm:$0xff]
          %v487 = vmul.f32 %v486, %v420
          %s488 = scalar_lea.vmem %s415, 24
          %v489 = vld [vmem:[%s488] sm:$0xff]
          %v490 = vstv %s186
          %vm491 = vcmp.gt.s32.totalorder %v484, %v490
          %v492 = vsub.f32 %v489, %v487
          %v493 = vsel %vm491, %v492, %v489
          %v494 = vstv %s186
          %v495 = vlaneseq
          %v496 = vand.u32 %v495, 127
          %vm497 = vcmp.eq.s32.totalorder %v496, %v494
          %v498 = vstv %s186
          %vm499 = vcmp.ge.s32.totalorder %v482, %v498
          %vm500 = vmand %vm497, %vm499
          %v501 = vsel %vm500, %v486, %v493
          %502 = vst [vmem:[%s488] sm:$0xff] %v501
          %s503 = scalar_lea.vmem %s415, %s186
          %v504 = vld [vmem:[%s503] ss:$0 sm:$0xff]
          %v505 = vstv %s186
          %v506 = vlaneseq
          %v507 = vand.u32 %v506, 127
          %vm508 = vcmp.eq.s32.totalorder %v507, %v505
          %v509 = vsel %vm508, %v282, %v504
          %510 = vst [vmem:[%s503] sm:$0x1] %v509
        $region59: #{custom-call.37} parent=53 // loop_footer
          %s190 = sadd.s32 1, %s186
        $region60: #{custom-call.37} parent=53 // loop_footer_branch
          %185 = sbr.rel target = $region56
        $region61: #{custom-call.37} parent=53 // loop_exit
          _
        %s512 = sshllo.u32 0, 2
        %v514 = vld [vmem:[#allocation2] sm:%s512]
        %s515 = sshllo.u32 0, 2
        %516 = vst [vmem:[%s159] sm:%s515] %v514
        %s517 = sand.u32 %s10, 1
        %s518 = sand.u32 %s10, 1
        %s519 = smul.addr %s518, 32
        %s520 = scalar_lea.vmem [#allocation1], %s519
        %s521 = sand.u32 %s49, 1
        %s522 = sand.u32 %s49, 1
        %s523 = smul.addr %s522, 2
        %s524 = scalar_lea.vmem [#allocation3], %s523
        %s525 = smul.u32 4, %s16
        %s526 = sadd.s32 %s17, %s525
        %s527 = smul.addr %s15, 4
        %s528 = sadd.s32 %s526, %s527
        %s529 = smul.addr %s528, 8
        %s530 = scalar_lea.vmem %s1, %s529
        // Predicated region
        $region62: #{custom-call.37} parent=53 // pred_check
          _
        $region63: #{custom-call.37} parent=53 // pred_check_branch
          %532 = sbr.rel (0) target = $region65
        $region64: #{custom-call.37} parent=53 // pred_region
          // Predicated region
          $region66: #{custom-call.37} parent=64 // pred_check
            _
          $region67: #{custom-call.37} parent=64 // pred_check_branch
            %534 = sbr.rel (0) target = $region69
          $region68: #{custom-call.37} parent=64 // pred_region
            // Predicated region
            $region81: #{custom-call.37} parent=68 // pred_check
              _
            $region82: #{custom-call.37} parent=68 // pred_check_branch
              %555 = sbr.rel (0) target = $region84
            $region83: #{custom-call.37} parent=68 // pred_region
              loop: start=0, step=1, limit=1
              $region85: #{custom-call.37} parent=83 // loop_pre_header
                _
              $region86: #{custom-call.37} parent=83 // loop_header
                %s557 = sphi 0, %s561
                %p558 = scmp.ge.s32.totalorder %s557, 1
                %s562 = sphi %s520, %s520
                %s563 = sphi %s530, %s530
              $region87: #{custom-call.37} parent=83 // loop_header_branch
                %560 = sbr.rel (%p558) target = $region91
              $region88: #{custom-call.37} parent=83 // loop_body
                %v564 = vld [vmem:[%s562] sm:$0xff]
                %565 = vst [vmem:[%s563] sm:$0xff] %v564
                %v566 = vld [vmem:[%s562 + $0x8] sm:$0xff]
                %567 = vst [vmem:[%s563 + $0x8] sm:$0xff] %v566
                %v568 = vld [vmem:[%s562 + $0x10] sm:$0xff]
                %569 = vst [vmem:[%s563 + $0x10] sm:$0xff] %v568
                %v570 = vld [vmem:[%s562 + $0x18] sm:$0xff]
                %571 = vst [vmem:[%s563 + $0x18] sm:$0xff] %v570
              $region89: #{custom-call.37} parent=83 // loop_footer
                %s561 = sadd.s32 1, %s557
              $region90: #{custom-call.37} parent=83 // loop_footer_branch
                %556 = sbr.rel target = $region86
              $region91: #{custom-call.37} parent=83 // loop_exit
                _
            $region84: #{custom-call.37} parent=68 // pred_fallthru
              _
            // Predicated region
            $region92: #{custom-call.37} parent=68 // pred_check
              _
            $region93: #{custom-call.37} parent=68 // pred_check_branch
              %573 = sbr.rel target = $region95
            $region94: #{custom-call.37} parent=68 // pred_region
              _
            $region95: #{custom-call.37} parent=68 // pred_fallthru
              _
          $region69: #{custom-call.37} parent=64 // pred_fallthru
            _
          // Predicated region
          $region70: #{custom-call.37} parent=64 // pred_check
            _
          $region71: #{custom-call.37} parent=64 // pred_check_branch
            %536 = sbr.rel target = $region73
          $region72: #{custom-call.37} parent=64 // pred_region
            loop: start=0, step=1, limit=1
            $region74: #{custom-call.37} parent=72 // loop_pre_header
              _
            $region75: #{custom-call.37} parent=72 // loop_header
              %s539 = sphi 0, %s543
              %p540 = scmp.ge.s32.totalorder %s539, 1
              %s544 = sphi %s520, %s520
              %s545 = sphi %s530, %s530
            $region76: #{custom-call.37} parent=72 // loop_header_branch
              %542 = sbr.rel (%p540) target = $region80
            $region77: #{custom-call.37} parent=72 // loop_body
              %v546 = vld [vmem:[%s544] sm:$0xff]
              %547 = vst [vmem:[%s545] sm:$0xff] %v546
              %v548 = vld [vmem:[%s544 + $0x8] sm:$0xff]
              %549 = vst [vmem:[%s545 + $0x8] sm:$0xff] %v548
              %v550 = vld [vmem:[%s544 + $0x10] sm:$0xff]
              %551 = vst [vmem:[%s545 + $0x10] sm:$0xff] %v550
              %v552 = vld [vmem:[%s544 + $0x18] sm:$0xff]
              %553 = vst [vmem:[%s545 + $0x18] sm:$0xff] %v552
            $region78: #{custom-call.37} parent=72 // loop_footer
              %s543 = sadd.s32 1, %s539
            $region79: #{custom-call.37} parent=72 // loop_footer_branch
              %538 = sbr.rel target = $region75
            $region80: #{custom-call.37} parent=72 // loop_exit
              _
          $region73: #{custom-call.37} parent=64 // pred_fallthru
            _
        $region65: #{custom-call.37} parent=53 // pred_fallthru
          _
        %574 = vnop
        // Predicated region
        $region96: #{custom-call.37} parent=53 // pred_check
          %p575 = pneg %p59
        $region97: #{custom-call.37} parent=53 // pred_check_branch
          %577 = sbr.rel (%p575) target = $region99
        $region98: #{custom-call.37} parent=53 // pred_region
          %p578 = scmp.lt.s32.totalorder %s15, 0
          %s579 = ssub.s32 0, %s15
          %s580 = scalar_select %p578, %s579, %s15
          %s581 = sshrl.u32 %s580, 3
          %s582 = ssub.s32 0, %s581
          %s583 = scalar_select %p578, %s582, %s581
          %s584 = smul.addr %s583, 2
          %s585 = scalar_lea.vmem %s2, %s584
          // Predicated region
          $region100: #{custom-call.37} parent=98 // pred_check
            _
          $region101: #{custom-call.37} parent=98 // pred_check_branch
            %587 = sbr.rel (0) target = $region103
          $region102: #{custom-call.37} parent=98 // pred_region
            // Predicated region
            $region104: #{custom-call.37} parent=102 // pred_check
              _
            $region105: #{custom-call.37} parent=102 // pred_check_branch
              %589 = sbr.rel target = $region107
            $region106: #{custom-call.37} parent=102 // pred_region
              // Predicated region
              $region119: #{custom-call.37} parent=106 // pred_check
                _
              $region120: #{custom-call.37} parent=106 // pred_check_branch
                %604 = sbr.rel (0) target = $region122
              $region121: #{custom-call.37} parent=106 // pred_region
                loop: start=0, step=1, limit=1
                $region123: #{custom-call.37} parent=121 // loop_pre_header
                  _
                $region124: #{custom-call.37} parent=121 // loop_header
                  %s607 = sphi 0, %s611
                  %p608 = scmp.ge.s32.totalorder %s607, 1
                  %s612 = sphi %s524, %s524
                  %s613 = sphi %s585, %s585
                $region125: #{custom-call.37} parent=121 // loop_header_branch
                  %610 = sbr.rel (%p608) target = $region129
                $region126: #{custom-call.37} parent=121 // loop_body
                  %v614 = vld [vmem:[%s612] sm:$0x3]
                  %615 = vst [vmem:[%s613] sm:$0x3] %v614
                $region127: #{custom-call.37} parent=121 // loop_footer
                  %s611 = sadd.s32 1, %s607
                $region128: #{custom-call.37} parent=121 // loop_footer_branch
                  %606 = sbr.rel target = $region124
                $region129: #{custom-call.37} parent=121 // loop_exit
                  _
              $region122: #{custom-call.37} parent=106 // pred_fallthru
                _
            $region107: #{custom-call.37} parent=102 // pred_fallthru
              _
            // Predicated region
            $region108: #{custom-call.37} parent=102 // pred_check
              _
            $region109: #{custom-call.37} parent=102 // pred_check_branch
              %591 = sbr.rel (0) target = $region111
            $region110: #{custom-call.37} parent=102 // pred_region
              loop: start=0, step=1, limit=1
              $region112: #{custom-call.37} parent=110 // loop_pre_header
                _
              $region113: #{custom-call.37} parent=110 // loop_header
                %s594 = sphi 0, %s598
                %p595 = scmp.ge.s32.totalorder %s594, 1
                %s599 = sphi %s524, %s524
                %s600 = sphi %s585, %s585
              $region114: #{custom-call.37} parent=110 // loop_header_branch
                %597 = sbr.rel (%p595) target = $region118
              $region115: #{custom-call.37} parent=110 // loop_body
                %v601 = vld [vmem:[%s599] sm:$0x3]
                %602 = vst [vmem:[%s600] sm:$0x3] %v601
              $region116: #{custom-call.37} parent=110 // loop_footer
                %s598 = sadd.s32 1, %s594
              $region117: #{custom-call.37} parent=110 // loop_footer_branch
                %593 = sbr.rel target = $region113
              $region118: #{custom-call.37} parent=110 // loop_exit
                _
            $region111: #{custom-call.37} parent=102 // pred_fallthru
              _
          $region103: #{custom-call.37} parent=98 // pred_fallthru
            _
          %616 = vnop
        $region99: #{custom-call.37} parent=53 // pred_fallthru
          _
      $region54: #{custom-call.37} parent=5 // pred_fallthru
        _
      %p617 = scmp.le.s32.totalorder 2, %s5
      // Predicated region
      $region130: #{custom-call.37} parent=5 // pred_check
        %p618 = pneg %p617
      $region131: #{custom-call.37} parent=5 // pred_check_branch
        %620 = sbr.rel (%p618) target = $region133
      $region132: #{custom-call.37} parent=5 // pred_region
        %s621 = ssub.s32 %s5, 2
        %s622 = sand.u32 %s11, 1
        %s623 = sand.u32 %s11, 1
        %s624 = smul.addr %s623, 32
        %s625 = scalar_lea.vmem [#allocation1], %s624
        // Predicated region
        $region134: #{custom-call.37} parent=132 // pred_check
          %p626 = pneg %p65
        $region135: #{custom-call.37} parent=132 // pred_check_branch
          %628 = sbr.rel (%p626) target = $region137
        $region136: #{custom-call.37} parent=132 // pred_region
          %s629 = sand.u32 %s50, 1
          %s630 = sand.u32 %s50, 1
          %s631 = smul.addr %s630, 2
          %s632 = scalar_lea.vmem [#allocation3], %s631
        $region137: #{custom-call.37} parent=132 // pred_fallthru
          _
      $region133: #{custom-call.37} parent=5 // pred_fallthru
        _
    $region6: #{custom-call.37} parent=1 // loop_footer
      %s9 = sadd.s32 1, %s5
    $region7: #{custom-call.37} parent=1 // loop_footer_branch
      %4 = sbr.rel target = $region3
    $region8: #{custom-call.37} parent=1 // loop_exit
      _

// kernel: custom-call.38
$region0: #{custom-call.38}
  %s0 = inlined_call_operand.vmem [shape: f32[2,16,16], index: 0, kind: input, shape index: {}]
  %s1 = inlined_call_operand.vmem [shape: f32[2,16,16], index: 1, kind: output, shape index: {}]
  $region1: #{custom-call.38} parent=0
    #allocation0 [shape = 'u8[16384]{0}', space=vmem, size = 0x4000, scoped, tag = 'operand span for operand 0']
    #allocation1 [shape = 'u8[16384]{0}', space=vmem, size = 0x4000, scoped, tag = 'operand span for operand 1']
    loop: start=0, step=1, limit=4
    $region2: #{custom-call.38} parent=1 // loop_pre_header
      _
    $region3: #{custom-call.38} parent=1 // loop_header
      %s3 = sphi 0, %s7
      %p4 = scmp.ge.s32.totalorder %s3, 4
    $region4: #{custom-call.38} parent=1 // loop_header_branch
      %6 = sbr.rel (%p4) target = $region8
    $region5: #{custom-call.38} parent=1 // loop_body
      %s8 = ssub.s32 %s3, 1
      %s9 = ssub.s32 %s3, 2
      %s10 = sadd.s32 %s3, 1
      %p11 = scmp.le.s32.totalorder 1, %s3
      %p12 = scmp.lt.s32.totalorder %s3, 3
      %p13 = pnand %p11, %p12
      %p14 = pneg %p13
      // Predicated region
      $region9: #{custom-call.38} parent=5 // pred_check
        _
      $region10: #{custom-call.38} parent=5 // pred_check_branch
        %16 = sbr.rel (%p13) target = $region12
      $region11: #{custom-call.38} parent=5 // pred_region
        %s17 = ssub.s32 %s3, 1
      $region12: #{custom-call.38} parent=5 // pred_fallthru
        _
      %p18 = scmp.lt.s32.totalorder %s3, 2
      // Predicated region
      $region13: #{custom-call.38} parent=5 // pred_check
        %p19 = pneg %p18
      $region14: #{custom-call.38} parent=5 // pred_check_branch
        %21 = sbr.rel (%p19) target = $region16
      $region15: #{custom-call.38} parent=5 // pred_region
        %s22 = sand.u32 %s3, 1
        %s23 = sand.u32 %s3, 1
        %s24 = smul.addr %s23, 16
        %s25 = scalar_lea.vmem [#allocation0], %s24
        %s26 = smul.addr %s3, 16
        %s27 = scalar_lea.vmem %s0, %s26
        // Predicated region
        $region17: #{custom-call.38} parent=15 // pred_check
          _
        $region18: #{custom-call.38} parent=15 // pred_check_branch
          %29 = sbr.rel (0) target = $region20
        $region19: #{custom-call.38} parent=15 // pred_region
          // Predicated region
          $region21: #{custom-call.38} parent=19 // pred_check
            _
          $region22: #{custom-call.38} parent=19 // pred_check_branch
            %31 = sbr.rel (0) target = $region24
          $region23: #{custom-call.38} parent=19 // pred_region
            loop: start=0, step=1, limit=1
            $region25: #{custom-call.38} parent=23 // loop_pre_header
              _
            $region26: #{custom-call.38} parent=23 // loop_header
              %s33 = sphi 0, %s37
              %p34 = scmp.ge.s32.totalorder %s33, 1
              %s38 = sphi %s27, %s27
              %s39 = sphi %s25, %s25
            $region27: #{custom-call.38} parent=23 // loop_header_branch
              %36 = sbr.rel (%p34) target = $region31
            $region28: #{custom-call.38} parent=23 // loop_body
              %v40 = vld [vmem:[%s38] sm:$0xff]
              %41 = vst [vmem:[%s39] sm:$0xff] %v40
              %v42 = vld [vmem:[%s38 + $0x8] sm:$0xff]
              %43 = vst [vmem:[%s39 + $0x8] sm:$0xff] %v42
            $region29: #{custom-call.38} parent=23 // loop_footer
              %s37 = sadd.s32 1, %s33
            $region30: #{custom-call.38} parent=23 // loop_footer_branch
              %32 = sbr.rel target = $region26
            $region31: #{custom-call.38} parent=23 // loop_exit
              _
          $region24: #{custom-call.38} parent=19 // pred_fallthru
            _
          // Predicated region
          $region32: #{custom-call.38} parent=19 // pred_check
            _
          $region33: #{custom-call.38} parent=19 // pred_check_branch
            %45 = sbr.rel target = $region35
          $region34: #{custom-call.38} parent=19 // pred_region
            _
          $region35: #{custom-call.38} parent=19 // pred_fallthru
            _
        $region20: #{custom-call.38} parent=15 // pred_fallthru
          _
        %46 = vnop
      $region16: #{custom-call.38} parent=5 // pred_fallthru
        _
      %p47 = scmp.le.s32.totalorder 1, %s3
      %p48 = scmp.lt.s32.totalorder %s3, 3
      %p49 = pnand %p47, %p48
      %p50 = pneg %p49
      // Predicated region
      $region36: #{custom-call.38} parent=5 // pred_check
        _
      $region37: #{custom-call.38} parent=5 // pred_check_branch
        %52 = sbr.rel (%p49) target = $region39
      $region38: #{custom-call.38} parent=5 // pred_region
        %s53 = ssub.s32 %s3, 1
        %s54 = sand.u32 %s8, 1
        %s55 = sand.u32 %s8, 1
        %s56 = smul.addr %s55, 16
        %s57 = scalar_lea.vmem [#allocation0], %s56
        %s58 = sand.u32 %s8, 1
        %s59 = sand.u32 %s8, 1
        %s60 = smul.addr %s59, 16
        %s61 = scalar_lea.vmem [#allocation0], %s60
        %s62 = sand.u32 %s8, 1
        %s63 = sand.u32 %s8, 1
        %s64 = smul.addr %s63, 16
        %s65 = scalar_lea.vmem [#allocation1], %s64
        %v66 = vlaneseq
        %v67 = vand.u32 %v66, 127
        %v68 = vlaneseq
        %v69 = vshrl.u32 %v68, 7
        %vm71 = vcmp.eq.s32.totalorder %v67, %v69
        %v72 = vld [vmem:[%s57] sm:$0xff]
        %v73 = vlaneseq
        %v74 = vand.u32 %v73, 127
        %vm75 = vcmp.eq.s32.totalorder %v74, 0
        %v76 = vsel %vm75, %v72, 1.0
        %v77 = vsel %vm71, %v76, 0.0
        %v78 = vlaneseq
        %v79 = vand.u32 %v78, 127
        %v80 = vlaneseq
        %v81 = vshrl.u32 %v80, 7
        %v82 = vadd.s32 %v81, 8
        %vm83 = vcmp.eq.s32.totalorder %v79, %v82
        %v84 = vsel %vm83, 1.0, 0.0
        %s85 = scalar_lea.vmem %s57, 1 [#allocation0]
        %v86 = vld [vmem:[%s85] ss:$0 sm:$0xff]
        %vm87 = vcmask 130048
        %v88 = vsel %vm87, %v86, 0.0
        %v89 = vlaneseq
        %v90 = vand.u32 %v89, 127
        %vm91 = vcmp.eq.s32.totalorder %v90, 1
        %v92 = vmul.f32 %v88, %v77
        %93 = vadd.xlane.f32.xlu0 %v92
        %v94 = vpop.xlane.xlu0 %93
        %v95 = vsel %vm91, %v94, %v77
        %s96 = scalar_lea.vmem %s57, 2 [#allocation0]
        %v97 = vld [vmem:[%s96] ss:$0 sm:$0xff]
        %vm98 = vcmask 130048
        %v99 = vsel %vm98, %v97, 0.0
        %v100 = vlaneseq
        %v101 = vand.u32 %v100, 127
        %vm102 = vcmp.eq.s32.totalorder %v101, 2
        %v103 = vmul.f32 %v99, %v95
        %104 = vadd.xlane.f32.xlu0 %v103
        %v105 = vpop.xlane.xlu0 %104
        %v106 = vsel %vm102, %v105, %v95
        %s107 = scalar_lea.vmem %s57, 3 [#allocation0]
        %v108 = vld [vmem:[%s107] ss:$0 sm:$0xff]
        %vm109 = vcmask 130048
        %v110 = vsel %vm109, %v108, 0.0
        %v111 = vlaneseq
        %v112 = vand.u32 %v111, 127
        %vm113 = vcmp.eq.s32.totalorder %v112, 3
        %v114 = vmul.f32 %v110, %v106
        %115 = vadd.xlane.f32.xlu0 %v114
        %v116 = vpop.xlane.xlu0 %115
        %v117 = vsel %vm113, %v116, %v106
        %s118 = scalar_lea.vmem %s57, 4 [#allocation0]
        %v119 = vld [vmem:[%s118] ss:$0 sm:$0xff]
        %vm120 = vcmask 130048
        %v121 = vsel %vm120, %v119, 0.0
        %v122 = vlaneseq
        %v123 = vand.u32 %v122, 127
        %vm124 = vcmp.eq.s32.totalorder %v123, 4
        %v125 = vmul.f32 %v121, %v117
        %126 = vadd.xlane.f32.xlu0 %v125
        %v127 = vpop.xlane.xlu0 %126
        %v128 = vsel %vm124, %v127, %v117
        %s129 = scalar_lea.vmem %s57, 5 [#allocation0]
        %v130 = vld [vmem:[%s129] ss:$0 sm:$0xff]
        %vm131 = vcmask 130048
        %v132 = vsel %vm131, %v130, 0.0
        %v133 = vlaneseq
        %v134 = vand.u32 %v133, 127
        %vm135 = vcmp.eq.s32.totalorder %v134, 5
        %v136 = vmul.f32 %v132, %v128
        %137 = vadd.xlane.f32.xlu0 %v136
        %v138 = vpop.xlane.xlu0 %137
        %v139 = vsel %vm135, %v138, %v128
        %s140 = scalar_lea.vmem %s57, 6 [#allocation0]
        %v141 = vld [vmem:[%s140] ss:$0 sm:$0xff]
        %vm142 = vcmask 130048
        %v143 = vsel %vm142, %v141, 0.0
        %v144 = vlaneseq
        %v145 = vand.u32 %v144, 127
        %vm146 = vcmp.eq.s32.totalorder %v145, 6
        %v147 = vmul.f32 %v143, %v139
        %148 = vadd.xlane.f32.xlu0 %v147
        %v149 = vpop.xlane.xlu0 %148
        %v150 = vsel %vm146, %v149, %v139
        %s151 = scalar_lea.vmem %s57, 7 [#allocation0]
        %v152 = vld [vmem:[%s151] ss:$0 sm:$0xff]
        %vm153 = vcmask 130048
        %v154 = vsel %vm153, %v152, 0.0
        %v155 = vlaneseq
        %v156 = vand.u32 %v155, 127
        %vm157 = vcmp.eq.s32.totalorder %v156, 7
        %v158 = vmul.f32 %v154, %v150
        %159 = vadd.xlane.f32.xlu0 %v158
        %v160 = vpop.xlane.xlu0 %159
        %v161 = vsel %vm157, %v160, %v150
        %s162 = scalar_lea.vmem %s57, 8 [#allocation0]
        %v163 = vld [vmem:[%s162] ss:$0 sm:$0xff]
        %vm164 = vcmask 130048
        %v165 = vsel %vm164, %v163, 0.0
        %v166 = vlaneseq
        %v167 = vand.u32 %v166, 127
        %vm168 = vcmp.eq.s32.totalorder %v167, 8
        %v169 = vmul.f32 %v165, %v161
        %170 = vadd.xlane.f32.xlu0 %v169
        %v171 = vpop.xlane.xlu0 %170
        %v172 = vsel %vm168, %v171, %v161
        %v173 = vmul.f32 %v165, %v84
        %174 = vadd.xlane.f32.xlu0 %v173
        %v175 = vpop.xlane.xlu0 %174
        %v176 = vsel %vm168, %v175, %v84
        %s177 = scalar_lea.vmem %s57, 9 [#allocation0]
        %v178 = vld [vmem:[%s177] ss:$0 sm:$0xff]
        %vm179 = vcmask 130048
        %v180 = vsel %vm179, %v178, 0.0
        %v181 = vlaneseq
        %v182 = vand.u32 %v181, 127
        %vm183 = vcmp.eq.s32.totalorder %v182, 9
        %v184 = vmul.f32 %v180, %v172
        %185 = vadd.xlane.f32.xlu0 %v184
        %v186 = vpop.xlane.xlu0 %185
        %v187 = vsel %vm183, %v186, %v172
        %v188 = vmul.f32 %v180, %v176
        %189 = vadd.xlane.f32.xlu0 %v188
        %v190 = vpop.xlane.xlu0 %189
        %v191 = vsel %vm183, %v190, %v176
        %s192 = scalar_lea.vmem %s57, 10 [#allocation0]
        %v193 = vld [vmem:[%s192] ss:$0 sm:$0xff]
        %vm194 = vcmask 130048
        %v195 = vsel %vm194, %v193, 0.0
        %v196 = vlaneseq
        %v197 = vand.u32 %v196, 127
        %vm198 = vcmp.eq.s32.totalorder %v197, 10
        %v199 = vmul.f32 %v195, %v187
        %200 = vadd.xlane.f32.xlu0 %v199
        %v201 = vpop.xlane.xlu0 %200
        %v202 = vsel %vm198, %v201, %v187
        %v203 = vmul.f32 %v195, %v191
        %204 = vadd.xlane.f32.xlu0 %v203
        %v205 = vpop.xlane.xlu0 %204
        %v206 = vsel %vm198, %v205, %v191
        %s207 = scalar_lea.vmem %s57, 11 [#allocation0]
        %v208 = vld [vmem:[%s207] ss:$0 sm:$0xff]
        %vm209 = vcmask 130048
        %v210 = vsel %vm209, %v208, 0.0
        %v211 = vlaneseq
        %v212 = vand.u32 %v211, 127
        %vm213 = vcmp.eq.s32.totalorder %v212, 11
        %v214 = vmul.f32 %v210, %v202
        %215 = vadd.xlane.f32.xlu0 %v214
        %v216 = vpop.xlane.xlu0 %215
        %v217 = vsel %vm213, %v216, %v202
        %v218 = vmul.f32 %v210, %v206
        %219 = vadd.xlane.f32.xlu0 %v218
        %v220 = vpop.xlane.xlu0 %219
        %v221 = vsel %vm213, %v220, %v206
        %s222 = scalar_lea.vmem %s57, 12 [#allocation0]
        %v223 = vld [vmem:[%s222] ss:$0 sm:$0xff]
        %vm224 = vcmask 130048
        %v225 = vsel %vm224, %v223, 0.0
        %v226 = vlaneseq
        %v227 = vand.u32 %v226, 127
        %vm228 = vcmp.eq.s32.totalorder %v227, 12
        %v229 = vmul.f32 %v225, %v217
        %230 = vadd.xlane.f32.xlu0 %v229
        %v231 = vpop.xlane.xlu0 %230
        %v232 = vsel %vm228, %v231, %v217
        %v233 = vmul.f32 %v225, %v221
        %234 = vadd.xlane.f32.xlu0 %v233
        %v235 = vpop.xlane.xlu0 %234
        %v236 = vsel %vm228, %v235, %v221
        %s237 = scalar_lea.vmem %s57, 13 [#allocation0]
        %v238 = vld [vmem:[%s237] ss:$0 sm:$0xff]
        %vm239 = vcmask 130048
        %v240 = vsel %vm239, %v238, 0.0
        %v241 = vlaneseq
        %v242 = vand.u32 %v241, 127
        %vm243 = vcmp.eq.s32.totalorder %v242, 13
        %v244 = vmul.f32 %v240, %v232
        %245 = vadd.xlane.f32.xlu0 %v244
        %v246 = vpop.xlane.xlu0 %245
        %v247 = vsel %vm243, %v246, %v232
        %v248 = vmul.f32 %v240, %v236
        %249 = vadd.xlane.f32.xlu0 %v248
        %v250 = vpop.xlane.xlu0 %249
        %v251 = vsel %vm243, %v250, %v236
        %s252 = scalar_lea.vmem %s57, 14 [#allocation0]
        %v253 = vld [vmem:[%s252] ss:$0 sm:$0xff]
        %vm254 = vcmask 130048
        %v255 = vsel %vm254, %v253, 0.0
        %v256 = vlaneseq
        %v257 = vand.u32 %v256, 127
        %vm258 = vcmp.eq.s32.totalorder %v257, 14
        %v259 = vmul.f32 %v255, %v247
        %260 = vadd.xlane.f32.xlu0 %v259
        %v261 = vpop.xlane.xlu0 %260
        %v262 = vsel %vm258, %v261, %v247
        %v263 = vmul.f32 %v255, %v251
        %264 = vadd.xlane.f32.xlu0 %v263
        %v265 = vpop.xlane.xlu0 %264
        %v266 = vsel %vm258, %v265, %v251
        %s267 = scalar_lea.vmem %s57, 15 [#allocation0]
        %v268 = vld [vmem:[%s267] ss:$0 sm:$0xff]
        %vm269 = vcmask 130048
        %v270 = vsel %vm269, %v268, 0.0
        %v271 = vlaneseq
        %v272 = vand.u32 %v271, 127
        %vm273 = vcmp.eq.s32.totalorder %v272, 15
        %v274 = vmul.f32 %v270, %v262
        %275 = vadd.xlane.f32.xlu0 %v274
        %v276 = vpop.xlane.xlu0 %275
        %v277 = vsel %vm273, %v276, %v262
        %v278 = vmul.f32 %v270, %v266
        %279 = vadd.xlane.f32.xlu0 %v278
        %v280 = vpop.xlane.xlu0 %279
        %v281 = vsel %vm273, %v280, %v266
        %282 = vst [vmem:[%s65] sm:$0xff] %v277
        %s283 = scalar_lea.vmem %s65, 8 [#allocation1]
        %284 = vst [vmem:[%s283] sm:$0xff] %v281
        %s285 = sand.u32 %s8, 1
        %s286 = sand.u32 %s8, 1
        %s287 = smul.addr %s286, 16
        %s288 = scalar_lea.vmem [#allocation1], %s287
        %s289 = smul.addr %s8, 16
        %s290 = scalar_lea.vmem %s1, %s289
        // Predicated region
        $region40: #{custom-call.38} parent=38 // pred_check
          _
        $region41: #{custom-call.38} parent=38 // pred_check_branch
          %292 = sbr.rel (0) target = $region43
        $region42: #{custom-call.38} parent=38 // pred_region
          // Predicated region
          $region44: #{custom-call.38} parent=42 // pred_check
            _
          $region45: #{custom-call.38} parent=42 // pred_check_branch
            %294 = sbr.rel (0) target = $region47
          $region46: #{custom-call.38} parent=42 // pred_region
            loop: start=0, step=1, limit=1
            $region48: #{custom-call.38} parent=46 // loop_pre_header
              _
            $region49: #{custom-call.38} parent=46 // loop_header
              %s296 = sphi 0, %s300
              %p297 = scmp.ge.s32.totalorder %s296, 1
              %s301 = sphi %s288, %s288
              %s302 = sphi %s290, %s290
            $region50: #{custom-call.38} parent=46 // loop_header_branch
              %299 = sbr.rel (%p297) target = $region54
            $region51: #{custom-call.38} parent=46 // loop_body
              %v303 = vld [vmem:[%s301] sm:$0xff]
              %304 = vst [vmem:[%s302] sm:$0xff] %v303
              %v305 = vld [vmem:[%s301 + $0x8] sm:$0xff]
              %306 = vst [vmem:[%s302 + $0x8] sm:$0xff] %v305
            $region52: #{custom-call.38} parent=46 // loop_footer
              %s300 = sadd.s32 1, %s296
            $region53: #{custom-call.38} parent=46 // loop_footer_branch
              %295 = sbr.rel target = $region49
            $region54: #{custom-call.38} parent=46 // loop_exit
              _
          $region47: #{custom-call.38} parent=42 // pred_fallthru
            _
          // Predicated region
          $region55: #{custom-call.38} parent=42 // pred_check
            _
          $region56: #{custom-call.38} parent=42 // pred_check_branch
            %308 = sbr.rel target = $region58
          $region57: #{custom-call.38} parent=42 // pred_region
            _
          $region58: #{custom-call.38} parent=42 // pred_fallthru
            _
        $region43: #{custom-call.38} parent=38 // pred_fallthru
          _
        %309 = vnop
      $region39: #{custom-call.38} parent=5 // pred_fallthru
        _
      %p310 = scmp.le.s32.totalorder 2, %s3
      // Predicated region
      $region59: #{custom-call.38} parent=5 // pred_check
        %p311 = pneg %p310
      $region60: #{custom-call.38} parent=5 // pred_check_branch
        %313 = sbr.rel (%p311) target = $region62
      $region61: #{custom-call.38} parent=5 // pred_region
        %s314 = ssub.s32 %s3, 2
        %s315 = sand.u32 %s9, 1
        %s316 = sand.u32 %s9, 1
        %s317 = smul.addr %s316, 16
        %s318 = scalar_lea.vmem [#allocation1], %s317
      $region62: #{custom-call.38} parent=5 // pred_fallthru
        _
    $region6: #{custom-call.38} parent=1 // loop_footer
      %s7 = sadd.s32 1, %s3
    $region7: #{custom-call.38} parent=1 // loop_footer_branch
      %2 = sbr.rel target = $region3
    $region8: #{custom-call.38} parent=1 // loop_exit
      _

// kernel: custom-call.44
$region0: #{custom-call.44}
  %s0 = inlined_call_operand.vmem [shape: f32[2,16,16], index: 0, kind: input, shape index: {}]
  %s1 = inlined_call_operand.vmem [shape: f32[2,16,16], index: 1, kind: output, shape index: {}]
  $region1: #{custom-call.44} parent=0
    #allocation0 [shape = 'u8[16384]{0}', space=vmem, size = 0x4000, scoped, tag = 'operand span for operand 0']
    #allocation1 [shape = 'u8[16384]{0}', space=vmem, size = 0x4000, scoped, tag = 'operand span for operand 1']
    loop: start=0, step=1, limit=4
    $region2: #{custom-call.44} parent=1 // loop_pre_header
      _
    $region3: #{custom-call.44} parent=1 // loop_header
      %s3 = sphi 0, %s7
      %p4 = scmp.ge.s32.totalorder %s3, 4
      %s10 = sphi 0, %s29
      %s11 = sphi 0, %s25
      %s12 = sphi 0, %s21
      %s13 = sphi 0, %s10
      %s14 = sphi 0, %s11
      %s15 = sphi 0, %s12
      %s16 = sphi 0, %s13
      %s17 = sphi 0, %s14
      %s18 = sphi 0, %s15
    $region4: #{custom-call.44} parent=1 // loop_header_branch
      %6 = sbr.rel (%p4) target = $region8
    $region5: #{custom-call.44} parent=1 // loop_body
      %s8 = ssub.s32 %s3, 1
      %s9 = ssub.s32 %s3, 2
      %s19 = sadd.s32 1, %s12
      %p20 = scmp.ge.s32.totalorder %s19, 1
      %s21 = scalar_select %p20, 0, %s19
      %s22 = sadd.s32 1, %s11
      %s23 = scalar_select %p20, %s22, %s11
      %p24 = scmp.ge.s32.totalorder %s23, 1
      %s25 = scalar_select %p24, 0, %s23
      %s26 = sadd.s32 1, %s10
      %s27 = scalar_select %p24, %s26, %s10
      %p28 = scmp.ge.s32.totalorder %s27, 2
      %s29 = scalar_select %p28, 0, %s27
      %p30 = scmp.le.s32.totalorder 1, %s3
      %p31 = scmp.lt.s32.totalorder %s3, 3
      %p32 = pnand %p30, %p31
      %p33 = pneg %p32
      // Predicated region
      $region9: #{custom-call.44} parent=5 // pred_check
        _
      $region10: #{custom-call.44} parent=5 // pred_check_branch
        %35 = sbr.rel (%p32) target = $region12
      $region11: #{custom-call.44} parent=5 // pred_region
        %s36 = ssub.s32 %s3, 1
      $region12: #{custom-call.44} parent=5 // pred_fallthru
        _
      %p37 = scmp.lt.s32.totalorder %s3, 2
      // Predicated region
      $region13: #{custom-call.44} parent=5 // pred_check
        %p38 = pneg %p37
      $region14: #{custom-call.44} parent=5 // pred_check_branch
        %40 = sbr.rel (%p38) target = $region16
      $region15: #{custom-call.44} parent=5 // pred_region
        %s41 = sand.u32 %s3, 1
        %s42 = sand.u32 %s3, 1
        %s43 = smul.addr %s42, 16
        %s44 = scalar_lea.vmem [#allocation0], %s43
        %s45 = sadd.s32 %s12, %s11
        %s46 = smul.addr %s10, 2
        %s47 = sadd.s32 %s45, %s46
        %s48 = smul.addr %s47, 8
        %s49 = scalar_lea.vmem %s0, %s48
        // Predicated region
        $region17: #{custom-call.44} parent=15 // pred_check
          _
        $region18: #{custom-call.44} parent=15 // pred_check_branch
          %51 = sbr.rel (0) target = $region20
        $region19: #{custom-call.44} parent=15 // pred_region
          // Predicated region
          $region21: #{custom-call.44} parent=19 // pred_check
            _
          $region22: #{custom-call.44} parent=19 // pred_check_branch
            %53 = sbr.rel (0) target = $region24
          $region23: #{custom-call.44} parent=19 // pred_region
            // Predicated region
            $region36: #{custom-call.44} parent=23 // pred_check
              _
            $region37: #{custom-call.44} parent=23 // pred_check_branch
              %70 = sbr.rel (0) target = $region39
            $region38: #{custom-call.44} parent=23 // pred_region
              loop: start=0, step=1, limit=1
              $region40: #{custom-call.44} parent=38 // loop_pre_header
                _
              $region41: #{custom-call.44} parent=38 // loop_header
                %s72 = sphi 0, %s76
                %p73 = scmp.ge.s32.totalorder %s72, 1
                %s77 = sphi %s49, %s49
                %s78 = sphi %s44, %s44
              $region42: #{custom-call.44} parent=38 // loop_header_branch
                %75 = sbr.rel (%p73) target = $region46
              $region43: #{custom-call.44} parent=38 // loop_body
                %v79 = vld [vmem:[%s77] sm:$0xff]
                %80 = vst [vmem:[%s78] sm:$0xff] %v79
                %v81 = vld [vmem:[%s77 + $0x8] sm:$0xff]
                %82 = vst [vmem:[%s78 + $0x8] sm:$0xff] %v81
              $region44: #{custom-call.44} parent=38 // loop_footer
                %s76 = sadd.s32 1, %s72
              $region45: #{custom-call.44} parent=38 // loop_footer_branch
                %71 = sbr.rel target = $region41
              $region46: #{custom-call.44} parent=38 // loop_exit
                _
            $region39: #{custom-call.44} parent=23 // pred_fallthru
              _
            // Predicated region
            $region47: #{custom-call.44} parent=23 // pred_check
              _
            $region48: #{custom-call.44} parent=23 // pred_check_branch
              %84 = sbr.rel target = $region50
            $region49: #{custom-call.44} parent=23 // pred_region
              _
            $region50: #{custom-call.44} parent=23 // pred_fallthru
              _
          $region24: #{custom-call.44} parent=19 // pred_fallthru
            _
          // Predicated region
          $region25: #{custom-call.44} parent=19 // pred_check
            _
          $region26: #{custom-call.44} parent=19 // pred_check_branch
            %55 = sbr.rel target = $region28
          $region27: #{custom-call.44} parent=19 // pred_region
            loop: start=0, step=1, limit=1
            $region29: #{custom-call.44} parent=27 // loop_pre_header
              _
            $region30: #{custom-call.44} parent=27 // loop_header
              %s58 = sphi 0, %s62
              %p59 = scmp.ge.s32.totalorder %s58, 1
              %s63 = sphi %s49, %s49
              %s64 = sphi %s44, %s44
            $region31: #{custom-call.44} parent=27 // loop_header_branch
              %61 = sbr.rel (%p59) target = $region35
            $region32: #{custom-call.44} parent=27 // loop_body
              %v65 = vld [vmem:[%s63] sm:$0xff]
              %66 = vst [vmem:[%s64] sm:$0xff] %v65
              %v67 = vld [vmem:[%s63 + $0x8] sm:$0xff]
              %68 = vst [vmem:[%s64 + $0x8] sm:$0xff] %v67
            $region33: #{custom-call.44} parent=27 // loop_footer
              %s62 = sadd.s32 1, %s58
            $region34: #{custom-call.44} parent=27 // loop_footer_branch
              %57 = sbr.rel target = $region30
            $region35: #{custom-call.44} parent=27 // loop_exit
              _
          $region28: #{custom-call.44} parent=19 // pred_fallthru
            _
        $region20: #{custom-call.44} parent=15 // pred_fallthru
          _
        %85 = vnop
      $region16: #{custom-call.44} parent=5 // pred_fallthru
        _
      %p86 = scmp.le.s32.totalorder 1, %s3
      %p87 = scmp.lt.s32.totalorder %s3, 3
      %p88 = pnand %p86, %p87
      %p89 = pneg %p88
      // Predicated region
      $region51: #{custom-call.44} parent=5 // pred_check
        _
      $region52: #{custom-call.44} parent=5 // pred_check_branch
        %91 = sbr.rel (%p88) target = $region54
      $region53: #{custom-call.44} parent=5 // pred_region
        %s92 = ssub.s32 %s3, 1
        %s93 = sand.u32 %s8, 1
        %s94 = sand.u32 %s8, 1
        %s95 = smul.addr %s94, 16
        %s96 = scalar_lea.vmem [#allocation0], %s95
        %s97 = sand.u32 %s8, 1
        %s98 = sand.u32 %s8, 1
        %s99 = smul.addr %s98, 16
        %s100 = scalar_lea.vmem [#allocation0], %s99
        %s101 = sand.u32 %s8, 1
        %s102 = sand.u32 %s8, 1
        %s103 = smul.addr %s102, 16
        %s104 = scalar_lea.vmem [#allocation1], %s103
        %105 = vst [vmem:[%s104] sm:$0xff] 0.0
        %s106 = scalar_lea.vmem %s104, 8 [#allocation1]
        %107 = vst [vmem:[%s106] sm:$0xff] 0.0
        %vm108 = vcmask 7168
        %v109 = vld [vmem:[%s104] ss:$0 sm:$0xff]
        %v110 = vld [vmem:[%s96] ss:$0 sm:$0xff]
        %v111 = vmul.f32 %v109, %v109
        %112 = vadd.xlane.f32.xlu0 %v111
        %v113 = vpop.xlane.xlu0 %112
        %v114 = vsub.f32 %v110, %v113
        %v115 = vrsqrt.pop %v114
        %v116 = vld [vmem:[%s96] sm:$0xff]
        %v117 = vld [vmem:[%s104] sm:$0xff]
        %v118 = vmul.f32 %v117, %v109
        %119 = vadd.xlane.f32.xlu0 %v118
        %v120 = vpop.xlane.xlu0 %119
        %v121 = vsub.f32 %v116, %v120
        %v122 = vmul.f32 %v121, %v115
        %v123 = vsel %vm108, %v122, 0.0
        %v124 = vadd.f32 %v117, %v123
        %125 = vst [vmem:[%s104] sm:$0xff] %v124
        %s126 = scalar_lea.vmem %s96, 8 [#allocation0]
        %v127 = vld [vmem:[%s126] sm:$0xff]
        %s128 = scalar_lea.vmem %s104, 8 [#allocation1]
        %v129 = vld [vmem:[%s128] sm:$0xff]
        %v130 = vmul.f32 %v129, %v109
        %131 = vadd.xlane.f32.xlu0 %v130
        %v132 = vpop.xlane.xlu0 %131
        %v133 = vsub.f32 %v127, %v132
        %v134 = vmul.f32 %v133, %v115
        %v135 = vsel %vm108, %v134, 0.0
        %v136 = vadd.f32 %v129, %v135
        %s137 = scalar_lea.vmem %s104, 8 [#allocation1]
        %138 = vst [vmem:[%s137] sm:$0xff] %v136
        %vm139 = vcmask 15368
        %s140 = scalar_lea.vmem %s104, 1 [#allocation1]
        %v141 = vld [vmem:[%s140] ss:$0 sm:$0xff]
        %s142 = scalar_lea.vmem %s96, 1 [#allocation0]
        %v143 = vld [vmem:[%s142] ss:$0 sm:$0xff]
        %v144 = vmul.f32 %v141, %v141
        %145 = vadd.xlane.f32.xlu0 %v144
        %v146 = vpop.xlane.xlu0 %145
        %v147 = vsub.f32 %v143, %v146
        %v148 = vrsqrt.pop %v147
        %v149 = vld [vmem:[%s96] sm:$0xff]
        %v150 = vld [vmem:[%s104] sm:$0xff]
        %v151 = vmul.f32 %v150, %v141
        %152 = vadd.xlane.f32.xlu0 %v151
        %v153 = vpop.xlane.xlu0 %152
        %v154 = vsub.f32 %v149, %v153
        %v155 = vmul.f32 %v154, %v148
        %vm156 = vcmask 1047553
        %vm157 = vmand %vm139, %vm156
        %v158 = vsel %vm157, %v155, 0.0
        %v159 = vadd.f32 %v150, %v158
        %160 = vst [vmem:[%s104] sm:$0xff] %v159
        %s161 = scalar_lea.vmem %s96, 8 [#allocation0]
        %v162 = vld [vmem:[%s161] sm:$0xff]
        %s163 = scalar_lea.vmem %s104, 8 [#allocation1]
        %v164 = vld [vmem:[%s163] sm:$0xff]
        %v165 = vmul.f32 %v164, %v141
        %166 = vadd.xlane.f32.xlu0 %v165
        %v167 = vpop.xlane.xlu0 %166
        %v168 = vsub.f32 %v162, %v167
        %v169 = vmul.f32 %v168, %v148
        %v170 = vsel %vm139, %v169, 0.0
        %v171 = vadd.f32 %v164, %v170
        %s172 = scalar_lea.vmem %s104, 8 [#allocation1]
        %173 = vst [vmem:[%s172] sm:$0xff] %v171
        %vm174 = vcmask 23568
        %s175 = scalar_lea.vmem %s104, 2 [#allocation1]
        %v176 = vld [vmem:[%s175] ss:$0 sm:$0xff]
        %s177 = scalar_lea.vmem %s96, 2 [#allocation0]
        %v178 = vld [vmem:[%s177] ss:$0 sm:$0xff]
        %v179 = vmul.f32 %v176, %v176
        %180 = vadd.xlane.f32.xlu0 %v179
        %v181 = vpop.xlane.xlu0 %180
        %v182 = vsub.f32 %v178, %v181
        %v183 = vrsqrt.pop %v182
        %v184 = vld [vmem:[%s96] sm:$0xff]
        %v185 = vld [vmem:[%s104] sm:$0xff]
        %v186 = vmul.f32 %v185, %v176
        %187 = vadd.xlane.f32.xlu0 %v186
        %v188 = vpop.xlane.xlu0 %187
        %v189 = vsub.f32 %v184, %v188
        %v190 = vmul.f32 %v189, %v183
        %vm191 = vcmask 1047554
        %vm192 = vmand %vm174, %vm191
        %v193 = vsel %vm192, %v190, 0.0
        %v194 = vadd.f32 %v185, %v193
        %195 = vst [vmem:[%s104] sm:$0xff] %v194
        %s196 = scalar_lea.vmem %s96, 8 [#allocation0]
        %v197 = vld [vmem:[%s196] sm:$0xff]
        %s198 = scalar_lea.vmem %s104, 8 [#allocation1]
        %v199 = vld [vmem:[%s198] sm:$0xff]
        %v200 = vmul.f32 %v199, %v176
        %201 = vadd.xlane.f32.xlu0 %v200
        %v202 = vpop.xlane.xlu0 %201
        %v203 = vsub.f32 %v197, %v202
        %v204 = vmul.f32 %v203, %v183
        %v205 = vsel %vm174, %v204, 0.0
        %v206 = vadd.f32 %v199, %v205
        %s207 = scalar_lea.vmem %s104, 8 [#allocation1]
        %208 = vst [vmem:[%s207] sm:$0xff] %v206
        %vm209 = vcmask 31768
        %s210 = scalar_lea.vmem %s104, 3 [#allocation1]
        %v211 = vld [vmem:[%s210] ss:$0 sm:$0xff]
        %s212 = scalar_lea.vmem %s96, 3 [#allocation0]
        %v213 = vld [vmem:[%s212] ss:$0 sm:$0xff]
        %v214 = vmul.f32 %v211, %v211
        %215 = vadd.xlane.f32.xlu0 %v214
        %v216 = vpop.xlane.xlu0 %215
        %v217 = vsub.f32 %v213, %v216
        %v218 = vrsqrt.pop %v217
        %v219 = vld [vmem:[%s96] sm:$0xff]
        %v220 = vld [vmem:[%s104] sm:$0xff]
        %v221 = vmul.f32 %v220, %v211
        %222 = vadd.xlane.f32.xlu0 %v221
        %v223 = vpop.xlane.xlu0 %222
        %v224 = vsub.f32 %v219, %v223
        %v225 = vmul.f32 %v224, %v218
        %vm226 = vcmask 1047555
        %vm227 = vmand %vm209, %vm226
        %v228 = vsel %vm227, %v225, 0.0
        %v229 = vadd.f32 %v220, %v228
        %230 = vst [vmem:[%s104] sm:$0xff] %v229
        %s231 = scalar_lea.vmem %s96, 8 [#allocation0]
        %v232 = vld [vmem:[%s231] sm:$0xff]
        %s233 = scalar_lea.vmem %s104, 8 [#allocation1]
        %v234 = vld [vmem:[%s233] sm:$0xff]
        %v235 = vmul.f32 %v234, %v211
        %236 = vadd.xlane.f32.xlu0 %v235
        %v237 = vpop.xlane.xlu0 %236
        %v238 = vsub.f32 %v232, %v237
        %v239 = vmul.f32 %v238, %v218
        %v240 = vsel %vm209, %v239, 0.0
        %v241 = vadd.f32 %v234, %v240
        %s242 = scalar_lea.vmem %s104, 8 [#allocation1]
        %243 = vst [vmem:[%s242] sm:$0xff] %v241
        %vm244 = vcmask 39968
        %s245 = scalar_lea.vmem %s104, 4 [#allocation1]
        %v246 = vld [vmem:[%s245] ss:$0 sm:$0xff]
        %s247 = scalar_lea.vmem %s96, 4 [#allocation0]
        %v248 = vld [vmem:[%s247] ss:$0 sm:$0xff]
        %v249 = vmul.f32 %v246, %v246
        %250 = vadd.xlane.f32.xlu0 %v249
        %v251 = vpop.xlane.xlu0 %250
        %v252 = vsub.f32 %v248, %v251
        %v253 = vrsqrt.pop %v252
        %v254 = vld [vmem:[%s96] sm:$0xff]
        %v255 = vld [vmem:[%s104] sm:$0xff]
        %v256 = vmul.f32 %v255, %v246
        %257 = vadd.xlane.f32.xlu0 %v256
        %v258 = vpop.xlane.xlu0 %257
        %v259 = vsub.f32 %v254, %v258
        %v260 = vmul.f32 %v259, %v253
        %vm261 = vcmask 1047556
        %vm262 = vmand %vm244, %vm261
        %v263 = vsel %vm262, %v260, 0.0
        %v264 = vadd.f32 %v255, %v263
        %265 = vst [vmem:[%s104] sm:$0xff] %v264
        %s266 = scalar_lea.vmem %s96, 8 [#allocation0]
        %v267 = vld [vmem:[%s266] sm:$0xff]
        %s268 = scalar_lea.vmem %s104, 8 [#allocation1]
        %v269 = vld [vmem:[%s268] sm:$0xff]
        %v270 = vmul.f32 %v269, %v246
        %271 = vadd.xlane.f32.xlu0 %v270
        %v272 = vpop.xlane.xlu0 %271
        %v273 = vsub.f32 %v267, %v272
        %v274 = vmul.f32 %v273, %v253
        %v275 = vsel %vm244, %v274, 0.0
        %v276 = vadd.f32 %v269, %v275
        %s277 = scalar_lea.vmem %s104, 8 [#allocation1]
        %278 = vst [vmem:[%s277] sm:$0xff] %v276
        %vm279 = vcmask 48168
        %s280 = scalar_lea.vmem %s104, 5 [#allocation1]
        %v281 = vld [vmem:[%s280] ss:$0 sm:$0xff]
        %s282 = scalar_lea.vmem %s96, 5 [#allocation0]
        %v283 = vld [vmem:[%s282] ss:$0 sm:$0xff]
        %v284 = vmul.f32 %v281, %v281
        %285 = vadd.xlane.f32.xlu0 %v284
        %v286 = vpop.xlane.xlu0 %285
        %v287 = vsub.f32 %v283, %v286
        %v288 = vrsqrt.pop %v287
        %v289 = vld [vmem:[%s96] sm:$0xff]
        %v290 = vld [vmem:[%s104] sm:$0xff]
        %v291 = vmul.f32 %v290, %v281
        %292 = vadd.xlane.f32.xlu0 %v291
        %v293 = vpop.xlane.xlu0 %292
        %v294 = vsub.f32 %v289, %v293
        %v295 = vmul.f32 %v294, %v288
        %vm296 = vcmask 1047557
        %vm297 = vmand %vm279, %vm296
        %v298 = vsel %vm297, %v295, 0.0
        %v299 = vadd.f32 %v290, %v298
        %300 = vst [vmem:[%s104] sm:$0xff] %v299
        %s301 = scalar_lea.vmem %s96, 8 [#allocation0]
        %v302 = vld [vmem:[%s301] sm:$0xff]
        %s303 = scalar_lea.vmem %s104, 8 [#allocation1]
        %v304 = vld [vmem:[%s303] sm:$0xff]
        %v305 = vmul.f32 %v304, %v281
        %306 = vadd.xlane.f32.xlu0 %v305
        %v307 = vpop.xlane.xlu0 %306
        %v308 = vsub.f32 %v302, %v307
        %v309 = vmul.f32 %v308, %v288
        %v310 = vsel %vm279, %v309, 0.0
        %v311 = vadd.f32 %v304, %v310
        %s312 = scalar_lea.vmem %s104, 8 [#allocation1]
        %313 = vst [vmem:[%s312] sm:$0xff] %v311
        %vm314 = vcmask 56368
        %s315 = scalar_lea.vmem %s104, 6 [#allocation1]
        %v316 = vld [vmem:[%s315] ss:$0 sm:$0xff]
        %s317 = scalar_lea.vmem %s96, 6 [#allocation0]
        %v318 = vld [vmem:[%s317] ss:$0 sm:$0xff]
        %v319 = vmul.f32 %v316, %v316
        %320 = vadd.xlane.f32.xlu0 %v319
        %v321 = vpop.xlane.xlu0 %320
        %v322 = vsub.f32 %v318, %v321
        %v323 = vrsqrt.pop %v322
        %v324 = vld [vmem:[%s96] sm:$0xff]
        %v325 = vld [vmem:[%s104] sm:$0xff]
        %v326 = vmul.f32 %v325, %v316
        %327 = vadd.xlane.f32.xlu0 %v326
        %v328 = vpop.xlane.xlu0 %327
        %v329 = vsub.f32 %v324, %v328
        %v330 = vmul.f32 %v329, %v323
        %vm331 = vcmask 1047558
        %vm332 = vmand %vm314, %vm331
        %v333 = vsel %vm332, %v330, 0.0
        %v334 = vadd.f32 %v325, %v333
        %335 = vst [vmem:[%s104] sm:$0xff] %v334
        %s336 = scalar_lea.vmem %s96, 8 [#allocation0]
        %v337 = vld [vmem:[%s336] sm:$0xff]
        %s338 = scalar_lea.vmem %s104, 8 [#allocation1]
        %v339 = vld [vmem:[%s338] sm:$0xff]
        %v340 = vmul.f32 %v339, %v316
        %341 = vadd.xlane.f32.xlu0 %v340
        %v342 = vpop.xlane.xlu0 %341
        %v343 = vsub.f32 %v337, %v342
        %v344 = vmul.f32 %v343, %v323
        %v345 = vsel %vm314, %v344, 0.0
        %v346 = vadd.f32 %v339, %v345
        %s347 = scalar_lea.vmem %s104, 8 [#allocation1]
        %348 = vst [vmem:[%s347] sm:$0xff] %v346
        %vm349 = vcmask 64568
        %s350 = scalar_lea.vmem %s104, 7 [#allocation1]
        %v351 = vld [vmem:[%s350] ss:$0 sm:$0xff]
        %s352 = scalar_lea.vmem %s96, 7 [#allocation0]
        %v353 = vld [vmem:[%s352] ss:$0 sm:$0xff]
        %v354 = vmul.f32 %v351, %v351
        %355 = vadd.xlane.f32.xlu0 %v354
        %v356 = vpop.xlane.xlu0 %355
        %v357 = vsub.f32 %v353, %v356
        %v358 = vrsqrt.pop %v357
        %v359 = vld [vmem:[%s96] sm:$0xff]
        %v360 = vld [vmem:[%s104] sm:$0xff]
        %v361 = vmul.f32 %v360, %v351
        %362 = vadd.xlane.f32.xlu0 %v361
        %v363 = vpop.xlane.xlu0 %362
        %v364 = vsub.f32 %v359, %v363
        %v365 = vmul.f32 %v364, %v358
        %vm366 = vcmask 1047559
        %vm367 = vmand %vm349, %vm366
        %v368 = vsel %vm367, %v365, 0.0
        %v369 = vadd.f32 %v360, %v368
        %370 = vst [vmem:[%s104] sm:$0xff] %v369
        %s371 = scalar_lea.vmem %s96, 8 [#allocation0]
        %v372 = vld [vmem:[%s371] sm:$0xff]
        %s373 = scalar_lea.vmem %s104, 8 [#allocation1]
        %v374 = vld [vmem:[%s373] sm:$0xff]
        %v375 = vmul.f32 %v374, %v351
        %376 = vadd.xlane.f32.xlu0 %v375
        %v377 = vpop.xlane.xlu0 %376
        %v378 = vsub.f32 %v372, %v377
        %v379 = vmul.f32 %v378, %v358
        %v380 = vsel %vm349, %v379, 0.0
        %v381 = vadd.f32 %v374, %v380
        %s382 = scalar_lea.vmem %s104, 8 [#allocation1]
        %383 = vst [vmem:[%s382] sm:$0xff] %v381
        %vm384 = vcmask 72768
        %s385 = scalar_lea.vmem %s104, 8 [#allocation1]
        %v386 = vld [vmem:[%s385] ss:$0 sm:$0xff]
        %s387 = scalar_lea.vmem %s96, 8 [#allocation0]
        %v388 = vld [vmem:[%s387] ss:$0 sm:$0xff]
        %v389 = vmul.f32 %v386, %v386
        %390 = vadd.xlane.f32.xlu0 %v389
        %v391 = vpop.xlane.xlu0 %390
        %v392 = vsub.f32 %v388, %v391
        %v393 = vrsqrt.pop %v392
        %s394 = scalar_lea.vmem %s96, 8 [#allocation0]
        %v395 = vld [vmem:[%s394] sm:$0xff]
        %s396 = scalar_lea.vmem %s104, 8 [#allocation1]
        %v397 = vld [vmem:[%s396] sm:$0xff]
        %v398 = vmul.f32 %v397, %v386
        %399 = vadd.xlane.f32.xlu0 %v398
        %v400 = vpop.xlane.xlu0 %399
        %v401 = vsub.f32 %v395, %v400
        %v402 = vmul.f32 %v401, %v393
        %v403 = vsel %vm384, %v402, 0.0
        %v404 = vadd.f32 %v397, %v403
        %s405 = scalar_lea.vmem %s104, 8 [#allocation1]
        %406 = vst [vmem:[%s405] sm:$0xff] %v404
        %vm407 = vcmask 80968
        %s408 = scalar_lea.vmem %s104, 9 [#allocation1]
        %v409 = vld [vmem:[%s408] ss:$0 sm:$0xff]
        %s410 = scalar_lea.vmem %s96, 9 [#allocation0]
        %v411 = vld [vmem:[%s410] ss:$0 sm:$0xff]
        %v412 = vmul.f32 %v409, %v409
        %413 = vadd.xlane.f32.xlu0 %v412
        %v414 = vpop.xlane.xlu0 %413
        %v415 = vsub.f32 %v411, %v414
        %v416 = vrsqrt.pop %v415
        %s417 = scalar_lea.vmem %s96, 8 [#allocation0]
        %v418 = vld [vmem:[%s417] sm:$0xff]
        %s419 = scalar_lea.vmem %s104, 8 [#allocation1]
        %v420 = vld [vmem:[%s419] sm:$0xff]
        %v421 = vmul.f32 %v420, %v409
        %422 = vadd.xlane.f32.xlu0 %v421
        %v423 = vpop.xlane.xlu0 %422
        %v424 = vsub.f32 %v418, %v423
        %v425 = vmul.f32 %v424, %v416
        %vm426 = vcmask 1047553
        %vm427 = vmand %vm407, %vm426
        %v428 = vsel %vm427, %v425, 0.0
        %v429 = vadd.f32 %v420, %v428
        %s430 = scalar_lea.vmem %s104, 8 [#allocation1]
        %431 = vst [vmem:[%s430] sm:$0xff] %v429
        %vm432 = vcmask 89168
        %s433 = scalar_lea.vmem %s104, 10 [#allocation1]
        %v434 = vld [vmem:[%s433] ss:$0 sm:$0xff]
        %s435 = scalar_lea.vmem %s96, 10 [#allocation0]
        %v436 = vld [vmem:[%s435] ss:$0 sm:$0xff]
        %v437 = vmul.f32 %v434, %v434
        %438 = vadd.xlane.f32.xlu0 %v437
        %v439 = vpop.xlane.xlu0 %438
        %v440 = vsub.f32 %v436, %v439
        %v441 = vrsqrt.pop %v440
        %s442 = scalar_lea.vmem %s96, 8 [#allocation0]
        %v443 = vld [vmem:[%s442] sm:$0xff]
        %s444 = scalar_lea.vmem %s104, 8 [#allocation1]
        %v445 = vld [vmem:[%s444] sm:$0xff]
        %v446 = vmul.f32 %v445, %v434
        %447 = vadd.xlane.f32.xlu0 %v446
        %v448 = vpop.xlane.xlu0 %447
        %v449 = vsub.f32 %v443, %v448
        %v450 = vmul.f32 %v449, %v441
        %vm451 = vcmask 1047554
        %vm452 = vmand %vm432, %vm451
        %v453 = vsel %vm452, %v450, 0.0
        %v454 = vadd.f32 %v445, %v453
        %s455 = scalar_lea.vmem %s104, 8 [#allocation1]
        %456 = vst [vmem:[%s455] sm:$0xff] %v454
        %vm457 = vcmask 97368
        %s458 = scalar_lea.vmem %s104, 11 [#allocation1]
        %v459 = vld [vmem:[%s458] ss:$0 sm:$0xff]
        %s460 = scalar_lea.vmem %s96, 11 [#allocation0]
        %v461 = vld [vmem:[%s460] ss:$0 sm:$0xff]
        %v462 = vmul.f32 %v459, %v459
        %463 = vadd.xlane.f32.xlu0 %v462
        %v464 = vpop.xlane.xlu0 %463
        %v465 = vsub.f32 %v461, %v464
        %v466 = vrsqrt.pop %v465
        %s467 = scalar_lea.vmem %s96, 8 [#allocation0]
        %v468 = vld [vmem:[%s467] sm:$0xff]
        %s469 = scalar_lea.vmem %s104, 8 [#allocation1]
        %v470 = vld [vmem:[%s469] sm:$0xff]
        %v471 = vmul.f32 %v470, %v459
        %472 = vadd.xlane.f32.xlu0 %v471
        %v473 = vpop.xlane.xlu0 %472
        %v474 = vsub.f32 %v468, %v473
        %v475 = vmul.f32 %v474, %v466
        %vm476 = vcmask 1047555
        %vm477 = vmand %vm457, %vm476
        %v478 = vsel %vm477, %v475, 0.0
        %v479 = vadd.f32 %v470, %v478
        %s480 = scalar_lea.vmem %s104, 8 [#allocation1]
        %481 = vst [vmem:[%s480] sm:$0xff] %v479
        %vm482 = vcmask 105568
        %s483 = scalar_lea.vmem %s104, 12 [#allocation1]
        %v484 = vld [vmem:[%s483] ss:$0 sm:$0xff]
        %s485 = scalar_lea.vmem %s96, 12 [#allocation0]
        %v486 = vld [vmem:[%s485] ss:$0 sm:$0xff]
        %v487 = vmul.f32 %v484, %v484
        %488 = vadd.xlane.f32.xlu0 %v487
        %v489 = vpop.xlane.xlu0 %488
        %v490 = vsub.f32 %v486, %v489
        %v491 = vrsqrt.pop %v490
        %s492 = scalar_lea.vmem %s96, 8 [#allocation0]
        %v493 = vld [vmem:[%s492] sm:$0xff]
        %s494 = scalar_lea.vmem %s104, 8 [#allocation1]
        %v495 = vld [vmem:[%s494] sm:$0xff]
        %v496 = vmul.f32 %v495, %v484
        %497 = vadd.xlane.f32.xlu0 %v496
        %v498 = vpop.xlane.xlu0 %497
        %v499 = vsub.f32 %v493, %v498
        %v500 = vmul.f32 %v499, %v491
        %vm501 = vcmask 1047556
        %vm502 = vmand %vm482, %vm501
        %v503 = vsel %vm502, %v500, 0.0
        %v504 = vadd.f32 %v495, %v503
        %s505 = scalar_lea.vmem %s104, 8 [#allocation1]
        %506 = vst [vmem:[%s505] sm:$0xff] %v504
        %vm507 = vcmask 113768
        %s508 = scalar_lea.vmem %s104, 13 [#allocation1]
        %v509 = vld [vmem:[%s508] ss:$0 sm:$0xff]
        %s510 = scalar_lea.vmem %s96, 13 [#allocation0]
        %v511 = vld [vmem:[%s510] ss:$0 sm:$0xff]
        %v512 = vmul.f32 %v509, %v509
        %513 = vadd.xlane.f32.xlu0 %v512
        %v514 = vpop.xlane.xlu0 %513
        %v515 = vsub.f32 %v511, %v514
        %v516 = vrsqrt.pop %v515
        %s517 = scalar_lea.vmem %s96, 8 [#allocation0]
        %v518 = vld [vmem:[%s517] sm:$0xff]
        %s519 = scalar_lea.vmem %s104, 8 [#allocation1]
        %v520 = vld [vmem:[%s519] sm:$0xff]
        %v521 = vmul.f32 %v520, %v509
        %522 = vadd.xlane.f32.xlu0 %v521
        %v523 = vpop.xlane.xlu0 %522
        %v524 = vsub.f32 %v518, %v523
        %v525 = vmul.f32 %v524, %v516
        %vm526 = vcmask 1047557
        %vm527 = vmand %vm507, %vm526
        %v528 = vsel %vm527, %v525, 0.0
        %v529 = vadd.f32 %v520, %v528
        %s530 = scalar_lea.vmem %s104, 8 [#allocation1]
        %531 = vst [vmem:[%s530] sm:$0xff] %v529
        %vm532 = vcmask 121968
        %s533 = scalar_lea.vmem %s104, 14 [#allocation1]
        %v534 = vld [vmem:[%s533] ss:$0 sm:$0xff]
        %s535 = scalar_lea.vmem %s96, 14 [#allocation0]
        %v536 = vld [vmem:[%s535] ss:$0 sm:$0xff]
        %v537 = vmul.f32 %v534, %v534
        %538 = vadd.xlane.f32.xlu0 %v537
        %v539 = vpop.xlane.xlu0 %538
        %v540 = vsub.f32 %v536, %v539
        %v541 = vrsqrt.pop %v540
        %s542 = scalar_lea.vmem %s96, 8 [#allocation0]
        %v543 = vld [vmem:[%s542] sm:$0xff]
        %s544 = scalar_lea.vmem %s104, 8 [#allocation1]
        %v545 = vld [vmem:[%s544] sm:$0xff]
        %v546 = vmul.f32 %v545, %v534
        %547 = vadd.xlane.f32.xlu0 %v546
        %v548 = vpop.xlane.xlu0 %547
        %v549 = vsub.f32 %v543, %v548
        %v550 = vmul.f32 %v549, %v541
        %vm551 = vcmask 1047558
        %vm552 = vmand %vm532, %vm551
        %v553 = vsel %vm552, %v550, 0.0
        %v554 = vadd.f32 %v545, %v553
        %s555 = scalar_lea.vmem %s104, 8 [#allocation1]
        %556 = vst [vmem:[%s555] sm:$0xff] %v554
        %vm557 = vcmask 130168
        %s558 = scalar_lea.vmem %s104, 15 [#allocation1]
        %v559 = vld [vmem:[%s558] ss:$0 sm:$0xff]
        %s560 = scalar_lea.vmem %s96, 15 [#allocation0]
        %v561 = vld [vmem:[%s560] ss:$0 sm:$0xff]
        %v562 = vmul.f32 %v559, %v559
        %563 = vadd.xlane.f32.xlu0 %v562
        %v564 = vpop.xlane.xlu0 %563
        %v565 = vsub.f32 %v561, %v564
        %v566 = vrsqrt.pop %v565
        %s567 = scalar_lea.vmem %s96, 8 [#allocation0]
        %v568 = vld [vmem:[%s567] sm:$0xff]
        %s569 = scalar_lea.vmem %s104, 8 [#allocation1]
        %v570 = vld [vmem:[%s569] sm:$0xff]
        %v571 = vmul.f32 %v570, %v559
        %572 = vadd.xlane.f32.xlu0 %v571
        %v573 = vpop.xlane.xlu0 %572
        %v574 = vsub.f32 %v568, %v573
        %v575 = vmul.f32 %v574, %v566
        %vm576 = vcmask 1047559
        %vm577 = vmand %vm557, %vm576
        %v578 = vsel %vm577, %v575, 0.0
        %v579 = vadd.f32 %v570, %v578
        %s580 = scalar_lea.vmem %s104, 8 [#allocation1]
        %581 = vst [vmem:[%s580] sm:$0xff] %v579
        %s582 = sand.u32 %s8, 1
        %s583 = sand.u32 %s8, 1
        %s584 = smul.addr %s583, 16
        %s585 = scalar_lea.vmem [#allocation1], %s584
        %s586 = sadd.s32 %s15, %s14
        %s587 = smul.addr %s13, 2
        %s588 = sadd.s32 %s586, %s587
        %s589 = smul.addr %s588, 8
        %s590 = scalar_lea.vmem %s1, %s589
        // Predicated region
        $region55: #{custom-call.44} parent=53 // pred_check
          _
        $region56: #{custom-call.44} parent=53 // pred_check_branch
          %592 = sbr.rel (0) target = $region58
        $region57: #{custom-call.44} parent=53 // pred_region
          // Predicated region
          $region59: #{custom-call.44} parent=57 // pred_check
            _
          $region60: #{custom-call.44} parent=57 // pred_check_branch
            %594 = sbr.rel (0) target = $region62
          $region61: #{custom-call.44} parent=57 // pred_region
            // Predicated region
            $region74: #{custom-call.44} parent=61 // pred_check
              _
            $region75: #{custom-call.44} parent=61 // pred_check_branch
              %611 = sbr.rel (0) target = $region77
            $region76: #{custom-call.44} parent=61 // pred_region
              loop: start=0, step=1, limit=1
              $region78: #{custom-call.44} parent=76 // loop_pre_header
                _
              $region79: #{custom-call.44} parent=76 // loop_header
                %s613 = sphi 0, %s617
                %p614 = scmp.ge.s32.totalorder %s613, 1
                %s618 = sphi %s585, %s585
                %s619 = sphi %s590, %s590
              $region80: #{custom-call.44} parent=76 // loop_header_branch
                %616 = sbr.rel (%p614) target = $region84
              $region81: #{custom-call.44} parent=76 // loop_body
                %v620 = vld [vmem:[%s618] sm:$0xff]
                %621 = vst [vmem:[%s619] sm:$0xff] %v620
                %v622 = vld [vmem:[%s618 + $0x8] sm:$0xff]
                %623 = vst [vmem:[%s619 + $0x8] sm:$0xff] %v622
              $region82: #{custom-call.44} parent=76 // loop_footer
                %s617 = sadd.s32 1, %s613
              $region83: #{custom-call.44} parent=76 // loop_footer_branch
                %612 = sbr.rel target = $region79
              $region84: #{custom-call.44} parent=76 // loop_exit
                _
            $region77: #{custom-call.44} parent=61 // pred_fallthru
              _
            // Predicated region
            $region85: #{custom-call.44} parent=61 // pred_check
              _
            $region86: #{custom-call.44} parent=61 // pred_check_branch
              %625 = sbr.rel target = $region88
            $region87: #{custom-call.44} parent=61 // pred_region
              _
            $region88: #{custom-call.44} parent=61 // pred_fallthru
              _
          $region62: #{custom-call.44} parent=57 // pred_fallthru
            _
          // Predicated region
          $region63: #{custom-call.44} parent=57 // pred_check
            _
          $region64: #{custom-call.44} parent=57 // pred_check_branch
            %596 = sbr.rel target = $region66
          $region65: #{custom-call.44} parent=57 // pred_region
            loop: start=0, step=1, limit=1
            $region67: #{custom-call.44} parent=65 // loop_pre_header
              _
            $region68: #{custom-call.44} parent=65 // loop_header
              %s599 = sphi 0, %s603
              %p600 = scmp.ge.s32.totalorder %s599, 1
              %s604 = sphi %s585, %s585
              %s605 = sphi %s590, %s590
            $region69: #{custom-call.44} parent=65 // loop_header_branch
              %602 = sbr.rel (%p600) target = $region73
            $region70: #{custom-call.44} parent=65 // loop_body
              %v606 = vld [vmem:[%s604] sm:$0xff]
              %607 = vst [vmem:[%s605] sm:$0xff] %v606
              %v608 = vld [vmem:[%s604 + $0x8] sm:$0xff]
              %609 = vst [vmem:[%s605 + $0x8] sm:$0xff] %v608
            $region71: #{custom-call.44} parent=65 // loop_footer
              %s603 = sadd.s32 1, %s599
            $region72: #{custom-call.44} parent=65 // loop_footer_branch
              %598 = sbr.rel target = $region68
            $region73: #{custom-call.44} parent=65 // loop_exit
              _
          $region66: #{custom-call.44} parent=57 // pred_fallthru
            _
        $region58: #{custom-call.44} parent=53 // pred_fallthru
          _
        %626 = vnop
      $region54: #{custom-call.44} parent=5 // pred_fallthru
        _
      %p627 = scmp.le.s32.totalorder 2, %s3
      // Predicated region
      $region89: #{custom-call.44} parent=5 // pred_check
        %p628 = pneg %p627
      $region90: #{custom-call.44} parent=5 // pred_check_branch
        %630 = sbr.rel (%p628) target = $region92
      $region91: #{custom-call.44} parent=5 // pred_region
        %s631 = ssub.s32 %s3, 2
        %s632 = sand.u32 %s9, 1
        %s633 = sand.u32 %s9, 1
        %s634 = smul.addr %s633, 16
        %s635 = scalar_lea.vmem [#allocation1], %s634
      $region92: #{custom-call.44} parent=5 // pred_fallthru
        _
    $region6: #{custom-call.44} parent=1 // loop_footer
      %s7 = sadd.s32 1, %s3
    $region7: #{custom-call.44} parent=1 // loop_footer_branch
      %2 = sbr.rel target = $region3
    $region8: #{custom-call.44} parent=1 // loop_exit
      _

// kernel: custom-call.45
$region0: #{custom-call.45}
  %s0 = inlined_call_operand.vmem [shape: f32[2,1,16,16], index: 0, kind: input, shape index: {}]
  %s1 = inlined_call_operand.vmem [shape: f32[2,1,16,16], index: 1, kind: output, shape index: {}]
  $region1: #{custom-call.45} parent=0
    #allocation0 [shape = 'u8[16384]{0}', space=vmem, size = 0x4000, scoped, tag = 'operand span for operand 0']
    #allocation1 [shape = 'u8[16384]{0}', space=vmem, size = 0x4000, scoped, tag = 'operand span for operand 1']
    loop: start=0, step=1, limit=4
    $region2: #{custom-call.45} parent=1 // loop_pre_header
      _
    $region3: #{custom-call.45} parent=1 // loop_header
      %s3 = sphi 0, %s7
      %p4 = scmp.ge.s32.totalorder %s3, 4
      %s10 = sphi 0, %s36
      %s11 = sphi 0, %s32
      %s12 = sphi 0, %s28
      %s13 = sphi 0, %s24
      %s14 = sphi 0, %s10
      %s15 = sphi 0, %s11
      %s16 = sphi 0, %s12
      %s17 = sphi 0, %s13
      %s18 = sphi 0, %s14
      %s19 = sphi 0, %s15
      %s20 = sphi 0, %s16
      %s21 = sphi 0, %s17
    $region4: #{custom-call.45} parent=1 // loop_header_branch
      %6 = sbr.rel (%p4) target = $region8
    $region5: #{custom-call.45} parent=1 // loop_body
      %s8 = ssub.s32 %s3, 1
      %s9 = ssub.s32 %s3, 2
      %s22 = sadd.s32 1, %s13
      %p23 = scmp.ge.s32.totalorder %s22, 1
      %s24 = scalar_select %p23, 0, %s22
      %s25 = sadd.s32 1, %s12
      %s26 = scalar_select %p23, %s25, %s12
      %p27 = scmp.ge.s32.totalorder %s26, 1
      %s28 = scalar_select %p27, 0, %s26
      %s29 = sadd.s32 1, %s11
      %s30 = scalar_select %p27, %s29, %s11
      %p31 = scmp.ge.s32.totalorder %s30, 1
      %s32 = scalar_select %p31, 0, %s30
      %s33 = sadd.s32 1, %s10
      %s34 = scalar_select %p31, %s33, %s10
      %p35 = scmp.ge.s32.totalorder %s34, 2
      %s36 = scalar_select %p35, 0, %s34
      %p37 = scmp.le.s32.totalorder 1, %s3
      %p38 = scmp.lt.s32.totalorder %s3, 3
      %p39 = pnand %p37, %p38
      %p40 = pneg %p39
      // Predicated region
      $region9: #{custom-call.45} parent=5 // pred_check
        _
      $region10: #{custom-call.45} parent=5 // pred_check_branch
        %42 = sbr.rel (%p39) target = $region12
      $region11: #{custom-call.45} parent=5 // pred_region
        %s43 = ssub.s32 %s3, 1
      $region12: #{custom-call.45} parent=5 // pred_fallthru
        _
      %p44 = scmp.lt.s32.totalorder %s3, 2
      // Predicated region
      $region13: #{custom-call.45} parent=5 // pred_check
        %p45 = pneg %p44
      $region14: #{custom-call.45} parent=5 // pred_check_branch
        %47 = sbr.rel (%p45) target = $region16
      $region15: #{custom-call.45} parent=5 // pred_region
        %s48 = sand.u32 %s3, 1
        %s49 = sand.u32 %s3, 1
        %s50 = smul.addr %s49, 16
        %s51 = scalar_lea.vmem [#allocation0], %s50
        %s52 = sadd.s32 %s13, %s12
        %s53 = smul.addr %s11, 2
        %s54 = sadd.s32 %s52, %s53
        %s55 = smul.addr %s10, 2
        %s56 = sadd.s32 %s54, %s55
        %s57 = smul.addr %s56, 8
        %s58 = scalar_lea.vmem %s0, %s57
        // Predicated region
        $region17: #{custom-call.45} parent=15 // pred_check
          _
        $region18: #{custom-call.45} parent=15 // pred_check_branch
          %60 = sbr.rel (0) target = $region20
        $region19: #{custom-call.45} parent=15 // pred_region
          // Predicated region
          $region21: #{custom-call.45} parent=19 // pred_check
            _
          $region22: #{custom-call.45} parent=19 // pred_check_branch
            %62 = sbr.rel (0) target = $region24
          $region23: #{custom-call.45} parent=19 // pred_region
            // Predicated region
            $region36: #{custom-call.45} parent=23 // pred_check
              _
            $region37: #{custom-call.45} parent=23 // pred_check_branch
              %79 = sbr.rel (0) target = $region39
            $region38: #{custom-call.45} parent=23 // pred_region
              loop: start=0, step=1, limit=1
              $region40: #{custom-call.45} parent=38 // loop_pre_header
                _
              $region41: #{custom-call.45} parent=38 // loop_header
                %s81 = sphi 0, %s85
                %p82 = scmp.ge.s32.totalorder %s81, 1
                %s86 = sphi %s58, %s58
                %s87 = sphi %s51, %s51
              $region42: #{custom-call.45} parent=38 // loop_header_branch
                %84 = sbr.rel (%p82) target = $region46
              $region43: #{custom-call.45} parent=38 // loop_body
                %v88 = vld [vmem:[%s86] sm:$0xff]
                %89 = vst [vmem:[%s87] sm:$0xff] %v88
                %v90 = vld [vmem:[%s86 + $0x8] sm:$0xff]
                %91 = vst [vmem:[%s87 + $0x8] sm:$0xff] %v90
              $region44: #{custom-call.45} parent=38 // loop_footer
                %s85 = sadd.s32 1, %s81
              $region45: #{custom-call.45} parent=38 // loop_footer_branch
                %80 = sbr.rel target = $region41
              $region46: #{custom-call.45} parent=38 // loop_exit
                _
            $region39: #{custom-call.45} parent=23 // pred_fallthru
              _
            // Predicated region
            $region47: #{custom-call.45} parent=23 // pred_check
              _
            $region48: #{custom-call.45} parent=23 // pred_check_branch
              %93 = sbr.rel target = $region50
            $region49: #{custom-call.45} parent=23 // pred_region
              _
            $region50: #{custom-call.45} parent=23 // pred_fallthru
              _
          $region24: #{custom-call.45} parent=19 // pred_fallthru
            _
          // Predicated region
          $region25: #{custom-call.45} parent=19 // pred_check
            _
          $region26: #{custom-call.45} parent=19 // pred_check_branch
            %64 = sbr.rel target = $region28
          $region27: #{custom-call.45} parent=19 // pred_region
            loop: start=0, step=1, limit=1
            $region29: #{custom-call.45} parent=27 // loop_pre_header
              _
            $region30: #{custom-call.45} parent=27 // loop_header
              %s67 = sphi 0, %s71
              %p68 = scmp.ge.s32.totalorder %s67, 1
              %s72 = sphi %s58, %s58
              %s73 = sphi %s51, %s51
            $region31: #{custom-call.45} parent=27 // loop_header_branch
              %70 = sbr.rel (%p68) target = $region35
            $region32: #{custom-call.45} parent=27 // loop_body
              %v74 = vld [vmem:[%s72] sm:$0xff]
              %75 = vst [vmem:[%s73] sm:$0xff] %v74
              %v76 = vld [vmem:[%s72 + $0x8] sm:$0xff]
              %77 = vst [vmem:[%s73 + $0x8] sm:$0xff] %v76
            $region33: #{custom-call.45} parent=27 // loop_footer
              %s71 = sadd.s32 1, %s67
            $region34: #{custom-call.45} parent=27 // loop_footer_branch
              %66 = sbr.rel target = $region30
            $region35: #{custom-call.45} parent=27 // loop_exit
              _
          $region28: #{custom-call.45} parent=19 // pred_fallthru
            _
        $region20: #{custom-call.45} parent=15 // pred_fallthru
          _
        %94 = vnop
      $region16: #{custom-call.45} parent=5 // pred_fallthru
        _
      %p95 = scmp.le.s32.totalorder 1, %s3
      %p96 = scmp.lt.s32.totalorder %s3, 3
      %p97 = pnand %p95, %p96
      %p98 = pneg %p97
      // Predicated region
      $region51: #{custom-call.45} parent=5 // pred_check
        _
      $region52: #{custom-call.45} parent=5 // pred_check_branch
        %100 = sbr.rel (%p97) target = $region54
      $region53: #{custom-call.45} parent=5 // pred_region
        #allocation2 [shape = 'f32[16,16]{1,0}', space=vmem, size = 0x2000, scoped, tag = 'rescaled input a']
        %s101 = ssub.s32 %s3, 1
        %s102 = sand.u32 %s8, 1
        %s103 = sand.u32 %s8, 1
        %s104 = smul.addr %s103, 16
        %s105 = scalar_lea.vmem [#allocation0], %s104
        %s106 = sand.u32 %s8, 1
        %s107 = sand.u32 %s8, 1
        %s108 = smul.addr %s107, 16
        %s109 = scalar_lea.vmem [#allocation0], %s108
        %s110 = sand.u32 %s8, 1
        %s111 = sand.u32 %s8, 1
        %s112 = smul.addr %s111, 16
        %s113 = scalar_lea.vmem [#allocation1], %s112
        %v114 = vlaneseq
        %v115 = vand.u32 %v114, 127
        %vm116 = vcmp.lt.s32.totalorder %v115, 16
        %v117 = vlaneseq
        %v118 = vshrl.u32 %v117, 7
        %vm120 = vcmp.eq.s32.totalorder %v118, %v115
        %v121 = vld [vmem:[%s105] sm:$0xff]
        %v122 = vsel %vm120, %v121, 0.0
        %123 = vadd.xlane.f32.xlu0 %v122
        %v124 = vpop.xlane.xlu0 %123
        %vm125 = vcmp.ge.s32.totalorder %v118, %v115
        %vm126 = vmand %vm125, %vm116
        %v127 = vsel %vm126, %v121, 0.0
        %v128 = vrcp.pop %v124
        %v129 = vmul.f32 %v127, %v128
        %130 = vst [vmem:[#allocation2] sm:$0xff] %v129
        %s131 = scalar_lea.vmem %s105, 8 [#allocation0]
        %s132 = scalar_lea.vmem [#allocation2], 8
        %v133 = vlaneseq
        %v134 = vshrl.u32 %v133, 7
        %v135 = vadd.s32 %v134, 8
        %vm136 = vcmp.eq.s32.totalorder %v135, %v115
        %v137 = vld [vmem:[%s131] sm:$0xff]
        %v138 = vsel %vm136, %v137, 0.0
        %139 = vadd.xlane.f32.xlu0 %v138
        %v140 = vpop.xlane.xlu0 %139
        %vm141 = vcmp.ge.s32.totalorder %v135, %v115
        %vm142 = vmand %vm141, %vm116
        %v143 = vsel %vm142, %v137, 0.0
        %v144 = vrcp.pop %v140
        %v145 = vmul.f32 %v143, %v144
        %146 = vst [vmem:[%s132] sm:$0xff] %v145
        %v147 = vlaneseq
        %v148 = vand.u32 %v147, 127
        %v149 = vlaneseq
        %v150 = vshrl.u32 %v149, 7
        %vm152 = vcmp.eq.s32.totalorder %v148, %v150
        %v153 = vlaneseq
        %v154 = vand.u32 %v153, 127
        %vm155 = vcmp.eq.s32.totalorder %v154, 0
        %v156 = vsel %vm155, 1.0, -1.0
        %v157 = vsel %vm152, %v156, 0.0
        %v158 = vlaneseq
        %v159 = vand.u32 %v158, 127
        %v160 = vlaneseq
        %v161 = vshrl.u32 %v160, 7
        %v162 = vadd.s32 %v161, 8
        %vm163 = vcmp.eq.s32.totalorder %v159, %v162
        %v164 = vsel %vm163, -1.0, 0.0
        %s165 = scalar_lea.vmem [#allocation2], 1
        %v166 = vld [vmem:[%s165] ss:$0 sm:$0xff]
        %v167 = vxor.u32 %v166, 2147483648
        %v168 = vlaneseq
        %v169 = vand.u32 %v168, 127
        %vm170 = vcmp.eq.s32.totalorder %v169, 1
        %v171 = vmul.f32 %v167, %v157
        %172 = vadd.xlane.f32.xlu0 %v171
        %v173 = vpop.xlane.xlu0 %172
        %v174 = vsel %vm170, %v173, %v157
        %s175 = scalar_lea.vmem [#allocation2], 2
        %v176 = vld [vmem:[%s175] ss:$0 sm:$0xff]
        %v177 = vxor.u32 %v176, 2147483648
        %v178 = vlaneseq
        %v179 = vand.u32 %v178, 127
        %vm180 = vcmp.eq.s32.totalorder %v179, 2
        %v181 = vmul.f32 %v177, %v174
        %182 = vadd.xlane.f32.xlu0 %v181
        %v183 = vpop.xlane.xlu0 %182
        %v184 = vsel %vm180, %v183, %v174
        %s185 = scalar_lea.vmem [#allocation2], 3
        %v186 = vld [vmem:[%s185] ss:$0 sm:$0xff]
        %v187 = vxor.u32 %v186, 2147483648
        %v188 = vlaneseq
        %v189 = vand.u32 %v188, 127
        %vm190 = vcmp.eq.s32.totalorder %v189, 3
        %v191 = vmul.f32 %v187, %v184
        %192 = vadd.xlane.f32.xlu0 %v191
        %v193 = vpop.xlane.xlu0 %192
        %v194 = vsel %vm190, %v193, %v184
        %s195 = scalar_lea.vmem [#allocation2], 4
        %v196 = vld [vmem:[%s195] ss:$0 sm:$0xff]
        %v197 = vxor.u32 %v196, 2147483648
        %v198 = vlaneseq
        %v199 = vand.u32 %v198, 127
        %vm200 = vcmp.eq.s32.totalorder %v199, 4
        %v201 = vmul.f32 %v197, %v194
        %202 = vadd.xlane.f32.xlu0 %v201
        %v203 = vpop.xlane.xlu0 %202
        %v204 = vsel %vm200, %v203, %v194
        %s205 = scalar_lea.vmem [#allocation2], 5
        %v206 = vld [vmem:[%s205] ss:$0 sm:$0xff]
        %v207 = vxor.u32 %v206, 2147483648
        %v208 = vlaneseq
        %v209 = vand.u32 %v208, 127
        %vm210 = vcmp.eq.s32.totalorder %v209, 5
        %v211 = vmul.f32 %v207, %v204
        %212 = vadd.xlane.f32.xlu0 %v211
        %v213 = vpop.xlane.xlu0 %212
        %v214 = vsel %vm210, %v213, %v204
        %s215 = scalar_lea.vmem [#allocation2], 6
        %v216 = vld [vmem:[%s215] ss:$0 sm:$0xff]
        %v217 = vxor.u32 %v216, 2147483648
        %v218 = vlaneseq
        %v219 = vand.u32 %v218, 127
        %vm220 = vcmp.eq.s32.totalorder %v219, 6
        %v221 = vmul.f32 %v217, %v214
        %222 = vadd.xlane.f32.xlu0 %v221
        %v223 = vpop.xlane.xlu0 %222
        %v224 = vsel %vm220, %v223, %v214
        %s225 = scalar_lea.vmem [#allocation2], 7
        %v226 = vld [vmem:[%s225] ss:$0 sm:$0xff]
        %v227 = vxor.u32 %v226, 2147483648
        %v228 = vlaneseq
        %v229 = vand.u32 %v228, 127
        %vm230 = vcmp.eq.s32.totalorder %v229, 7
        %v231 = vmul.f32 %v227, %v224
        %232 = vadd.xlane.f32.xlu0 %v231
        %v233 = vpop.xlane.xlu0 %232
        %v234 = vsel %vm230, %v233, %v224
        %s235 = scalar_lea.vmem [#allocation2], 8
        %v236 = vld [vmem:[%s235] ss:$0 sm:$0xff]
        %v237 = vxor.u32 %v236, 2147483648
        %v238 = vlaneseq
        %v239 = vand.u32 %v238, 127
        %vm240 = vcmp.eq.s32.totalorder %v239, 8
        %v241 = vmul.f32 %v237, %v234
        %242 = vadd.xlane.f32.xlu0 %v241
        %v243 = vpop.xlane.xlu0 %242
        %v244 = vsel %vm240, %v243, %v234
        %v245 = vmul.f32 %v237, %v164
        %246 = vadd.xlane.f32.xlu0 %v245
        %v247 = vpop.xlane.xlu0 %246
        %v248 = vsel %vm240, %v247, %v164
        %s249 = scalar_lea.vmem [#allocation2], 9
        %v250 = vld [vmem:[%s249] ss:$0 sm:$0xff]
        %v251 = vxor.u32 %v250, 2147483648
        %v252 = vlaneseq
        %v253 = vand.u32 %v252, 127
        %vm254 = vcmp.eq.s32.totalorder %v253, 9
        %v255 = vmul.f32 %v251, %v244
        %256 = vadd.xlane.f32.xlu0 %v255
        %v257 = vpop.xlane.xlu0 %256
        %v258 = vsel %vm254, %v257, %v244
        %v259 = vmul.f32 %v251, %v248
        %260 = vadd.xlane.f32.xlu0 %v259
        %v261 = vpop.xlane.xlu0 %260
        %v262 = vsel %vm254, %v261, %v248
        %s263 = scalar_lea.vmem [#allocation2], 10
        %v264 = vld [vmem:[%s263] ss:$0 sm:$0xff]
        %v265 = vxor.u32 %v264, 2147483648
        %v266 = vlaneseq
        %v267 = vand.u32 %v266, 127
        %vm268 = vcmp.eq.s32.totalorder %v267, 10
        %v269 = vmul.f32 %v265, %v258
        %270 = vadd.xlane.f32.xlu0 %v269
        %v271 = vpop.xlane.xlu0 %270
        %v272 = vsel %vm268, %v271, %v258
        %v273 = vmul.f32 %v265, %v262
        %274 = vadd.xlane.f32.xlu0 %v273
        %v275 = vpop.xlane.xlu0 %274
        %v276 = vsel %vm268, %v275, %v262
        %s277 = scalar_lea.vmem [#allocation2], 11
        %v278 = vld [vmem:[%s277] ss:$0 sm:$0xff]
        %v279 = vxor.u32 %v278, 2147483648
        %v280 = vlaneseq
        %v281 = vand.u32 %v280, 127
        %vm282 = vcmp.eq.s32.totalorder %v281, 11
        %v283 = vmul.f32 %v279, %v272
        %284 = vadd.xlane.f32.xlu0 %v283
        %v285 = vpop.xlane.xlu0 %284
        %v286 = vsel %vm282, %v285, %v272
        %v287 = vmul.f32 %v279, %v276
        %288 = vadd.xlane.f32.xlu0 %v287
        %v289 = vpop.xlane.xlu0 %288
        %v290 = vsel %vm282, %v289, %v276
        %s291 = scalar_lea.vmem [#allocation2], 12
        %v292 = vld [vmem:[%s291] ss:$0 sm:$0xff]
        %v293 = vxor.u32 %v292, 2147483648
        %v294 = vlaneseq
        %v295 = vand.u32 %v294, 127
        %vm296 = vcmp.eq.s32.totalorder %v295, 12
        %v297 = vmul.f32 %v293, %v286
        %298 = vadd.xlane.f32.xlu0 %v297
        %v299 = vpop.xlane.xlu0 %298
        %v300 = vsel %vm296, %v299, %v286
        %v301 = vmul.f32 %v293, %v290
        %302 = vadd.xlane.f32.xlu0 %v301
        %v303 = vpop.xlane.xlu0 %302
        %v304 = vsel %vm296, %v303, %v290
        %s305 = scalar_lea.vmem [#allocation2], 13
        %v306 = vld [vmem:[%s305] ss:$0 sm:$0xff]
        %v307 = vxor.u32 %v306, 2147483648
        %v308 = vlaneseq
        %v309 = vand.u32 %v308, 127
        %vm310 = vcmp.eq.s32.totalorder %v309, 13
        %v311 = vmul.f32 %v307, %v300
        %312 = vadd.xlane.f32.xlu0 %v311
        %v313 = vpop.xlane.xlu0 %312
        %v314 = vsel %vm310, %v313, %v300
        %v315 = vmul.f32 %v307, %v304
        %316 = vadd.xlane.f32.xlu0 %v315
        %v317 = vpop.xlane.xlu0 %316
        %v318 = vsel %vm310, %v317, %v304
        %s319 = scalar_lea.vmem [#allocation2], 14
        %v320 = vld [vmem:[%s319] ss:$0 sm:$0xff]
        %v321 = vxor.u32 %v320, 2147483648
        %v322 = vlaneseq
        %v323 = vand.u32 %v322, 127
        %vm324 = vcmp.eq.s32.totalorder %v323, 14
        %v325 = vmul.f32 %v321, %v314
        %326 = vadd.xlane.f32.xlu0 %v325
        %v327 = vpop.xlane.xlu0 %326
        %v328 = vsel %vm324, %v327, %v314
        %v329 = vmul.f32 %v321, %v318
        %330 = vadd.xlane.f32.xlu0 %v329
        %v331 = vpop.xlane.xlu0 %330
        %v332 = vsel %vm324, %v331, %v318
        %s333 = scalar_lea.vmem [#allocation2], 15
        %v334 = vld [vmem:[%s333] ss:$0 sm:$0xff]
        %v335 = vxor.u32 %v334, 2147483648
        %v336 = vlaneseq
        %v337 = vand.u32 %v336, 127
        %vm338 = vcmp.eq.s32.totalorder %v337, 15
        %v339 = vmul.f32 %v335, %v328
        %340 = vadd.xlane.f32.xlu0 %v339
        %v341 = vpop.xlane.xlu0 %340
        %v342 = vsel %vm338, %v341, %v328
        %v343 = vmul.f32 %v335, %v332
        %344 = vadd.xlane.f32.xlu0 %v343
        %v345 = vpop.xlane.xlu0 %344
        %v346 = vsel %vm338, %v345, %v332
        %v347 = vrcp.pop %v124
        %v348 = vmul.f32 %v342, %v347
        %vm349 = vweird.f32 %v124
        %v350 = vsel %vm349, %v342, %v348
        %351 = vst [vmem:[%s113] sm:$0xff] %v350
        %v352 = vrcp.pop %v140
        %v353 = vmul.f32 %v346, %v352
        %vm354 = vweird.f32 %v140
        %v355 = vsel %vm354, %v346, %v353
        %s356 = scalar_lea.vmem %s113, 8 [#allocation1]
        %357 = vst [vmem:[%s356] sm:$0xff] %v355
        %s358 = sand.u32 %s8, 1
        %s359 = sand.u32 %s8, 1
        %s360 = smul.addr %s359, 16
        %s361 = scalar_lea.vmem [#allocation1], %s360
        %s362 = sadd.s32 %s17, %s16
        %s363 = smul.addr %s15, 2
        %s364 = sadd.s32 %s362, %s363
        %s365 = smul.addr %s14, 2
        %s366 = sadd.s32 %s364, %s365
        %s367 = smul.addr %s366, 8
        %s368 = scalar_lea.vmem %s1, %s367
        // Predicated region
        $region55: #{custom-call.45} parent=53 // pred_check
          _
        $region56: #{custom-call.45} parent=53 // pred_check_branch
          %370 = sbr.rel (0) target = $region58
        $region57: #{custom-call.45} parent=53 // pred_region
          // Predicated region
          $region59: #{custom-call.45} parent=57 // pred_check
            _
          $region60: #{custom-call.45} parent=57 // pred_check_branch
            %372 = sbr.rel (0) target = $region62
          $region61: #{custom-call.45} parent=57 // pred_region
            // Predicated region
            $region74: #{custom-call.45} parent=61 // pred_check
              _
            $region75: #{custom-call.45} parent=61 // pred_check_branch
              %389 = sbr.rel (0) target = $region77
            $region76: #{custom-call.45} parent=61 // pred_region
              loop: start=0, step=1, limit=1
              $region78: #{custom-call.45} parent=76 // loop_pre_header
                _
              $region79: #{custom-call.45} parent=76 // loop_header
                %s391 = sphi 0, %s395
                %p392 = scmp.ge.s32.totalorder %s391, 1
                %s396 = sphi %s361, %s361
                %s397 = sphi %s368, %s368
              $region80: #{custom-call.45} parent=76 // loop_header_branch
                %394 = sbr.rel (%p392) target = $region84
              $region81: #{custom-call.45} parent=76 // loop_body
                %v398 = vld [vmem:[%s396] sm:$0xff]
                %399 = vst [vmem:[%s397] sm:$0xff] %v398
                %v400 = vld [vmem:[%s396 + $0x8] sm:$0xff]
                %401 = vst [vmem:[%s397 + $0x8] sm:$0xff] %v400
              $region82: #{custom-call.45} parent=76 // loop_footer
                %s395 = sadd.s32 1, %s391
              $region83: #{custom-call.45} parent=76 // loop_footer_branch
                %390 = sbr.rel target = $region79
              $region84: #{custom-call.45} parent=76 // loop_exit
                _
            $region77: #{custom-call.45} parent=61 // pred_fallthru
              _
            // Predicated region
            $region85: #{custom-call.45} parent=61 // pred_check
              _
            $region86: #{custom-call.45} parent=61 // pred_check_branch
              %403 = sbr.rel target = $region88
            $region87: #{custom-call.45} parent=61 // pred_region
              _
            $region88: #{custom-call.45} parent=61 // pred_fallthru
              _
          $region62: #{custom-call.45} parent=57 // pred_fallthru
            _
          // Predicated region
          $region63: #{custom-call.45} parent=57 // pred_check
            _
          $region64: #{custom-call.45} parent=57 // pred_check_branch
            %374 = sbr.rel target = $region66
          $region65: #{custom-call.45} parent=57 // pred_region
            loop: start=0, step=1, limit=1
            $region67: #{custom-call.45} parent=65 // loop_pre_header
              _
            $region68: #{custom-call.45} parent=65 // loop_header
              %s377 = sphi 0, %s381
              %p378 = scmp.ge.s32.totalorder %s377, 1
              %s382 = sphi %s361, %s361
              %s383 = sphi %s368, %s368
            $region69: #{custom-call.45} parent=65 // loop_header_branch
              %380 = sbr.rel (%p378) target = $region73
            $region70: #{custom-call.45} parent=65 // loop_body
              %v384 = vld [vmem:[%s382] sm:$0xff]
              %385 = vst [vmem:[%s383] sm:$0xff] %v384
              %v386 = vld [vmem:[%s382 + $0x8] sm:$0xff]
              %387 = vst [vmem:[%s383 + $0x8] sm:$0xff] %v386
            $region71: #{custom-call.45} parent=65 // loop_footer
              %s381 = sadd.s32 1, %s377
            $region72: #{custom-call.45} parent=65 // loop_footer_branch
              %376 = sbr.rel target = $region68
            $region73: #{custom-call.45} parent=65 // loop_exit
              _
          $region66: #{custom-call.45} parent=57 // pred_fallthru
            _
        $region58: #{custom-call.45} parent=53 // pred_fallthru
          _
        %404 = vnop
      $region54: #{custom-call.45} parent=5 // pred_fallthru
        _
      %p405 = scmp.le.s32.totalorder 2, %s3
      // Predicated region
      $region89: #{custom-call.45} parent=5 // pred_check
        %p406 = pneg %p405
      $region90: #{custom-call.45} parent=5 // pred_check_branch
        %408 = sbr.rel (%p406) target = $region92
      $region91: #{custom-call.45} parent=5 // pred_region
        %s409 = ssub.s32 %s3, 2
        %s410 = sand.u32 %s9, 1
        %s411 = sand.u32 %s9, 1
        %s412 = smul.addr %s411, 16
        %s413 = scalar_lea.vmem [#allocation1], %s412
      $region92: #{custom-call.45} parent=5 // pred_fallthru
        _
    $region6: #{custom-call.45} parent=1 // loop_footer
      %s7 = sadd.s32 1, %s3
    $region7: #{custom-call.45} parent=1 // loop_footer_branch
      %2 = sbr.rel target = $region3
    $region8: #{custom-call.45} parent=1 // loop_exit
      _

// kernel: custom-call.17
$region0: #{custom-call.17}
  %s0 = inlined_call_operand.vmem [shape: f32[2,8,8], index: 0, kind: input, shape index: {}]
  %s1 = inlined_call_operand.vmem [shape: f32[2,8,8], index: 1, kind: input, shape index: {}]
  %s2 = inlined_call_operand.vmem [shape: f32[2,8,8], index: 2, kind: input, shape index: {}]
  %s3 = inlined_call_operand.vmem [shape: f32[2,8,8], index: 3, kind: input, shape index: {}]
  %s4 = inlined_call_operand.vmem [shape: f32[2,8], index: 4, kind: output, shape index: {0}]
  %s5 = inlined_call_operand.vmem [shape: f32[2,8], index: 5, kind: output, shape index: {1}]
  %s6 = inlined_call_operand.vmem [shape: f32[2,8,8], index: 6, kind: output, shape index: {2}]
  %s7 = inlined_call_operand.vmem [shape: f32[2,8,8], index: 7, kind: output, shape index: {3}]
  %s8 = inlined_call_operand.vmem [shape: f32[2,8,8], index: 8, kind: output, shape index: {4}]
  %s9 = inlined_call_operand.vmem [shape: f32[2,8,8], index: 9, kind: output, shape index: {5}]
  %10 = xla_tuple %s4, %s5, %s6, %s7, %s8, %s9
  $region1: #{custom-call.17} parent=0
    #allocation0 [shape = 'u8[8192]{0}', space=vmem, size = 0x2000, scoped, tag = 'operand span for operand 0']
    #allocation1 [shape = 'u8[8192]{0}', space=vmem, size = 0x2000, scoped, tag = 'operand span for operand 1']
    #allocation2 [shape = 'u8[8192]{0}', space=vmem, size = 0x2000, scoped, tag = 'operand span for operand 2']
    #allocation3 [shape = 'u8[8192]{0}', space=vmem, size = 0x2000, scoped, tag = 'operand span for operand 3']
    #allocation4 [shape = 'u8[4096]{0}', space=vmem, size = 0x1000, scoped, tag = 'operand span for operand 4']
    #allocation5 [shape = 'u8[2048]{0}', space=vmem, size = 0x800, scoped, tag = 'packed  for operand 4']
    #allocation6 [shape = 'u8[4096]{0}', space=vmem, size = 0x1000, scoped, tag = 'operand span for operand 5']
    #allocation7 [shape = 'u8[2048]{0}', space=vmem, size = 0x800, scoped, tag = 'packed  for operand 5']
    #allocation8 [shape = 'u8[8192]{0}', space=vmem, size = 0x2000, scoped, tag = 'operand span for operand 6']
    #allocation9 [shape = 'u8[8192]{0}', space=vmem, size = 0x2000, scoped, tag = 'operand span for operand 7']
    #allocation10 [shape = 'u8[8192]{0}', space=vmem, size = 0x2000, scoped, tag = 'operand span for operand 8']
    #allocation11 [shape = 'u8[8192]{0}', space=vmem, size = 0x2000, scoped, tag = 'operand span for operand 9']
    loop: start=0, step=1, limit=4
    $region2: #{custom-call.17} parent=1 // loop_pre_header
      _
    $region3: #{custom-call.17} parent=1 // loop_header
      %s12 = sphi 0, %s16
      %p13 = scmp.ge.s32.totalorder %s12, 4
      %s24 = sphi 0, %s26
      %s27 = sphi 0, %s24
      %s28 = sphi 0, %s27
      %s44 = sphi 0, %s28
      %s52 = sphi 0, %s54
      %s55 = sphi 0, %s52
      %s56 = sphi 0, %s55
      %s72 = sphi 0, %s56
    $region4: #{custom-call.17} parent=1 // loop_header_branch
      %15 = sbr.rel (%p13) target = $region8
    $region5: #{custom-call.17} parent=1 // loop_body
      %s17 = ssub.s32 %s12, 1
      %s18 = ssub.s32 %s12, 2
      %s19 = sadd.s32 %s12, 1
      %s20 = sshrl.u32 %s12, 3
      %s21 = sshrl.u32 %s19, 3
      %s22 = ssub.s32 %s20, %s21
      %p23 = scmp.eq.s32.totalorder %s22, 0
      %s25 = sadd.s32 %s24, 1
      %s26 = scalar_select %p23, %s24, %s25
      %p29 = pneg %p23
      %p30 = scmp.eq.s32.totalorder %s12, 1
      %p31 = por %p29, %p30
      %p32 = scmp.ne.s32.totalorder %s24, %s27
      %p33 = scmp.eq.s32.totalorder %s12, 0
      %p34 = por %p32, %p33
      %p35 = scmp.ne.s32.totalorder %s24, %s27
      %p36 = scmp.eq.s32.totalorder %s17, 1
      %p37 = por %p35, %p36
      %p38 = scmp.ne.s32.totalorder %s27, %s28
      %p39 = scmp.eq.s32.totalorder %s17, 0
      %p40 = por %p38, %p39
      %p41 = scmp.ne.s32.totalorder %s27, %s28
      %p42 = scmp.eq.s32.totalorder %s18, 1
      %p43 = por %p41, %p42
      %p45 = scmp.ne.s32.totalorder %s28, %s44
      %p46 = scmp.eq.s32.totalorder %s18, 0
      %p47 = por %p45, %p46
      %s48 = sshrl.u32 %s12, 3
      %s49 = sshrl.u32 %s19, 3
      %s50 = ssub.s32 %s48, %s49
      %p51 = scmp.eq.s32.totalorder %s50, 0
      %s53 = sadd.s32 %s52, 1
      %s54 = scalar_select %p51, %s52, %s53
      %p57 = pneg %p51
      %p58 = scmp.eq.s32.totalorder %s12, 1
      %p59 = por %p57, %p58
      %p60 = scmp.ne.s32.totalorder %s52, %s55
      %p61 = scmp.eq.s32.totalorder %s12, 0
      %p62 = por %p60, %p61
      %p63 = scmp.ne.s32.totalorder %s52, %s55
      %p64 = scmp.eq.s32.totalorder %s17, 1
      %p65 = por %p63, %p64
      %p66 = scmp.ne.s32.totalorder %s55, %s56
      %p67 = scmp.eq.s32.totalorder %s17, 0
      %p68 = por %p66, %p67
      %p69 = scmp.ne.s32.totalorder %s55, %s56
      %p70 = scmp.eq.s32.totalorder %s18, 1
      %p71 = por %p69, %p70
      %p73 = scmp.ne.s32.totalorder %s56, %s72
      %p74 = scmp.eq.s32.totalorder %s18, 0
      %p75 = por %p73, %p74
      %p76 = scmp.le.s32.totalorder 1, %s12
      %p77 = scmp.lt.s32.totalorder %s12, 3
      %p78 = pnand %p76, %p77
      %p79 = pneg %p78
      // Predicated region
      $region9: #{custom-call.17} parent=5 // pred_check
        _
      $region10: #{custom-call.17} parent=5 // pred_check_branch
        %81 = sbr.rel (%p78) target = $region12
      $region11: #{custom-call.17} parent=5 // pred_region
        %s82 = ssub.s32 %s12, 1
      $region12: #{custom-call.17} parent=5 // pred_fallthru
        _
      %p83 = scmp.lt.s32.totalorder %s12, 2
      // Predicated region
      $region13: #{custom-call.17} parent=5 // pred_check
        %p84 = pneg %p83
      $region14: #{custom-call.17} parent=5 // pred_check_branch
        %86 = sbr.rel (%p84) target = $region16
      $region15: #{custom-call.17} parent=5 // pred_region
        %s87 = sand.u32 %s12, 1
        %s88 = sand.u32 %s12, 1
        %s89 = smul.addr %s88, 8
        %s90 = scalar_lea.vmem [#allocation0], %s89
        %s91 = smul.addr %s12, 8
        %s92 = scalar_lea.vmem %s0, %s91
        // Predicated region
        $region17: #{custom-call.17} parent=15 // pred_check
          _
        $region18: #{custom-call.17} parent=15 // pred_check_branch
          %94 = sbr.rel (0) target = $region20
        $region19: #{custom-call.17} parent=15 // pred_region
          // Predicated region
          $region21: #{custom-call.17} parent=19 // pred_check
            _
          $region22: #{custom-call.17} parent=19 // pred_check_branch
            %96 = sbr.rel (0) target = $region24
          $region23: #{custom-call.17} parent=19 // pred_region
            // Predicated region
            $region36: #{custom-call.17} parent=23 // pred_check
              _
            $region37: #{custom-call.17} parent=23 // pred_check_branch
              %111 = sbr.rel (0) target = $region39
            $region38: #{custom-call.17} parent=23 // pred_region
              loop: start=0, step=1, limit=1
              $region40: #{custom-call.17} parent=38 // loop_pre_header
                _
              $region41: #{custom-call.17} parent=38 // loop_header
                %s113 = sphi 0, %s117
                %p114 = scmp.ge.s32.totalorder %s113, 1
                %s118 = sphi %s92, %s92
                %s119 = sphi %s90, %s90
              $region42: #{custom-call.17} parent=38 // loop_header_branch
                %116 = sbr.rel (%p114) target = $region46
              $region43: #{custom-call.17} parent=38 // loop_body
                %v120 = vld [vmem:[%s118] sm:$0xff]
                %121 = vst [vmem:[%s119] sm:$0xff] %v120
              $region44: #{custom-call.17} parent=38 // loop_footer
                %s117 = sadd.s32 1, %s113
              $region45: #{custom-call.17} parent=38 // loop_footer_branch
                %112 = sbr.rel target = $region41
              $region46: #{custom-call.17} parent=38 // loop_exit
                _
            $region39: #{custom-call.17} parent=23 // pred_fallthru
              _
            // Predicated region
            $region47: #{custom-call.17} parent=23 // pred_check
              _
            $region48: #{custom-call.17} parent=23 // pred_check_branch
              %123 = sbr.rel target = $region50
            $region49: #{custom-call.17} parent=23 // pred_region
              _
            $region50: #{custom-call.17} parent=23 // pred_fallthru
              _
          $region24: #{custom-call.17} parent=19 // pred_fallthru
            _
          // Predicated region
          $region25: #{custom-call.17} parent=19 // pred_check
            _
          $region26: #{custom-call.17} parent=19 // pred_check_branch
            %98 = sbr.rel target = $region28
          $region27: #{custom-call.17} parent=19 // pred_region
            loop: start=0, step=1, limit=1
            $region29: #{custom-call.17} parent=27 // loop_pre_header
              _
            $region30: #{custom-call.17} parent=27 // loop_header
              %s101 = sphi 0, %s105
              %p102 = scmp.ge.s32.totalorder %s101, 1
              %s106 = sphi %s92, %s92
              %s107 = sphi %s90, %s90
            $region31: #{custom-call.17} parent=27 // loop_header_branch
              %104 = sbr.rel (%p102) target = $region35
            $region32: #{custom-call.17} parent=27 // loop_body
              %v108 = vld [vmem:[%s106] sm:$0xff]
              %109 = vst [vmem:[%s107] sm:$0xff] %v108
            $region33: #{custom-call.17} parent=27 // loop_footer
              %s105 = sadd.s32 1, %s101
            $region34: #{custom-call.17} parent=27 // loop_footer_branch
              %100 = sbr.rel target = $region30
            $region35: #{custom-call.17} parent=27 // loop_exit
              _
          $region28: #{custom-call.17} parent=19 // pred_fallthru
            _
        $region20: #{custom-call.17} parent=15 // pred_fallthru
          _
        %124 = vnop
        %s125 = sand.u32 %s12, 1
        %s126 = sand.u32 %s12, 1
        %s127 = smul.addr %s126, 8
        %s128 = scalar_lea.vmem [#allocation1], %s127
        %s129 = smul.addr %s12, 8
        %s130 = scalar_lea.vmem %s1, %s129
        // Predicated region
        $region51: #{custom-call.17} parent=15 // pred_check
          _
        $region52: #{custom-call.17} parent=15 // pred_check_branch
          %132 = sbr.rel (0) target = $region54
        $region53: #{custom-call.17} parent=15 // pred_region
          // Predicated region
          $region55: #{custom-call.17} parent=53 // pred_check
            _
          $region56: #{custom-call.17} parent=53 // pred_check_branch
            %134 = sbr.rel (0) target = $region58
          $region57: #{custom-call.17} parent=53 // pred_region
            // Predicated region
            $region70: #{custom-call.17} parent=57 // pred_check
              _
            $region71: #{custom-call.17} parent=57 // pred_check_branch
              %149 = sbr.rel (0) target = $region73
            $region72: #{custom-call.17} parent=57 // pred_region
              loop: start=0, step=1, limit=1
              $region74: #{custom-call.17} parent=72 // loop_pre_header
                _
              $region75: #{custom-call.17} parent=72 // loop_header
                %s151 = sphi 0, %s155
                %p152 = scmp.ge.s32.totalorder %s151, 1
                %s156 = sphi %s130, %s130
                %s157 = sphi %s128, %s128
              $region76: #{custom-call.17} parent=72 // loop_header_branch
                %154 = sbr.rel (%p152) target = $region80
              $region77: #{custom-call.17} parent=72 // loop_body
                %v158 = vld [vmem:[%s156] sm:$0xff]
                %159 = vst [vmem:[%s157] sm:$0xff] %v158
              $region78: #{custom-call.17} parent=72 // loop_footer
                %s155 = sadd.s32 1, %s151
              $region79: #{custom-call.17} parent=72 // loop_footer_branch
                %150 = sbr.rel target = $region75
              $region80: #{custom-call.17} parent=72 // loop_exit
                _
            $region73: #{custom-call.17} parent=57 // pred_fallthru
              _
            // Predicated region
            $region81: #{custom-call.17} parent=57 // pred_check
              _
            $region82: #{custom-call.17} parent=57 // pred_check_branch
              %161 = sbr.rel target = $region84
            $region83: #{custom-call.17} parent=57 // pred_region
              _
            $region84: #{custom-call.17} parent=57 // pred_fallthru
              _
          $region58: #{custom-call.17} parent=53 // pred_fallthru
            _
          // Predicated region
          $region59: #{custom-call.17} parent=53 // pred_check
            _
          $region60: #{custom-call.17} parent=53 // pred_check_branch
            %136 = sbr.rel target = $region62
          $region61: #{custom-call.17} parent=53 // pred_region
            loop: start=0, step=1, limit=1
            $region63: #{custom-call.17} parent=61 // loop_pre_header
              _
            $region64: #{custom-call.17} parent=61 // loop_header
              %s139 = sphi 0, %s143
              %p140 = scmp.ge.s32.totalorder %s139, 1
              %s144 = sphi %s130, %s130
              %s145 = sphi %s128, %s128
            $region65: #{custom-call.17} parent=61 // loop_header_branch
              %142 = sbr.rel (%p140) target = $region69
            $region66: #{custom-call.17} parent=61 // loop_body
              %v146 = vld [vmem:[%s144] sm:$0xff]
              %147 = vst [vmem:[%s145] sm:$0xff] %v146
            $region67: #{custom-call.17} parent=61 // loop_footer
              %s143 = sadd.s32 1, %s139
            $region68: #{custom-call.17} parent=61 // loop_footer_branch
              %138 = sbr.rel target = $region64
            $region69: #{custom-call.17} parent=61 // loop_exit
              _
          $region62: #{custom-call.17} parent=53 // pred_fallthru
            _
        $region54: #{custom-call.17} parent=15 // pred_fallthru
          _
        %162 = vnop
        %s163 = sand.u32 %s12, 1
        %s164 = sand.u32 %s12, 1
        %s165 = smul.addr %s164, 8
        %s166 = scalar_lea.vmem [#allocation2], %s165
        %s167 = smul.addr %s12, 8
        %s168 = scalar_lea.vmem %s2, %s167
        // Predicated region
        $region85: #{custom-call.17} parent=15 // pred_check
          _
        $region86: #{custom-call.17} parent=15 // pred_check_branch
          %170 = sbr.rel (0) target = $region88
        $region87: #{custom-call.17} parent=15 // pred_region
          // Predicated region
          $region89: #{custom-call.17} parent=87 // pred_check
            _
          $region90: #{custom-call.17} parent=87 // pred_check_branch
            %172 = sbr.rel (0) target = $region92
          $region91: #{custom-call.17} parent=87 // pred_region
            // Predicated region
            $region104: #{custom-call.17} parent=91 // pred_check
              _
            $region105: #{custom-call.17} parent=91 // pred_check_branch
              %187 = sbr.rel (0) target = $region107
            $region106: #{custom-call.17} parent=91 // pred_region
              loop: start=0, step=1, limit=1
              $region108: #{custom-call.17} parent=106 // loop_pre_header
                _
              $region109: #{custom-call.17} parent=106 // loop_header
                %s189 = sphi 0, %s193
                %p190 = scmp.ge.s32.totalorder %s189, 1
                %s194 = sphi %s168, %s168
                %s195 = sphi %s166, %s166
              $region110: #{custom-call.17} parent=106 // loop_header_branch
                %192 = sbr.rel (%p190) target = $region114
              $region111: #{custom-call.17} parent=106 // loop_body
                %v196 = vld [vmem:[%s194] sm:$0xff]
                %197 = vst [vmem:[%s195] sm:$0xff] %v196
              $region112: #{custom-call.17} parent=106 // loop_footer
                %s193 = sadd.s32 1, %s189
              $region113: #{custom-call.17} parent=106 // loop_footer_branch
                %188 = sbr.rel target = $region109
              $region114: #{custom-call.17} parent=106 // loop_exit
                _
            $region107: #{custom-call.17} parent=91 // pred_fallthru
              _
            // Predicated region
            $region115: #{custom-call.17} parent=91 // pred_check
              _
            $region116: #{custom-call.17} parent=91 // pred_check_branch
              %199 = sbr.rel target = $region118
            $region117: #{custom-call.17} parent=91 // pred_region
              _
            $region118: #{custom-call.17} parent=91 // pred_fallthru
              _
          $region92: #{custom-call.17} parent=87 // pred_fallthru
            _
          // Predicated region
          $region93: #{custom-call.17} parent=87 // pred_check
            _
          $region94: #{custom-call.17} parent=87 // pred_check_branch
            %174 = sbr.rel target = $region96
          $region95: #{custom-call.17} parent=87 // pred_region
            loop: start=0, step=1, limit=1
            $region97: #{custom-call.17} parent=95 // loop_pre_header
              _
            $region98: #{custom-call.17} parent=95 // loop_header
              %s177 = sphi 0, %s181
              %p178 = scmp.ge.s32.totalorder %s177, 1
              %s182 = sphi %s168, %s168
              %s183 = sphi %s166, %s166
            $region99: #{custom-call.17} parent=95 // loop_header_branch
              %180 = sbr.rel (%p178) target = $region103
            $region100: #{custom-call.17} parent=95 // loop_body
              %v184 = vld [vmem:[%s182] sm:$0xff]
              %185 = vst [vmem:[%s183] sm:$0xff] %v184
            $region101: #{custom-call.17} parent=95 // loop_footer
              %s181 = sadd.s32 1, %s177
            $region102: #{custom-call.17} parent=95 // loop_footer_branch
              %176 = sbr.rel target = $region98
            $region103: #{custom-call.17} parent=95 // loop_exit
              _
          $region96: #{custom-call.17} parent=87 // pred_fallthru
            _
        $region88: #{custom-call.17} parent=15 // pred_fallthru
          _
        %200 = vnop
        %s201 = sand.u32 %s12, 1
        %s202 = sand.u32 %s12, 1
        %s203 = smul.addr %s202, 8
        %s204 = scalar_lea.vmem [#allocation3], %s203
        %s205 = smul.addr %s12, 8
        %s206 = scalar_lea.vmem %s3, %s205
        // Predicated region
        $region119: #{custom-call.17} parent=15 // pred_check
          _
        $region120: #{custom-call.17} parent=15 // pred_check_branch
          %208 = sbr.rel (0) target = $region122
        $region121: #{custom-call.17} parent=15 // pred_region
          // Predicated region
          $region123: #{custom-call.17} parent=121 // pred_check
            _
          $region124: #{custom-call.17} parent=121 // pred_check_branch
            %210 = sbr.rel (0) target = $region126
          $region125: #{custom-call.17} parent=121 // pred_region
            // Predicated region
            $region138: #{custom-call.17} parent=125 // pred_check
              _
            $region139: #{custom-call.17} parent=125 // pred_check_branch
              %225 = sbr.rel (0) target = $region141
            $region140: #{custom-call.17} parent=125 // pred_region
              loop: start=0, step=1, limit=1
              $region142: #{custom-call.17} parent=140 // loop_pre_header
                _
              $region143: #{custom-call.17} parent=140 // loop_header
                %s227 = sphi 0, %s231
                %p228 = scmp.ge.s32.totalorder %s227, 1
                %s232 = sphi %s206, %s206
                %s233 = sphi %s204, %s204
              $region144: #{custom-call.17} parent=140 // loop_header_branch
                %230 = sbr.rel (%p228) target = $region148
              $region145: #{custom-call.17} parent=140 // loop_body
                %v234 = vld [vmem:[%s232] sm:$0xff]
                %235 = vst [vmem:[%s233] sm:$0xff] %v234
              $region146: #{custom-call.17} parent=140 // loop_footer
                %s231 = sadd.s32 1, %s227
              $region147: #{custom-call.17} parent=140 // loop_footer_branch
                %226 = sbr.rel target = $region143
              $region148: #{custom-call.17} parent=140 // loop_exit
                _
            $region141: #{custom-call.17} parent=125 // pred_fallthru
              _
            // Predicated region
            $region149: #{custom-call.17} parent=125 // pred_check
              _
            $region150: #{custom-call.17} parent=125 // pred_check_branch
              %237 = sbr.rel target = $region152
            $region151: #{custom-call.17} parent=125 // pred_region
              _
            $region152: #{custom-call.17} parent=125 // pred_fallthru
              _
          $region126: #{custom-call.17} parent=121 // pred_fallthru
            _
          // Predicated region
          $region127: #{custom-call.17} parent=121 // pred_check
            _
          $region128: #{custom-call.17} parent=121 // pred_check_branch
            %212 = sbr.rel target = $region130
          $region129: #{custom-call.17} parent=121 // pred_region
            loop: start=0, step=1, limit=1
            $region131: #{custom-call.17} parent=129 // loop_pre_header
              _
            $region132: #{custom-call.17} parent=129 // loop_header
              %s215 = sphi 0, %s219
              %p216 = scmp.ge.s32.totalorder %s215, 1
              %s220 = sphi %s206, %s206
              %s221 = sphi %s204, %s204
            $region133: #{custom-call.17} parent=129 // loop_header_branch
              %218 = sbr.rel (%p216) target = $region137
            $region134: #{custom-call.17} parent=129 // loop_body
              %v222 = vld [vmem:[%s220] sm:$0xff]
              %223 = vst [vmem:[%s221] sm:$0xff] %v222
            $region135: #{custom-call.17} parent=129 // loop_footer
              %s219 = sadd.s32 1, %s215
            $region136: #{custom-call.17} parent=129 // loop_footer_branch
              %214 = sbr.rel target = $region132
            $region137: #{custom-call.17} parent=129 // loop_exit
              _
          $region130: #{custom-call.17} parent=121 // pred_fallthru
            _
        $region122: #{custom-call.17} parent=15 // pred_fallthru
          _
        %238 = vnop
      $region16: #{custom-call.17} parent=5 // pred_fallthru
        _
      %p239 = scmp.le.s32.totalorder 1, %s12
      %p240 = scmp.lt.s32.totalorder %s12, 3
      %p241 = pnand %p239, %p240
      %p242 = pneg %p241
      // Predicated region
      $region153: #{custom-call.17} parent=5 // pred_check
        _
      $region154: #{custom-call.17} parent=5 // pred_check_branch
        %244 = sbr.rel (%p241) target = $region156
      $region155: #{custom-call.17} parent=5 // pred_region
        #allocation12 [shape = 'f32[8,8]{1,0}', space=vmem, size = 0x1000, scoped, tag = 'a top-left matrix']
        #allocation13 [shape = 'f32[8,8]{1,0}', space=vmem, size = 0x1000, scoped, tag = 'a top-right matrix']
        #allocation14 [shape = 'f32[8,8]{1,0}', space=vmem, size = 0x1000, scoped, tag = 'a bottom-left matrix']
        #allocation15 [shape = 'f32[8,8]{1,0}', space=vmem, size = 0x1000, scoped, tag = 'a bottom-right matrix']
        %s245 = ssub.s32 %s12, 1
        %s246 = sand.u32 %s17, 1
        %s247 = sand.u32 %s17, 1
        %s248 = smul.addr %s247, 8
        %s249 = scalar_lea.vmem [#allocation0], %s248
        %s250 = sand.u32 %s17, 1
        %s251 = sand.u32 %s17, 1
        %s252 = smul.addr %s251, 8
        %s253 = scalar_lea.vmem [#allocation1], %s252
        %s254 = sand.u32 %s17, 1
        %s255 = sand.u32 %s17, 1
        %s256 = smul.addr %s255, 8
        %s257 = scalar_lea.vmem [#allocation2], %s256
        %s258 = sand.u32 %s17, 1
        %s259 = sand.u32 %s17, 1
        %s260 = smul.addr %s259, 8
        %s261 = scalar_lea.vmem [#allocation3], %s260
        %s262 = sand.u32 %s17, 1
        %s263 = sand.u32 %s17, 1
        %s264 = smul.addr %s263, 8
        %s265 = scalar_lea.vmem [#allocation0], %s264
        %s266 = sand.u32 %s17, 1
        %s267 = sand.u32 %s17, 1
        %s268 = smul.addr %s267, 8
        %s269 = scalar_lea.vmem [#allocation1], %s268
        %s270 = sand.u32 %s17, 1
        %s271 = sand.u32 %s17, 1
        %s272 = smul.addr %s271, 8
        %s273 = scalar_lea.vmem [#allocation2], %s272
        %s274 = sand.u32 %s17, 1
        %s275 = sand.u32 %s17, 1
        %s276 = smul.addr %s275, 8
        %s277 = scalar_lea.vmem [#allocation3], %s276
        %p278 = pneg %p40
        %p279 = pneg %p37
        %s280 = sand.u32 %s27, 1
        %s281 = sand.u32 %s27, 1
        %s282 = smul.addr %s281, 2
        %s283 = scalar_lea.vmem [#allocation5], %s282
        %p284 = pneg %p68
        %p285 = pneg %p65
        %s286 = sand.u32 %s55, 1
        %s287 = sand.u32 %s55, 1
        %s288 = smul.addr %s287, 2
        %s289 = scalar_lea.vmem [#allocation7], %s288
        %s290 = sand.u32 %s17, 1
        %s291 = sand.u32 %s17, 1
        %s292 = smul.addr %s291, 8
        %s293 = scalar_lea.vmem [#allocation8], %s292
        %s294 = sand.u32 %s17, 1
        %s295 = sand.u32 %s17, 1
        %s296 = smul.addr %s295, 8
        %s297 = scalar_lea.vmem [#allocation9], %s296
        %s298 = sand.u32 %s17, 1
        %s299 = sand.u32 %s17, 1
        %s300 = smul.addr %s299, 8
        %s301 = scalar_lea.vmem [#allocation10], %s300
        %s302 = sand.u32 %s17, 1
        %s303 = sand.u32 %s17, 1
        %s304 = smul.addr %s303, 8
        %s305 = scalar_lea.vmem [#allocation11], %s304
        %s306 = sshrl.u32 %s17, 3
        %s307 = sshrl.u32 %s17, 3
        %s308 = smov [#allocation12]
        %v309 = vld [vmem:[%s249] sm:$0xff]
        %310 = vst [vmem:[%s308] sm:$0xff] %v309
        %s311 = smov [#allocation13]
        %v312 = vld [vmem:[%s253] sm:$0xff]
        %313 = vst [vmem:[%s311] sm:$0xff] %v312
        %s314 = smov [#allocation14]
        %v315 = vld [vmem:[%s257] sm:$0xff]
        %316 = vst [vmem:[%s314] sm:$0xff] %v315
        %s317 = smov [#allocation15]
        %v318 = vld [vmem:[%s261] sm:$0xff]
        %319 = vst [vmem:[%s317] sm:$0xff] %v318
        %320 = vst [vmem:[%s293] sm:$0xff] 0.0
        %321 = vst [vmem:[%s297] sm:$0xff] 0.0
        %322 = vst [vmem:[%s301] sm:$0xff] 0.0
        %323 = vst [vmem:[%s305] sm:$0xff] 0.0
        %s324 = smov %s293
        %v325 = vlaneseq
        %v326 = vand.u32 %v325, 127
        %v327 = vmov %v326
        %v328 = vlaneseq
        %v329 = vshrl.u32 %v328, 7
        %v330 = vmov %v329
        %v331 = vld [vmem:[%s324] sm:$0xff]
        %vm334 = vcmp.eq.s32.totalorder %v330, %v327
        %v335 = vsel %vm334, 1.0, %v331
        %336 = vst [vmem:[%s324] sm:$0xff] %v335
        %s337 = smov %s305
        %v338 = vlaneseq
        %v339 = vand.u32 %v338, 127
        %v340 = vmov %v339
        %v341 = vlaneseq
        %v342 = vshrl.u32 %v341, 7
        %v343 = vmov %v342
        %v344 = vld [vmem:[%s337] sm:$0xff]
        %vm347 = vcmp.eq.s32.totalorder %v343, %v340
        %v348 = vsel %vm347, 1.0, %v344
        %349 = vst [vmem:[%s337] sm:$0xff] %v348
        // While loop
        $region157: #{custom-call.17} parent=155 // loop_pre_header
          _
        $region158: #{custom-call.17} parent=155 // loop_header
          %s351 = sphi 0, %s893
          %v352 = vlaneseq
          %v353 = vand.u32 %v352, 127
          %v354 = vmov %v353
          %v355 = vlaneseq
          %v356 = vshrl.u32 %v355, 7
          %v357 = vmov %v356
          %s358 = smov [#allocation12]
          %v359 = vlaneseq
          %v360 = vand.u32 %v359, 127
          %vm361 = vcmp.ge.s32.totalorder %v360, 0
          %vm362 = vcmp.lt.s32.totalorder %v360, 8
          %vm363 = vmand %vm361, %vm362
          %v364 = vld [vmem:[%s358] sm:$0xff]
          %v365 = vsel %vm363, %v364, 0.0
          %v366 = vmul.f32 %v365, %v365
          %vm369 = vcmp.eq.s32.totalorder %v357, %v354
          %v370 = vsel %vm369, 0.0, %v366
          %v371 = vlaneseq
          %v372 = vand.u32 %v371, 127
          %v373 = vmov %v372
          %v374 = vlaneseq
          %v375 = vshrl.u32 %v374, 7
          %v376 = vmov %v375
          %s377 = smov [#allocation13]
          %v378 = vlaneseq
          %v379 = vand.u32 %v378, 127
          %vm380 = vcmp.ge.s32.totalorder %v379, 0
          %vm381 = vcmp.lt.s32.totalorder %v379, 8
          %vm382 = vmand %vm380, %vm381
          %v383 = vld [vmem:[%s377] sm:$0xff]
          %v384 = vsel %vm382, %v383, 0.0
          %v385 = vmul.f32 %v384, %v384
          %v386 = vadd.f32 %v370, %v385
          %v387 = vadd.f32 %v366, %v385
          %v388 = vlaneseq
          %v389 = vand.u32 %v388, 127
          %v390 = vmov %v389
          %v391 = vlaneseq
          %v392 = vshrl.u32 %v391, 7
          %v393 = vmov %v392
          %s394 = smov [#allocation14]
          %v395 = vlaneseq
          %v396 = vand.u32 %v395, 127
          %vm397 = vcmp.ge.s32.totalorder %v396, 0
          %vm398 = vcmp.lt.s32.totalorder %v396, 8
          %vm399 = vmand %vm397, %vm398
          %v400 = vld [vmem:[%s394] sm:$0xff]
          %v401 = vsel %vm399, %v400, 0.0
          %v402 = vmul.f32 %v401, %v401
          %v403 = vadd.f32 %v386, %v402
          %v404 = vadd.f32 %v387, %v402
          %v405 = vlaneseq
          %v406 = vand.u32 %v405, 127
          %v407 = vmov %v406
          %v408 = vlaneseq
          %v409 = vshrl.u32 %v408, 7
          %v410 = vmov %v409
          %s411 = smov [#allocation15]
          %v412 = vlaneseq
          %v413 = vand.u32 %v412, 127
          %vm414 = vcmp.ge.s32.totalorder %v413, 0
          %vm415 = vcmp.lt.s32.totalorder %v413, 8
          %vm416 = vmand %vm414, %vm415
          %v417 = vld [vmem:[%s411] sm:$0xff]
          %v418 = vsel %vm416, %v417, 0.0
          %v419 = vmul.f32 %v418, %v418
          %vm422 = vcmp.eq.s32.totalorder %v410, %v407
          %v423 = vsel %vm422, 0.0, %v419
          %v424 = vadd.f32 %v403, %v423
          %v425 = vadd.f32 %v404, %v419
          %426 = vadd.xlane.f32.xlu0 %v425
          %v427 = vpop.xlane.xlu0 %426
          %v428 = vrot.slane %v427, 4
          %v429 = vadd.f32 %v427, %v428
          %v430 = vrot.slane %v429, 2
          %v431 = vadd.f32 %v429, %v430
          %v432 = vrot.slane %v431, 1
          %v433 = vadd.f32 %v431, %v432
          %434 = vadd.xlane.f32.xlu0 %v424
          %v435 = vpop.xlane.xlu0 %434
          %v436 = vrot.slane %v435, 4
          %v437 = vadd.f32 %v435, %v436
          %v438 = vrot.slane %v437, 2
          %v439 = vadd.f32 %v437, %v438
          %v440 = vrot.slane %v439, 1
          %v441 = vadd.f32 %v439, %v440
          %s442 = vtos %v441
          %s443 = vtos %v433
          %s444 = smul.f32 1e-10, %s443
          %p445 = scmp.le.f32.partialorder %s442, %s444
          %p446 = scmp.ge.s32.totalorder %s351, 15
          %p447 = por %p445, %p446
        $region159: #{custom-call.17} parent=155 // loop_header_branch
          %895 = sbr.rel (%p447) target = $region163
        $region160: #{custom-call.17} parent=155 // loop_body
          loop: start=0, step=1, limit=15
          $region164: #{custom-call.17} parent=160 // loop_pre_header
            _
          $region165: #{custom-call.17} parent=160 // loop_header
            %s449 = sphi 0, %s453
            %p450 = scmp.ge.s32.totalorder %s449, 15
          $region166: #{custom-call.17} parent=160 // loop_header_branch
            %452 = sbr.rel (%p450) target = $region170
          $region167: #{custom-call.17} parent=160 // loop_body
            #allocation16 [shape = 'f32[1024]{0}', space=vmem, size = 0x1000, scoped, tag = 'a_tl_diag vmem']
            #allocation17 [shape = 'f32[1024]{0}', space=vmem, size = 0x1000, scoped, tag = 'a_tr_diag vmem']
            #allocation18 [shape = 'f32[1024]{0}', space=vmem, size = 0x1000, scoped, tag = 'a_br_diag vmem']
            #allocation19 [shape = 'f32[1024]{0}', space=vmem, size = 0x1000, scoped, tag = 'rt1 vmem']
            #allocation20 [shape = 'f32[1024]{0}', space=vmem, size = 0x1000, scoped, tag = 'rt2 vmem']
            #allocation21 [shape = 'f32[1024]{0}', space=vmem, size = 0x1000, scoped, tag = 'c vmem']
            #allocation22 [shape = 'f32[1024]{0}', space=vmem, size = 0x1000, scoped, tag = 's vmem']
            #allocation23 [shape = 'f32[4096]{0}', space=vmem, size = 0x4000, scoped, tag = 'c broadcast']
            #allocation24 [shape = 'f32[4096]{0}', space=vmem, size = 0x4000, scoped, tag = 's broadcast']
            %s454 = smov [#allocation12]
            %s455 = smov [#allocation16]
            %v456 = vlaneseq
            %v457 = vand.u32 %v456, 127
            %v458 = vmov %v457
            %v459 = vlaneseq
            %v460 = vshrl.u32 %v459, 7
            %v461 = vmov %v460
            %v462 = vld [vmem:[%s454] sm:$0xff]
            %vm465 = vcmp.eq.s32.totalorder %v461, %v458
            %v466 = vsel %vm465, %v462, 0.0
            %v467 = vrot.slane %v466, 4
            %v468 = vadd.f32 %v466, %v467
            %v469 = vrot.slane %v468, 2
            %v470 = vadd.f32 %v468, %v469
            %v471 = vrot.slane %v470, 1
            %v472 = vadd.f32 %v470, %v471
            %473 = vst [vmem:[%s455] sm:$0x1] %v472
            %s474 = smov [#allocation13]
            %s475 = smov [#allocation17]
            %v476 = vlaneseq
            %v477 = vand.u32 %v476, 127
            %v478 = vmov %v477
            %v479 = vlaneseq
            %v480 = vshrl.u32 %v479, 7
            %v481 = vmov %v480
            %v482 = vld [vmem:[%s474] sm:$0xff]
            %vm485 = vcmp.eq.s32.totalorder %v481, %v478
            %v486 = vsel %vm485, %v482, 0.0
            %v487 = vrot.slane %v486, 4
            %v488 = vadd.f32 %v486, %v487
            %v489 = vrot.slane %v488, 2
            %v490 = vadd.f32 %v488, %v489
            %v491 = vrot.slane %v490, 1
            %v492 = vadd.f32 %v490, %v491
            %493 = vst [vmem:[%s475] sm:$0x1] %v492
            %s494 = smov [#allocation15]
            %s495 = smov [#allocation18]
            %v496 = vlaneseq
            %v497 = vand.u32 %v496, 127
            %v498 = vmov %v497
            %v499 = vlaneseq
            %v500 = vshrl.u32 %v499, 7
            %v501 = vmov %v500
            %v502 = vld [vmem:[%s494] sm:$0xff]
            %vm505 = vcmp.eq.s32.totalorder %v501, %v498
            %v506 = vsel %vm505, %v502, 0.0
            %v507 = vrot.slane %v506, 4
            %v508 = vadd.f32 %v506, %v507
            %v509 = vrot.slane %v508, 2
            %v510 = vadd.f32 %v508, %v509
            %v511 = vrot.slane %v510, 1
            %v512 = vadd.f32 %v510, %v511
            %513 = vst [vmem:[%s495] sm:$0x1] %v512
            %s514 = smov [#allocation21]
            %s515 = smov [#allocation22]
            %s516 = smov [#allocation16]
            %v517 = vld [vmem:[%s516] sm:$0xff]
            %s518 = smov [#allocation17]
            %v519 = vld [vmem:[%s518] sm:$0xff]
            %s520 = smov [#allocation18]
            %v521 = vld [vmem:[%s520] sm:$0xff]
            %v522 = vsub.f32 %v521, %v517
            %v523 = vmul.f32 2.0, %v519
            %v524 = vrcp.pop %v523
            %v525 = vmul.f32 %v522, %v524
            %vm526 = vcmp.ge.f32.partialorder %v525, 0.0
            %v527 = vmul.f32 %v525, %v525
            %v528 = vadd.f32 1.0, %v527
            %v529 = vrsqrt.pop %v528
            %v530 = vmul.f32 %v528, %v529
            %vm531 = vcmp.eq.f32.partialorder %v528, inf
            %v532 = vsel %vm531, %v528, %v530
            %vm533 = vcmp.eq.f32.partialorder %v528, 0.0
            %v534 = vand.u32 %v528, 2147483648
            %v535 = vsel %vm533, %v534, %v532
            %v536 = vxor.u32 %v535, 2147483648
            %v537 = vsel %vm526, %v535, %v536
            %v538 = vadd.f32 %v525, %v537
            %v539 = vrcp.pop %v538
            %v540 = vand.u32 2147483647, %v517
            %v541 = vand.u32 2147483647, %v519
            %v542 = vand.u32 2147483647, %v521
            %v543 = vmin.f32 %v540, %v542
            %v544 = vmul.f32 1.1920929e-08, %v543
            %vm545 = vcmp.le.f32.partialorder %v541, %v544
            %v546 = vsel %vm545, 0.0, %v539
            %v547 = vmul.f32 %v546, %v546
            %v548 = vadd.f32 1.0, %v547
            %v549 = vrsqrt.pop %v548
            %v550 = vmul.f32 %v546, %v549
            %v551 = vmul.f32 %v546, %v519
            %v552 = vsub.f32 %v517, %v551
            %v553 = vmul.f32 %v546, %v519
            %v554 = vadd.f32 %v521, %v553
            %s555 = smov [#allocation19]
            %556 = vst [vmem:[%s555] sm:$0xff] %v552
            %s557 = smov [#allocation20]
            %558 = vst [vmem:[%s557] sm:$0xff] %v554
            %s559 = smov %s514
            %560 = vst [vmem:[%s559] sm:$0xff] %v549
            %s561 = smov %s515
            %562 = vst [vmem:[%s561] sm:$0xff] %v550
            %s563 = smov [#allocation21]
            %v564 = vld [vmem:[%s563] ss:$0 sm:$0xff]
            %v565 = vlaneseq
            %v566 = vand.u32 %v565, 127
            %v567 = vmov %v566
            %v568 = vlaneseq
            %v569 = vshrl.u32 %v568, 7
            %v570 = vmov %v569
            %vm572 = vcmp.eq.s32.totalorder %v570, %v567
            %v573 = vsel %vm572, %v564, 0.0
            %574 = vadd.xlane.f32.xlu0 %v573
            %v575 = vpop.xlane.xlu0 %574
            %s576 = smov [#allocation23]
            %577 = vst [vmem:[%s576] sm:$0xff] %v575
            %s578 = smov [#allocation22]
            %v579 = vld [vmem:[%s578] ss:$0 sm:$0xff]
            %v580 = vlaneseq
            %v581 = vand.u32 %v580, 127
            %v582 = vmov %v581
            %v583 = vlaneseq
            %v584 = vshrl.u32 %v583, 7
            %v585 = vmov %v584
            %vm587 = vcmp.eq.s32.totalorder %v585, %v582
            %v588 = vsel %vm587, %v579, 0.0
            %589 = vadd.xlane.f32.xlu0 %v588
            %v590 = vpop.xlane.xlu0 %589
            %s591 = smov [#allocation24]
            %592 = vst [vmem:[%s591] sm:$0xff] %v590
            %s593 = smov [#allocation23]
            %v594 = vld [vmem:[%s593] sm:$0xff]
            %s595 = smov [#allocation24]
            %v596 = vld [vmem:[%s595] sm:$0xff]
            %s597 = smov [#allocation12]
            %s598 = smov [#allocation13]
            %s599 = smov [#allocation14]
            %s600 = smov [#allocation15]
            %v601 = vld [vmem:[%s597] sm:$0xff]
            %v602 = vld [vmem:[%s598] sm:$0xff]
            %v603 = vld [vmem:[%s599] sm:$0xff]
            %v604 = vld [vmem:[%s600] sm:$0xff]
            %v605 = vmul.f32 %v594, %v601
            %v606 = vmul.f32 %v596, %v603
            %v607 = vsub.f32 %v605, %v606
            %v608 = vmul.f32 %v594, %v602
            %v609 = vmul.f32 %v596, %v604
            %v610 = vsub.f32 %v608, %v609
            %v611 = vmul.f32 %v596, %v601
            %v612 = vmul.f32 %v594, %v603
            %v613 = vadd.f32 %v611, %v612
            %v614 = vmul.f32 %v596, %v602
            %v615 = vmul.f32 %v594, %v604
            %v616 = vadd.f32 %v614, %v615
            %617 = vst [vmem:[%s597] sm:$0xff] %v607
            %618 = vst [vmem:[%s598] sm:$0xff] %v610
            %619 = vst [vmem:[%s599] sm:$0xff] %v613
            %620 = vst [vmem:[%s600] sm:$0xff] %v616
            %s621 = smov [#allocation21]
            %v622 = vld [vmem:[%s621] ss:$0 sm:$0xff]
            %s623 = smov [#allocation22]
            %v624 = vld [vmem:[%s623] ss:$0 sm:$0xff]
            %s625 = smov [#allocation12]
            %s626 = smov [#allocation13]
            %s627 = smov [#allocation14]
            %s628 = smov [#allocation15]
            %v629 = vld [vmem:[%s625] sm:$0xff]
            %v630 = vld [vmem:[%s626] sm:$0xff]
            %v631 = vld [vmem:[%s627] sm:$0xff]
            %v632 = vld [vmem:[%s628] sm:$0xff]
            %v633 = vmul.f32 %v622, %v629
            %v634 = vmul.f32 %v624, %v630
            %v635 = vsub.f32 %v633, %v634
            %v636 = vmul.f32 %v624, %v629
            %v637 = vmul.f32 %v622, %v630
            %v638 = vadd.f32 %v636, %v637
            %v639 = vmul.f32 %v622, %v631
            %v640 = vmul.f32 %v624, %v632
            %v641 = vsub.f32 %v639, %v640
            %v642 = vmul.f32 %v624, %v631
            %v643 = vmul.f32 %v622, %v632
            %v644 = vadd.f32 %v642, %v643
            %645 = vst [vmem:[%s625] sm:$0xff] %v635
            %646 = vst [vmem:[%s626] sm:$0xff] %v638
            %647 = vst [vmem:[%s627] sm:$0xff] %v641
            %648 = vst [vmem:[%s628] sm:$0xff] %v644
            %s649 = smov [#allocation12]
            %s650 = smov [#allocation19]
            %v651 = vlaneseq
            %v652 = vand.u32 %v651, 127
            %v653 = vmov %v652
            %v654 = vlaneseq
            %v655 = vshrl.u32 %v654, 7
            %v656 = vmov %v655
            %v657 = vld [vmem:[%s650] ss:$0 sm:$0xff]
            %v658 = vld [vmem:[%s649] sm:$0xff]
            %vm661 = vcmp.eq.s32.totalorder %v656, %v653
            %v662 = vsel %vm661, %v657, %v658
            %663 = vst [vmem:[%s649] sm:$0xff] %v662
            %s664 = smov [#allocation13]
            %v665 = vlaneseq
            %v666 = vand.u32 %v665, 127
            %v667 = vmov %v666
            %v668 = vlaneseq
            %v669 = vshrl.u32 %v668, 7
            %v670 = vmov %v669
            %v671 = vld [vmem:[%s664] sm:$0xff]
            %vm674 = vcmp.eq.s32.totalorder %v670, %v667
            %v675 = vsel %vm674, 0.0, %v671
            %676 = vst [vmem:[%s664] sm:$0xff] %v675
            %s677 = smov [#allocation14]
            %v678 = vlaneseq
            %v679 = vand.u32 %v678, 127
            %v680 = vmov %v679
            %v681 = vlaneseq
            %v682 = vshrl.u32 %v681, 7
            %v683 = vmov %v682
            %v684 = vld [vmem:[%s677] sm:$0xff]
            %vm687 = vcmp.eq.s32.totalorder %v683, %v680
            %v688 = vsel %vm687, 0.0, %v684
            %689 = vst [vmem:[%s677] sm:$0xff] %v688
            %s690 = smov [#allocation15]
            %s691 = smov [#allocation20]
            %v692 = vlaneseq
            %v693 = vand.u32 %v692, 127
            %v694 = vmov %v693
            %v695 = vlaneseq
            %v696 = vshrl.u32 %v695, 7
            %v697 = vmov %v696
            %v698 = vld [vmem:[%s691] ss:$0 sm:$0xff]
            %v699 = vld [vmem:[%s690] sm:$0xff]
            %vm702 = vcmp.eq.s32.totalorder %v697, %v694
            %v703 = vsel %vm702, %v698, %v699
            %704 = vst [vmem:[%s690] sm:$0xff] %v703
            %s705 = smov [#allocation12]
            %s706 = smov [#allocation13]
            %v707 = vld [vmem:[%s706] sm:$0xff]
            %708 = vrot.lane.b32.xlu0 %v707, 1
            %v709 = vpop.permute.xlu0 %708
            %v710 = vld [vmem:[%s705] sm:$0xff]
            %v711 = vld [vmem:[%s705] sm:$0xff]
            %712 = vrot.lane.b32.xlu0 %v711, 1
            %v713 = vpop.permute.xlu0 %712
            %v714 = vlaneseq
            %v715 = vand.u32 %v714, 127
            %vm716 = vcmp.eq.s32.totalorder %v715, 0
            %v717 = vsel %vm716, %v711, %v713
            %v718 = vlaneseq
            %v719 = vand.u32 %v718, 127
            %vm720 = vcmp.eq.s32.totalorder %v719, 1
            %v721 = vsel %vm720, %v709, %v717
            %v722 = vlaneseq
            %v723 = vand.u32 %v722, 127
            %vm724 = vcmp.ge.s32.totalorder %v723, 0
            %vm725 = vcmp.lt.s32.totalorder %v723, 8
            %vm726 = vmand %vm724, %vm725
            %v727 = vsel %vm726, %v721, 0.0
            %v728 = vld [vmem:[%s706] sm:$0xff]
            %729 = vrot.lane.b32.xlu0 %v728, 127
            %v730 = vpop.permute.xlu0 %729
            %v731 = vlaneseq
            %v732 = vand.u32 %v731, 127
            %vm733 = vcmp.eq.s32.totalorder %v732, 7
            %v734 = vsel %vm733, %v710, %v730
            %735 = vst [vmem:[%s705] sm:$0xff] %v727
            %736 = vst [vmem:[%s706] sm:$0xff] %v734
            %s737 = smov [#allocation14]
            %s738 = smov [#allocation15]
            %v739 = vld [vmem:[%s738] sm:$0xff]
            %740 = vrot.lane.b32.xlu0 %v739, 1
            %v741 = vpop.permute.xlu0 %740
            %v742 = vld [vmem:[%s737] sm:$0xff]
            %v743 = vld [vmem:[%s737] sm:$0xff]
            %744 = vrot.lane.b32.xlu0 %v743, 1
            %v745 = vpop.permute.xlu0 %744
            %v746 = vlaneseq
            %v747 = vand.u32 %v746, 127
            %vm748 = vcmp.eq.s32.totalorder %v747, 0
            %v749 = vsel %vm748, %v743, %v745
            %v750 = vlaneseq
            %v751 = vand.u32 %v750, 127
            %vm752 = vcmp.eq.s32.totalorder %v751, 1
            %v753 = vsel %vm752, %v741, %v749
            %v754 = vlaneseq
            %v755 = vand.u32 %v754, 127
            %vm756 = vcmp.ge.s32.totalorder %v755, 0
            %vm757 = vcmp.lt.s32.totalorder %v755, 8
            %vm758 = vmand %vm756, %vm757
            %v759 = vsel %vm758, %v753, 0.0
            %v760 = vld [vmem:[%s738] sm:$0xff]
            %761 = vrot.lane.b32.xlu0 %v760, 127
            %v762 = vpop.permute.xlu0 %761
            %v763 = vlaneseq
            %v764 = vand.u32 %v763, 127
            %vm765 = vcmp.eq.s32.totalorder %v764, 7
            %v766 = vsel %vm765, %v742, %v762
            %767 = vst [vmem:[%s737] sm:$0xff] %v759
            %768 = vst [vmem:[%s738] sm:$0xff] %v766
            %s769 = smov [#allocation12]
            %s770 = smov [#allocation14]
            %v771 = vld [vmem:[%s769] ss:$0 sm:$0xff]
            %s773 = scalar_lea.vmem %s769, 4294967295
            %v774 = vld [vmem:[%s773] sm:$0xfe]
            %v775 = vlaneseq
            %v776 = vshrl.u32 %v775, 7
            %vm777 = vcmp.eq.s32.totalorder %v776, 0
            %v778 = vsel %vm777, %v771, %v774
            %s779 = scalar_lea.vmem %s769, 7
            %v780 = vld [vmem:[%s779] ss:$0 sm:$0xff]
            %781 = vst [vmem:[%s769] sm:$0xff] %v778
            %v782 = vld [vmem:[%s770] ss:$0 sm:$0xff]
            %s783 = scalar_lea.vmem %s769, 1
            %784 = vst [vmem:[%s783] sm:$0x1] %v782
            %s785 = scalar_lea.vmem %s770, 1
            %v786 = vld [vmem:[%s785] sm:$0x7f]
            %v787 = vlaneseq
            %v788 = vshrl.u32 %v787, 7
            %vm789 = vcmp.eq.s32.totalorder %v788, 7
            %v790 = vsel %vm789, %v780, %v786
            %v791 = vld [vmem:[%s770] ss:$0 sm:$0xff]
            %792 = vst [vmem:[%s770] sm:$0xff] %v790
            %s793 = smov [#allocation13]
            %s794 = smov [#allocation15]
            %v795 = vld [vmem:[%s793] ss:$0 sm:$0xff]
            %s797 = scalar_lea.vmem %s793, 4294967295
            %v798 = vld [vmem:[%s797] sm:$0xfe]
            %v799 = vlaneseq
            %v800 = vshrl.u32 %v799, 7
            %vm801 = vcmp.eq.s32.totalorder %v800, 0
            %v802 = vsel %vm801, %v795, %v798
            %s803 = scalar_lea.vmem %s793, 7
            %v804 = vld [vmem:[%s803] ss:$0 sm:$0xff]
            %805 = vst [vmem:[%s793] sm:$0xff] %v802
            %v806 = vld [vmem:[%s794] ss:$0 sm:$0xff]
            %s807 = scalar_lea.vmem %s793, 1
            %808 = vst [vmem:[%s807] sm:$0x1] %v806
            %s809 = scalar_lea.vmem %s794, 1
            %v810 = vld [vmem:[%s809] sm:$0x7f]
            %v811 = vlaneseq
            %v812 = vshrl.u32 %v811, 7
            %vm813 = vcmp.eq.s32.totalorder %v812, 7
            %v814 = vsel %vm813, %v804, %v810
            %v815 = vld [vmem:[%s794] ss:$0 sm:$0xff]
            %816 = vst [vmem:[%s794] sm:$0xff] %v814
            %s817 = smov [#allocation23]
            %v818 = vld [vmem:[%s817] sm:$0xff]
            %s819 = smov [#allocation24]
            %v820 = vld [vmem:[%s819] sm:$0xff]
            %s821 = smov %s293
            %s822 = smov %s297
            %s823 = smov %s301
            %s824 = smov %s305
            %v825 = vld [vmem:[%s821] sm:$0xff]
            %v826 = vld [vmem:[%s822] sm:$0xff]
            %v827 = vld [vmem:[%s823] sm:$0xff]
            %v828 = vld [vmem:[%s824] sm:$0xff]
            %v829 = vmul.f32 %v818, %v825
            %v830 = vmul.f32 %v820, %v827
            %v831 = vsub.f32 %v829, %v830
            %v832 = vmul.f32 %v818, %v826
            %v833 = vmul.f32 %v820, %v828
            %v834 = vsub.f32 %v832, %v833
            %v835 = vmul.f32 %v820, %v825
            %v836 = vmul.f32 %v818, %v827
            %v837 = vadd.f32 %v835, %v836
            %v838 = vmul.f32 %v820, %v826
            %v839 = vmul.f32 %v818, %v828
            %v840 = vadd.f32 %v838, %v839
            %841 = vst [vmem:[%s821] sm:$0xff] %v831
            %842 = vst [vmem:[%s822] sm:$0xff] %v834
            %843 = vst [vmem:[%s823] sm:$0xff] %v837
            %844 = vst [vmem:[%s824] sm:$0xff] %v840
            %s845 = smov %s293
            %s846 = smov %s301
            %v847 = vld [vmem:[%s845] ss:$0 sm:$0xff]
            %s849 = scalar_lea.vmem %s845, 4294967295
            %v850 = vld [vmem:[%s849] sm:$0xfe]
            %v851 = vlaneseq
            %v852 = vshrl.u32 %v851, 7
            %vm853 = vcmp.eq.s32.totalorder %v852, 0
            %v854 = vsel %vm853, %v847, %v850
            %s855 = scalar_lea.vmem %s845, 7
            %v856 = vld [vmem:[%s855] ss:$0 sm:$0xff]
            %857 = vst [vmem:[%s845] sm:$0xff] %v854
            %v858 = vld [vmem:[%s846] ss:$0 sm:$0xff]
            %s859 = scalar_lea.vmem %s845, 1
            %860 = vst [vmem:[%s859] sm:$0x1] %v858
            %s861 = scalar_lea.vmem %s846, 1
            %v862 = vld [vmem:[%s861] sm:$0x7f]
            %v863 = vlaneseq
            %v864 = vshrl.u32 %v863, 7
            %vm865 = vcmp.eq.s32.totalorder %v864, 7
            %v866 = vsel %vm865, %v856, %v862
            %v867 = vld [vmem:[%s846] ss:$0 sm:$0xff]
            %868 = vst [vmem:[%s846] sm:$0xff] %v866
            %s869 = smov %s297
            %s870 = smov %s305
            %v871 = vld [vmem:[%s869] ss:$0 sm:$0xff]
            %s873 = scalar_lea.vmem %s869, 4294967295
            %v874 = vld [vmem:[%s873] sm:$0xfe]
            %v875 = vlaneseq
            %v876 = vshrl.u32 %v875, 7
            %vm877 = vcmp.eq.s32.totalorder %v876, 0
            %v878 = vsel %vm877, %v871, %v874
            %s879 = scalar_lea.vmem %s869, 7
            %v880 = vld [vmem:[%s879] ss:$0 sm:$0xff]
            %881 = vst [vmem:[%s869] sm:$0xff] %v878
            %v882 = vld [vmem:[%s870] ss:$0 sm:$0xff]
            %s883 = scalar_lea.vmem %s869, 1
            %884 = vst [vmem:[%s883] sm:$0x1] %v882
            %s885 = scalar_lea.vmem %s870, 1
            %v886 = vld [vmem:[%s885] sm:$0x7f]
            %v887 = vlaneseq
            %v888 = vshrl.u32 %v887, 7
            %vm889 = vcmp.eq.s32.totalorder %v888, 7
            %v890 = vsel %vm889, %v880, %v886
            %v891 = vld [vmem:[%s870] ss:$0 sm:$0xff]
            %892 = vst [vmem:[%s870] sm:$0xff] %v890
          $region168: #{custom-call.17} parent=160 // loop_footer
            %s453 = sadd.s32 1, %s449
          $region169: #{custom-call.17} parent=160 // loop_footer_branch
            %448 = sbr.rel target = $region165
          $region170: #{custom-call.17} parent=160 // loop_exit
            _
          %s893 = sadd.s32 %s351, 1
        $region161: #{custom-call.17} parent=155 // loop_footer
          _
        $region162: #{custom-call.17} parent=155 // loop_footer_branch
          %350 = sbr.rel target = $region158
        $region163: #{custom-call.17} parent=155 // loop_exit
          _
        %s896 = sand.u32 %s17, 7
        %s897 = scalar_lea.vmem [#allocation4], %s896
        %s898 = sand.u32 %s17, 7
        %s899 = scalar_lea.vmem [#allocation6], %s898
        %s900 = smov [#allocation12]
        %s901 = smov %s897
        %v902 = vlaneseq
        %v903 = vand.u32 %v902, 127
        %v904 = vmov %v903
        %v905 = vlaneseq
        %v906 = vshrl.u32 %v905, 7
        %v907 = vmov %v906
        %v908 = vld [vmem:[%s900] sm:$0xff]
        %vm911 = vcmp.eq.s32.totalorder %v907, %v904
        %v912 = vsel %vm911, %v908, 0.0
        %v913 = vrot.slane %v912, 4
        %v914 = vadd.f32 %v912, %v913
        %v915 = vrot.slane %v914, 2
        %v916 = vadd.f32 %v914, %v915
        %v917 = vrot.slane %v916, 1
        %v918 = vadd.f32 %v916, %v917
        %919 = vst [vmem:[%s901] sm:$0x1] %v918
        %s920 = smov [#allocation15]
        %s921 = smov %s899
        %v922 = vlaneseq
        %v923 = vand.u32 %v922, 127
        %v924 = vmov %v923
        %v925 = vlaneseq
        %v926 = vshrl.u32 %v925, 7
        %v927 = vmov %v926
        %v928 = vld [vmem:[%s920] sm:$0xff]
        %vm931 = vcmp.eq.s32.totalorder %v927, %v924
        %v932 = vsel %vm931, %v928, 0.0
        %v933 = vrot.slane %v932, 4
        %v934 = vadd.f32 %v932, %v933
        %v935 = vrot.slane %v934, 2
        %v936 = vadd.f32 %v934, %v935
        %v937 = vrot.slane %v936, 1
        %v938 = vadd.f32 %v936, %v937
        %939 = vst [vmem:[%s921] sm:$0x1] %v938
        %s941 = sshllo.u32 0, 2
        %v943 = vld [vmem:[#allocation4] sm:%s941]
        %s944 = sshllo.u32 0, 2
        %945 = vst [vmem:[%s283] sm:%s944] %v943
        %s947 = sshllo.u32 0, 2
        %v949 = vld [vmem:[#allocation6] sm:%s947]
        %s950 = sshllo.u32 0, 2
        %951 = vst [vmem:[%s289] sm:%s950] %v949
        %s952 = sand.u32 %s27, 1
        %s953 = sand.u32 %s27, 1
        %s954 = smul.addr %s953, 2
        %s955 = scalar_lea.vmem [#allocation5], %s954
        %s956 = sand.u32 %s55, 1
        %s957 = sand.u32 %s55, 1
        %s958 = smul.addr %s957, 2
        %s959 = scalar_lea.vmem [#allocation7], %s958
        %s960 = sand.u32 %s17, 1
        %s961 = sand.u32 %s17, 1
        %s962 = smul.addr %s961, 8
        %s963 = scalar_lea.vmem [#allocation8], %s962
        %s964 = sand.u32 %s17, 1
        %s965 = sand.u32 %s17, 1
        %s966 = smul.addr %s965, 8
        %s967 = scalar_lea.vmem [#allocation9], %s966
        %s968 = sand.u32 %s17, 1
        %s969 = sand.u32 %s17, 1
        %s970 = smul.addr %s969, 8
        %s971 = scalar_lea.vmem [#allocation10], %s970
        %s972 = sand.u32 %s17, 1
        %s973 = sand.u32 %s17, 1
        %s974 = smul.addr %s973, 8
        %s975 = scalar_lea.vmem [#allocation11], %s974
        // Predicated region
        $region171: #{custom-call.17} parent=155 // pred_check
          %p976 = pneg %p37
        $region172: #{custom-call.17} parent=155 // pred_check_branch
          %978 = sbr.rel (%p976) target = $region174
        $region173: #{custom-call.17} parent=155 // pred_region
          %s979 = sshrl.u32 %s17, 3
          %s980 = smul.addr %s979, 2
          %s981 = scalar_lea.vmem %s4, %s980
          // Predicated region
          $region175: #{custom-call.17} parent=173 // pred_check
            _
          $region176: #{custom-call.17} parent=173 // pred_check_branch
            %983 = sbr.rel (0) target = $region178
          $region177: #{custom-call.17} parent=173 // pred_region
            // Predicated region
            $region179: #{custom-call.17} parent=177 // pred_check
              _
            $region180: #{custom-call.17} parent=177 // pred_check_branch
              %985 = sbr.rel target = $region182
            $region181: #{custom-call.17} parent=177 // pred_region
              // Predicated region
              $region194: #{custom-call.17} parent=181 // pred_check
                _
              $region195: #{custom-call.17} parent=181 // pred_check_branch
                %1000 = sbr.rel (0) target = $region197
              $region196: #{custom-call.17} parent=181 // pred_region
                loop: start=0, step=1, limit=1
                $region198: #{custom-call.17} parent=196 // loop_pre_header
                  _
                $region199: #{custom-call.17} parent=196 // loop_header
                  %s1003 = sphi 0, %s1007
                  %p1004 = scmp.ge.s32.totalorder %s1003, 1
                  %s1008 = sphi %s955, %s955
                  %s1009 = sphi %s981, %s981
                $region200: #{custom-call.17} parent=196 // loop_header_branch
                  %1006 = sbr.rel (%p1004) target = $region204
                $region201: #{custom-call.17} parent=196 // loop_body
                  %v1010 = vld [vmem:[%s1008] sm:$0x3]
                  %1011 = vst [vmem:[%s1009] sm:$0x3] %v1010
                $region202: #{custom-call.17} parent=196 // loop_footer
                  %s1007 = sadd.s32 1, %s1003
                $region203: #{custom-call.17} parent=196 // loop_footer_branch
                  %1002 = sbr.rel target = $region199
                $region204: #{custom-call.17} parent=196 // loop_exit
                  _
              $region197: #{custom-call.17} parent=181 // pred_fallthru
                _
            $region182: #{custom-call.17} parent=177 // pred_fallthru
              _
            // Predicated region
            $region183: #{custom-call.17} parent=177 // pred_check
              _
            $region184: #{custom-call.17} parent=177 // pred_check_branch
              %987 = sbr.rel (0) target = $region186
            $region185: #{custom-call.17} parent=177 // pred_region
              loop: start=0, step=1, limit=1
              $region187: #{custom-call.17} parent=185 // loop_pre_header
                _
              $region188: #{custom-call.17} parent=185 // loop_header
                %s990 = sphi 0, %s994
                %p991 = scmp.ge.s32.totalorder %s990, 1
                %s995 = sphi %s955, %s955
                %s996 = sphi %s981, %s981
              $region189: #{custom-call.17} parent=185 // loop_header_branch
                %993 = sbr.rel (%p991) target = $region193
              $region190: #{custom-call.17} parent=185 // loop_body
                %v997 = vld [vmem:[%s995] sm:$0x3]
                %998 = vst [vmem:[%s996] sm:$0x3] %v997
              $region191: #{custom-call.17} parent=185 // loop_footer
                %s994 = sadd.s32 1, %s990
              $region192: #{custom-call.17} parent=185 // loop_footer_branch
                %989 = sbr.rel target = $region188
              $region193: #{custom-call.17} parent=185 // loop_exit
                _
            $region186: #{custom-call.17} parent=177 // pred_fallthru
              _
          $region178: #{custom-call.17} parent=173 // pred_fallthru
            _
          %1012 = vnop
        $region174: #{custom-call.17} parent=155 // pred_fallthru
          _
        // Predicated region
        $region205: #{custom-call.17} parent=155 // pred_check
          %p1013 = pneg %p65
        $region206: #{custom-call.17} parent=155 // pred_check_branch
          %1015 = sbr.rel (%p1013) target = $region208
        $region207: #{custom-call.17} parent=155 // pred_region
          %s1016 = sshrl.u32 %s17, 3
          %s1017 = smul.addr %s1016, 2
          %s1018 = scalar_lea.vmem %s5, %s1017
          // Predicated region
          $region209: #{custom-call.17} parent=207 // pred_check
            _
          $region210: #{custom-call.17} parent=207 // pred_check_branch
            %1020 = sbr.rel (0) target = $region212
          $region211: #{custom-call.17} parent=207 // pred_region
            // Predicated region
            $region213: #{custom-call.17} parent=211 // pred_check
              _
            $region214: #{custom-call.17} parent=211 // pred_check_branch
              %1022 = sbr.rel target = $region216
            $region215: #{custom-call.17} parent=211 // pred_region
              // Predicated region
              $region228: #{custom-call.17} parent=215 // pred_check
                _
              $region229: #{custom-call.17} parent=215 // pred_check_branch
                %1037 = sbr.rel (0) target = $region231
              $region230: #{custom-call.17} parent=215 // pred_region
                loop: start=0, step=1, limit=1
                $region232: #{custom-call.17} parent=230 // loop_pre_header
                  _
                $region233: #{custom-call.17} parent=230 // loop_header
                  %s1040 = sphi 0, %s1044
                  %p1041 = scmp.ge.s32.totalorder %s1040, 1
                  %s1045 = sphi %s959, %s959
                  %s1046 = sphi %s1018, %s1018
                $region234: #{custom-call.17} parent=230 // loop_header_branch
                  %1043 = sbr.rel (%p1041) target = $region238
                $region235: #{custom-call.17} parent=230 // loop_body
                  %v1047 = vld [vmem:[%s1045] sm:$0x3]
                  %1048 = vst [vmem:[%s1046] sm:$0x3] %v1047
                $region236: #{custom-call.17} parent=230 // loop_footer
                  %s1044 = sadd.s32 1, %s1040
                $region237: #{custom-call.17} parent=230 // loop_footer_branch
                  %1039 = sbr.rel target = $region233
                $region238: #{custom-call.17} parent=230 // loop_exit
                  _
              $region231: #{custom-call.17} parent=215 // pred_fallthru
                _
            $region216: #{custom-call.17} parent=211 // pred_fallthru
              _
            // Predicated region
            $region217: #{custom-call.17} parent=211 // pred_check
              _
            $region218: #{custom-call.17} parent=211 // pred_check_branch
              %1024 = sbr.rel (0) target = $region220
            $region219: #{custom-call.17} parent=211 // pred_region
              loop: start=0, step=1, limit=1
              $region221: #{custom-call.17} parent=219 // loop_pre_header
                _
              $region222: #{custom-call.17} parent=219 // loop_header
                %s1027 = sphi 0, %s1031
                %p1028 = scmp.ge.s32.totalorder %s1027, 1
                %s1032 = sphi %s959, %s959
                %s1033 = sphi %s1018, %s1018
              $region223: #{custom-call.17} parent=219 // loop_header_branch
                %1030 = sbr.rel (%p1028) target = $region227
              $region224: #{custom-call.17} parent=219 // loop_body
                %v1034 = vld [vmem:[%s1032] sm:$0x3]
                %1035 = vst [vmem:[%s1033] sm:$0x3] %v1034
              $region225: #{custom-call.17} parent=219 // loop_footer
                %s1031 = sadd.s32 1, %s1027
              $region226: #{custom-call.17} parent=219 // loop_footer_branch
                %1026 = sbr.rel target = $region222
              $region227: #{custom-call.17} parent=219 // loop_exit
                _
            $region220: #{custom-call.17} parent=211 // pred_fallthru
              _
          $region212: #{custom-call.17} parent=207 // pred_fallthru
            _
          %1049 = vnop
        $region208: #{custom-call.17} parent=155 // pred_fallthru
          _
        %s1050 = smul.addr %s17, 8
        %s1051 = scalar_lea.vmem %s6, %s1050
        // Predicated region
        $region239: #{custom-call.17} parent=155 // pred_check
          _
        $region240: #{custom-call.17} parent=155 // pred_check_branch
          %1053 = sbr.rel (0) target = $region242
        $region241: #{custom-call.17} parent=155 // pred_region
          // Predicated region
          $region243: #{custom-call.17} parent=241 // pred_check
            _
          $region244: #{custom-call.17} parent=241 // pred_check_branch
            %1055 = sbr.rel (0) target = $region246
          $region245: #{custom-call.17} parent=241 // pred_region
            // Predicated region
            $region258: #{custom-call.17} parent=245 // pred_check
              _
            $region259: #{custom-call.17} parent=245 // pred_check_branch
              %1070 = sbr.rel (0) target = $region261
            $region260: #{custom-call.17} parent=245 // pred_region
              loop: start=0, step=1, limit=1
              $region262: #{custom-call.17} parent=260 // loop_pre_header
                _
              $region263: #{custom-call.17} parent=260 // loop_header
                %s1072 = sphi 0, %s1076
                %p1073 = scmp.ge.s32.totalorder %s1072, 1
                %s1077 = sphi %s963, %s963
                %s1078 = sphi %s1051, %s1051
              $region264: #{custom-call.17} parent=260 // loop_header_branch
                %1075 = sbr.rel (%p1073) target = $region268
              $region265: #{custom-call.17} parent=260 // loop_body
                %v1079 = vld [vmem:[%s1077] sm:$0xff]
                %1080 = vst [vmem:[%s1078] sm:$0xff] %v1079
              $region266: #{custom-call.17} parent=260 // loop_footer
                %s1076 = sadd.s32 1, %s1072
              $region267: #{custom-call.17} parent=260 // loop_footer_branch
                %1071 = sbr.rel target = $region263
              $region268: #{custom-call.17} parent=260 // loop_exit
                _
            $region261: #{custom-call.17} parent=245 // pred_fallthru
              _
            // Predicated region
            $region269: #{custom-call.17} parent=245 // pred_check
              _
            $region270: #{custom-call.17} parent=245 // pred_check_branch
              %1082 = sbr.rel target = $region272
            $region271: #{custom-call.17} parent=245 // pred_region
              _
            $region272: #{custom-call.17} parent=245 // pred_fallthru
              _
          $region246: #{custom-call.17} parent=241 // pred_fallthru
            _
          // Predicated region
          $region247: #{custom-call.17} parent=241 // pred_check
            _
          $region248: #{custom-call.17} parent=241 // pred_check_branch
            %1057 = sbr.rel target = $region250
          $region249: #{custom-call.17} parent=241 // pred_region
            loop: start=0, step=1, limit=1
            $region251: #{custom-call.17} parent=249 // loop_pre_header
              _
            $region252: #{custom-call.17} parent=249 // loop_header
              %s1060 = sphi 0, %s1064
              %p1061 = scmp.ge.s32.totalorder %s1060, 1
              %s1065 = sphi %s963, %s963
              %s1066 = sphi %s1051, %s1051
            $region253: #{custom-call.17} parent=249 // loop_header_branch
              %1063 = sbr.rel (%p1061) target = $region257
            $region254: #{custom-call.17} parent=249 // loop_body
              %v1067 = vld [vmem:[%s1065] sm:$0xff]
              %1068 = vst [vmem:[%s1066] sm:$0xff] %v1067
            $region255: #{custom-call.17} parent=249 // loop_footer
              %s1064 = sadd.s32 1, %s1060
            $region256: #{custom-call.17} parent=249 // loop_footer_branch
              %1059 = sbr.rel target = $region252
            $region257: #{custom-call.17} parent=249 // loop_exit
              _
          $region250: #{custom-call.17} parent=241 // pred_fallthru
            _
        $region242: #{custom-call.17} parent=155 // pred_fallthru
          _
        %1083 = vnop
        %s1084 = smul.addr %s17, 8
        %s1085 = scalar_lea.vmem %s7, %s1084
        // Predicated region
        $region273: #{custom-call.17} parent=155 // pred_check
          _
        $region274: #{custom-call.17} parent=155 // pred_check_branch
          %1087 = sbr.rel (0) target = $region276
        $region275: #{custom-call.17} parent=155 // pred_region
          // Predicated region
          $region277: #{custom-call.17} parent=275 // pred_check
            _
          $region278: #{custom-call.17} parent=275 // pred_check_branch
            %1089 = sbr.rel (0) target = $region280
          $region279: #{custom-call.17} parent=275 // pred_region
            // Predicated region
            $region292: #{custom-call.17} parent=279 // pred_check
              _
            $region293: #{custom-call.17} parent=279 // pred_check_branch
              %1104 = sbr.rel (0) target = $region295
            $region294: #{custom-call.17} parent=279 // pred_region
              loop: start=0, step=1, limit=1
              $region296: #{custom-call.17} parent=294 // loop_pre_header
                _
              $region297: #{custom-call.17} parent=294 // loop_header
                %s1106 = sphi 0, %s1110
                %p1107 = scmp.ge.s32.totalorder %s1106, 1
                %s1111 = sphi %s967, %s967
                %s1112 = sphi %s1085, %s1085
              $region298: #{custom-call.17} parent=294 // loop_header_branch
                %1109 = sbr.rel (%p1107) target = $region302
              $region299: #{custom-call.17} parent=294 // loop_body
                %v1113 = vld [vmem:[%s1111] sm:$0xff]
                %1114 = vst [vmem:[%s1112] sm:$0xff] %v1113
              $region300: #{custom-call.17} parent=294 // loop_footer
                %s1110 = sadd.s32 1, %s1106
              $region301: #{custom-call.17} parent=294 // loop_footer_branch
                %1105 = sbr.rel target = $region297
              $region302: #{custom-call.17} parent=294 // loop_exit
                _
            $region295: #{custom-call.17} parent=279 // pred_fallthru
              _
            // Predicated region
            $region303: #{custom-call.17} parent=279 // pred_check
              _
            $region304: #{custom-call.17} parent=279 // pred_check_branch
              %1116 = sbr.rel target = $region306
            $region305: #{custom-call.17} parent=279 // pred_region
              _
            $region306: #{custom-call.17} parent=279 // pred_fallthru
              _
          $region280: #{custom-call.17} parent=275 // pred_fallthru
            _
          // Predicated region
          $region281: #{custom-call.17} parent=275 // pred_check
            _
          $region282: #{custom-call.17} parent=275 // pred_check_branch
            %1091 = sbr.rel target = $region284
          $region283: #{custom-call.17} parent=275 // pred_region
            loop: start=0, step=1, limit=1
            $region285: #{custom-call.17} parent=283 // loop_pre_header
              _
            $region286: #{custom-call.17} parent=283 // loop_header
              %s1094 = sphi 0, %s1098
              %p1095 = scmp.ge.s32.totalorder %s1094, 1
              %s1099 = sphi %s967, %s967
              %s1100 = sphi %s1085, %s1085
            $region287: #{custom-call.17} parent=283 // loop_header_branch
              %1097 = sbr.rel (%p1095) target = $region291
            $region288: #{custom-call.17} parent=283 // loop_body
              %v1101 = vld [vmem:[%s1099] sm:$0xff]
              %1102 = vst [vmem:[%s1100] sm:$0xff] %v1101
            $region289: #{custom-call.17} parent=283 // loop_footer
              %s1098 = sadd.s32 1, %s1094
            $region290: #{custom-call.17} parent=283 // loop_footer_branch
              %1093 = sbr.rel target = $region286
            $region291: #{custom-call.17} parent=283 // loop_exit
              _
          $region284: #{custom-call.17} parent=275 // pred_fallthru
            _
        $region276: #{custom-call.17} parent=155 // pred_fallthru
          _
        %1117 = vnop
        %s1118 = smul.addr %s17, 8
        %s1119 = scalar_lea.vmem %s8, %s1118
        // Predicated region
        $region307: #{custom-call.17} parent=155 // pred_check
          _
        $region308: #{custom-call.17} parent=155 // pred_check_branch
          %1121 = sbr.rel (0) target = $region310
        $region309: #{custom-call.17} parent=155 // pred_region
          // Predicated region
          $region311: #{custom-call.17} parent=309 // pred_check
            _
          $region312: #{custom-call.17} parent=309 // pred_check_branch
            %1123 = sbr.rel (0) target = $region314
          $region313: #{custom-call.17} parent=309 // pred_region
            // Predicated region
            $region326: #{custom-call.17} parent=313 // pred_check
              _
            $region327: #{custom-call.17} parent=313 // pred_check_branch
              %1138 = sbr.rel (0) target = $region329
            $region328: #{custom-call.17} parent=313 // pred_region
              loop: start=0, step=1, limit=1
              $region330: #{custom-call.17} parent=328 // loop_pre_header
                _
              $region331: #{custom-call.17} parent=328 // loop_header
                %s1140 = sphi 0, %s1144
                %p1141 = scmp.ge.s32.totalorder %s1140, 1
                %s1145 = sphi %s971, %s971
                %s1146 = sphi %s1119, %s1119
              $region332: #{custom-call.17} parent=328 // loop_header_branch
                %1143 = sbr.rel (%p1141) target = $region336
              $region333: #{custom-call.17} parent=328 // loop_body
                %v1147 = vld [vmem:[%s1145] sm:$0xff]
                %1148 = vst [vmem:[%s1146] sm:$0xff] %v1147
              $region334: #{custom-call.17} parent=328 // loop_footer
                %s1144 = sadd.s32 1, %s1140
              $region335: #{custom-call.17} parent=328 // loop_footer_branch
                %1139 = sbr.rel target = $region331
              $region336: #{custom-call.17} parent=328 // loop_exit
                _
            $region329: #{custom-call.17} parent=313 // pred_fallthru
              _
            // Predicated region
            $region337: #{custom-call.17} parent=313 // pred_check
              _
            $region338: #{custom-call.17} parent=313 // pred_check_branch
              %1150 = sbr.rel target = $region340
            $region339: #{custom-call.17} parent=313 // pred_region
              _
            $region340: #{custom-call.17} parent=313 // pred_fallthru
              _
          $region314: #{custom-call.17} parent=309 // pred_fallthru
            _
          // Predicated region
          $region315: #{custom-call.17} parent=309 // pred_check
            _
          $region316: #{custom-call.17} parent=309 // pred_check_branch
            %1125 = sbr.rel target = $region318
          $region317: #{custom-call.17} parent=309 // pred_region
            loop: start=0, step=1, limit=1
            $region319: #{custom-call.17} parent=317 // loop_pre_header
              _
            $region320: #{custom-call.17} parent=317 // loop_header
              %s1128 = sphi 0, %s1132
              %p1129 = scmp.ge.s32.totalorder %s1128, 1
              %s1133 = sphi %s971, %s971
              %s1134 = sphi %s1119, %s1119
            $region321: #{custom-call.17} parent=317 // loop_header_branch
              %1131 = sbr.rel (%p1129) target = $region325
            $region322: #{custom-call.17} parent=317 // loop_body
              %v1135 = vld [vmem:[%s1133] sm:$0xff]
              %1136 = vst [vmem:[%s1134] sm:$0xff] %v1135
            $region323: #{custom-call.17} parent=317 // loop_footer
              %s1132 = sadd.s32 1, %s1128
            $region324: #{custom-call.17} parent=317 // loop_footer_branch
              %1127 = sbr.rel target = $region320
            $region325: #{custom-call.17} parent=317 // loop_exit
              _
          $region318: #{custom-call.17} parent=309 // pred_fallthru
            _
        $region310: #{custom-call.17} parent=155 // pred_fallthru
          _
        %1151 = vnop
        %s1152 = smul.addr %s17, 8
        %s1153 = scalar_lea.vmem %s9, %s1152
        // Predicated region
        $region341: #{custom-call.17} parent=155 // pred_check
          _
        $region342: #{custom-call.17} parent=155 // pred_check_branch
          %1155 = sbr.rel (0) target = $region344
        $region343: #{custom-call.17} parent=155 // pred_region
          // Predicated region
          $region345: #{custom-call.17} parent=343 // pred_check
            _
          $region346: #{custom-call.17} parent=343 // pred_check_branch
            %1157 = sbr.rel (0) target = $region348
          $region347: #{custom-call.17} parent=343 // pred_region
            // Predicated region
            $region360: #{custom-call.17} parent=347 // pred_check
              _
            $region361: #{custom-call.17} parent=347 // pred_check_branch
              %1172 = sbr.rel (0) target = $region363
            $region362: #{custom-call.17} parent=347 // pred_region
              loop: start=0, step=1, limit=1
              $region364: #{custom-call.17} parent=362 // loop_pre_header
                _
              $region365: #{custom-call.17} parent=362 // loop_header
                %s1174 = sphi 0, %s1178
                %p1175 = scmp.ge.s32.totalorder %s1174, 1
                %s1179 = sphi %s975, %s975
                %s1180 = sphi %s1153, %s1153
              $region366: #{custom-call.17} parent=362 // loop_header_branch
                %1177 = sbr.rel (%p1175) target = $region370
              $region367: #{custom-call.17} parent=362 // loop_body
                %v1181 = vld [vmem:[%s1179] sm:$0xff]
                %1182 = vst [vmem:[%s1180] sm:$0xff] %v1181
              $region368: #{custom-call.17} parent=362 // loop_footer
                %s1178 = sadd.s32 1, %s1174
              $region369: #{custom-call.17} parent=362 // loop_footer_branch
                %1173 = sbr.rel target = $region365
              $region370: #{custom-call.17} parent=362 // loop_exit
                _
            $region363: #{custom-call.17} parent=347 // pred_fallthru
              _
            // Predicated region
            $region371: #{custom-call.17} parent=347 // pred_check
              _
            $region372: #{custom-call.17} parent=347 // pred_check_branch
              %1184 = sbr.rel target = $region374
            $region373: #{custom-call.17} parent=347 // pred_region
              _
            $region374: #{custom-call.17} parent=347 // pred_fallthru
              _
          $region348: #{custom-call.17} parent=343 // pred_fallthru
            _
          // Predicated region
          $region349: #{custom-call.17} parent=343 // pred_check
            _
          $region350: #{custom-call.17} parent=343 // pred_check_branch
            %1159 = sbr.rel target = $region352
          $region351: #{custom-call.17} parent=343 // pred_region
            loop: start=0, step=1, limit=1
            $region353: #{custom-call.17} parent=351 // loop_pre_header
              _
            $region354: #{custom-call.17} parent=351 // loop_header
              %s1162 = sphi 0, %s1166
              %p1163 = scmp.ge.s32.totalorder %s1162, 1
              %s1167 = sphi %s975, %s975
              %s1168 = sphi %s1153, %s1153
            $region355: #{custom-call.17} parent=351 // loop_header_branch
              %1165 = sbr.rel (%p1163) target = $region359
            $region356: #{custom-call.17} parent=351 // loop_body
              %v1169 = vld [vmem:[%s1167] sm:$0xff]
              %1170 = vst [vmem:[%s1168] sm:$0xff] %v1169
            $region357: #{custom-call.17} parent=351 // loop_footer
              %s1166 = sadd.s32 1, %s1162
            $region358: #{custom-call.17} parent=351 // loop_footer_branch
              %1161 = sbr.rel target = $region354
            $region359: #{custom-call.17} parent=351 // loop_exit
              _
          $region352: #{custom-call.17} parent=343 // pred_fallthru
            _
        $region344: #{custom-call.17} parent=155 // pred_fallthru
          _
        %1185 = vnop
      $region156: #{custom-call.17} parent=5 // pred_fallthru
        _
      %p1186 = scmp.le.s32.totalorder 2, %s12
      // Predicated region
      $region375: #{custom-call.17} parent=5 // pred_check
        %p1187 = pneg %p1186
      $region376: #{custom-call.17} parent=5 // pred_check_branch
        %1189 = sbr.rel (%p1187) target = $region378
      $region377: #{custom-call.17} parent=5 // pred_region
        %s1190 = ssub.s32 %s12, 2
        // Predicated region
        $region379: #{custom-call.17} parent=377 // pred_check
          %p1191 = pneg %p43
        $region380: #{custom-call.17} parent=377 // pred_check_branch
          %1193 = sbr.rel (%p1191) target = $region382
        $region381: #{custom-call.17} parent=377 // pred_region
          %s1194 = sand.u32 %s28, 1
          %s1195 = sand.u32 %s28, 1
          %s1196 = smul.addr %s1195, 2
          %s1197 = scalar_lea.vmem [#allocation5], %s1196
        $region382: #{custom-call.17} parent=377 // pred_fallthru
          _
        // Predicated region
        $region383: #{custom-call.17} parent=377 // pred_check
          %p1198 = pneg %p71
        $region384: #{custom-call.17} parent=377 // pred_check_branch
          %1200 = sbr.rel (%p1198) target = $region386
        $region385: #{custom-call.17} parent=377 // pred_region
          %s1201 = sand.u32 %s56, 1
          %s1202 = sand.u32 %s56, 1
          %s1203 = smul.addr %s1202, 2
          %s1204 = scalar_lea.vmem [#allocation7], %s1203
        $region386: #{custom-call.17} parent=377 // pred_fallthru
          _
        %s1205 = sand.u32 %s18, 1
        %s1206 = sand.u32 %s18, 1
        %s1207 = smul.addr %s1206, 8
        %s1208 = scalar_lea.vmem [#allocation8], %s1207
        %s1209 = sand.u32 %s18, 1
        %s1210 = sand.u32 %s18, 1
        %s1211 = smul.addr %s1210, 8
        %s1212 = scalar_lea.vmem [#allocation9], %s1211
        %s1213 = sand.u32 %s18, 1
        %s1214 = sand.u32 %s18, 1
        %s1215 = smul.addr %s1214, 8
        %s1216 = scalar_lea.vmem [#allocation10], %s1215
        %s1217 = sand.u32 %s18, 1
        %s1218 = sand.u32 %s18, 1
        %s1219 = smul.addr %s1218, 8
        %s1220 = scalar_lea.vmem [#allocation11], %s1219
      $region378: #{custom-call.17} parent=5 // pred_fallthru
        _
    $region6: #{custom-call.17} parent=1 // loop_footer
      %s16 = sadd.s32 1, %s12
    $region7: #{custom-call.17} parent=1 // loop_footer_branch
      %11 = sbr.rel target = $region3
    $region8: #{custom-call.17} parent=1 // loop_exit
      _

// kernel: reverse
$region0: #{reverse}
  %s0 = inlined_call_operand.vmem [shape: f32[2,16], index: 0, kind: input, shape index: {}]
  %s1 = inlined_call_operand.vmem [shape: f32[2,16], index: 1, kind: output, shape index: {}]
  %v2 = vlaneseq
  %v3 = vsub.s32 15, %v2
  %4 = vset.pattern.permute.xlu0 %v3
  $region1: #{reverse} parent=0
    #allocation0 [shape = 'u8[4096]{0}', space=vmem, size = 0x1000, scoped, tag = 'operand span for operand 0']
    #allocation1 [shape = 'u8[1024]{0}', space=vmem, size = 0x400, scoped, tag = 'packed  for operand 0']
    #allocation2 [shape = 'u8[4096]{0}', space=vmem, size = 0x1000, scoped, tag = 'operand span for operand 1']
    #allocation3 [shape = 'u8[1024]{0}', space=vmem, size = 0x400, scoped, tag = 'packed  for operand 1']
    // Predicated region
    $region2: #{reverse} parent=1 // pred_check
      _
    $region3: #{reverse} parent=1 // pred_check_branch
      %6 = sbr.rel (0) target = $region5
    $region4: #{reverse} parent=1 // pred_region
      // Predicated region
      $region6: #{reverse} parent=4 // pred_check
        _
      $region7: #{reverse} parent=4 // pred_check_branch
        %8 = sbr.rel target = $region9
      $region8: #{reverse} parent=4 // pred_region
        // Predicated region
        $region21: #{reverse} parent=8 // pred_check
          _
        $region22: #{reverse} parent=8 // pred_check_branch
          %23 = sbr.rel (0) target = $region24
        $region23: #{reverse} parent=8 // pred_region
          loop: start=0, step=1, limit=1
          $region25: #{reverse} parent=23 // loop_pre_header
            _
          $region26: #{reverse} parent=23 // loop_header
            %s26 = sphi 0, %s30
            %p27 = scmp.ge.s32.totalorder %s26, 1
            %s31 = sphi %s0, %s0
            %s32 = sphi [#allocation1], [#allocation1]
          $region27: #{reverse} parent=23 // loop_header_branch
            %29 = sbr.rel (%p27) target = $region31
          $region28: #{reverse} parent=23 // loop_body
            %v33 = vld [vmem:[%s31] sm:$0x3]
            %34 = vst [vmem:[%s32] sm:$0x3] %v33
          $region29: #{reverse} parent=23 // loop_footer
            %s30 = sadd.s32 1, %s26
          $region30: #{reverse} parent=23 // loop_footer_branch
            %25 = sbr.rel target = $region26
          $region31: #{reverse} parent=23 // loop_exit
            _
        $region24: #{reverse} parent=8 // pred_fallthru
          _
      $region9: #{reverse} parent=4 // pred_fallthru
        _
      // Predicated region
      $region10: #{reverse} parent=4 // pred_check
        _
      $region11: #{reverse} parent=4 // pred_check_branch
        %10 = sbr.rel (0) target = $region13
      $region12: #{reverse} parent=4 // pred_region
        loop: start=0, step=1, limit=1
        $region14: #{reverse} parent=12 // loop_pre_header
          _
        $region15: #{reverse} parent=12 // loop_header
          %s13 = sphi 0, %s17
          %p14 = scmp.ge.s32.totalorder %s13, 1
          %s18 = sphi %s0, %s0
          %s19 = sphi [#allocation1], [#allocation1]
        $region16: #{reverse} parent=12 // loop_header_branch
          %16 = sbr.rel (%p14) target = $region20
        $region17: #{reverse} parent=12 // loop_body
          %v20 = vld [vmem:[%s18] sm:$0x3]
          %21 = vst [vmem:[%s19] sm:$0x3] %v20
        $region18: #{reverse} parent=12 // loop_footer
          %s17 = sadd.s32 1, %s13
        $region19: #{reverse} parent=12 // loop_footer_branch
          %12 = sbr.rel target = $region15
        $region20: #{reverse} parent=12 // loop_exit
          _
      $region13: #{reverse} parent=4 // pred_fallthru
        _
    $region5: #{reverse} parent=1 // pred_fallthru
      _
    %35 = vnop
    %s37 = sshllo.u32 0, 2
    %v38 = vld [vmem:[#allocation1] sm:%s37]
    %39 = vst [vmem:[#allocation0] sm:%s37] %v38
    %v40 = vld [vmem:[#allocation0] sm:$0xff]
    %41 = vperm.xlu0 %4, %v40
    %v42 = vpop.permute.xlu0 %41
    %43 = vst [vmem:[#allocation2] sm:$0xff] %v42
    %s45 = sshllo.u32 0, 2
    %v47 = vld [vmem:[#allocation2] sm:%s45]
    %s48 = sshllo.u32 0, 2
    %49 = vst [vmem:[#allocation3] sm:%s48] %v47
    // Predicated region
    $region32: #{reverse} parent=1 // pred_check
      _
    $region33: #{reverse} parent=1 // pred_check_branch
      %51 = sbr.rel (0) target = $region35
    $region34: #{reverse} parent=1 // pred_region
      // Predicated region
      $region36: #{reverse} parent=34 // pred_check
        _
      $region37: #{reverse} parent=34 // pred_check_branch
        %53 = sbr.rel target = $region39
      $region38: #{reverse} parent=34 // pred_region
        // Predicated region
        $region51: #{reverse} parent=38 // pred_check
          _
        $region52: #{reverse} parent=38 // pred_check_branch
          %68 = sbr.rel (0) target = $region54
        $region53: #{reverse} parent=38 // pred_region
          loop: start=0, step=1, limit=1
          $region55: #{reverse} parent=53 // loop_pre_header
            _
          $region56: #{reverse} parent=53 // loop_header
            %s71 = sphi 0, %s75
            %p72 = scmp.ge.s32.totalorder %s71, 1
            %s76 = sphi [#allocation3], [#allocation3]
            %s77 = sphi %s1, %s1
          $region57: #{reverse} parent=53 // loop_header_branch
            %74 = sbr.rel (%p72) target = $region61
          $region58: #{reverse} parent=53 // loop_body
            %v78 = vld [vmem:[%s76] sm:$0x3]
            %79 = vst [vmem:[%s77] sm:$0x3] %v78
          $region59: #{reverse} parent=53 // loop_footer
            %s75 = sadd.s32 1, %s71
          $region60: #{reverse} parent=53 // loop_footer_branch
            %70 = sbr.rel target = $region56
          $region61: #{reverse} parent=53 // loop_exit
            _
        $region54: #{reverse} parent=38 // pred_fallthru
          _
      $region39: #{reverse} parent=34 // pred_fallthru
        _
      // Predicated region
      $region40: #{reverse} parent=34 // pred_check
        _
      $region41: #{reverse} parent=34 // pred_check_branch
        %55 = sbr.rel (0) target = $region43
      $region42: #{reverse} parent=34 // pred_region
        loop: start=0, step=1, limit=1
        $region44: #{reverse} parent=42 // loop_pre_header
          _
        $region45: #{reverse} parent=42 // loop_header
          %s58 = sphi 0, %s62
          %p59 = scmp.ge.s32.totalorder %s58, 1
          %s63 = sphi [#allocation3], [#allocation3]
          %s64 = sphi %s1, %s1
        $region46: #{reverse} parent=42 // loop_header_branch
          %61 = sbr.rel (%p59) target = $region50
        $region47: #{reverse} parent=42 // loop_body
          %v65 = vld [vmem:[%s63] sm:$0x3]
          %66 = vst [vmem:[%s64] sm:$0x3] %v65
        $region48: #{reverse} parent=42 // loop_footer
          %s62 = sadd.s32 1, %s58
        $region49: #{reverse} parent=42 // loop_footer_branch
          %57 = sbr.rel target = $region45
        $region50: #{reverse} parent=42 // loop_exit
          _
      $region43: #{reverse} parent=34 // pred_fallthru
        _
    $region35: #{reverse} parent=1 // pred_fallthru
      _
    %80 = vnop

// kernel: custom-call.10
$region0: #{custom-call.10}
  %s0 = inlined_call_operand.vmem [shape: f32[2,16,16], index: 0, kind: input, shape index: {}]
  %s1 = inlined_call_operand.vmem [shape: f32[2,16,16], index: 1, kind: output, shape index: {0}]
  %s2 = inlined_call_operand.vmem [shape: f32[2,16], index: 2, kind: output, shape index: {1}]
  %3 = xla_tuple %s1, %s2
  $region1: #{custom-call.10} parent=0
    #allocation0 [shape = 'u8[16384]{0}', space=vmem, size = 0x4000, scoped, tag = 'operand span for operand 0']
    #allocation1 [shape = 'u8[16384]{0}', space=vmem, size = 0x4000, scoped, tag = 'operand span for operand 1']
    #allocation2 [shape = 'u8[4096]{0}', space=vmem, size = 0x1000, scoped, tag = 'operand span for operand 2']
    #allocation3 [shape = 'u8[2048]{0}', space=vmem, size = 0x800, scoped, tag = 'packed  for operand 2']
    loop: start=0, step=1, limit=4
    $region2: #{custom-call.10} parent=1 // loop_pre_header
      _
    $region3: #{custom-call.10} parent=1 // loop_header
      %s5 = sphi 0, %s9
      %p6 = scmp.ge.s32.totalorder %s5, 4
      %s12 = sphi 0, %s31
      %s13 = sphi 0, %s27
      %s14 = sphi 0, %s23
      %s15 = sphi 0, %s12
      %s16 = sphi 0, %s13
      %s17 = sphi 0, %s14
      %s18 = sphi 0, %s15
      %s19 = sphi 0, %s16
      %s20 = sphi 0, %s17
      %s46 = sphi 0, %s48
      %s49 = sphi 0, %s46
      %s50 = sphi 0, %s49
      %s66 = sphi 0, %s50
    $region4: #{custom-call.10} parent=1 // loop_header_branch
      %8 = sbr.rel (%p6) target = $region8
    $region5: #{custom-call.10} parent=1 // loop_body
      %s10 = ssub.s32 %s5, 1
      %s11 = ssub.s32 %s5, 2
      %s21 = sadd.s32 1, %s14
      %p22 = scmp.ge.s32.totalorder %s21, 1
      %s23 = scalar_select %p22, 0, %s21
      %s24 = sadd.s32 1, %s13
      %s25 = scalar_select %p22, %s24, %s13
      %p26 = scmp.ge.s32.totalorder %s25, 1
      %s27 = scalar_select %p26, 0, %s25
      %s28 = sadd.s32 1, %s12
      %s29 = scalar_select %p26, %s28, %s12
      %p30 = scmp.ge.s32.totalorder %s29, 2
      %s31 = scalar_select %p30, 0, %s29
      %p32 = scmp.lt.s32.totalorder %s12, 0
      %s33 = ssub.s32 0, %s12
      %s34 = scalar_select %p32, %s33, %s12
      %s35 = sshrl.u32 %s34, 3
      %s36 = ssub.s32 0, %s35
      %s37 = scalar_select %p32, %s36, %s35
      %p38 = scmp.lt.s32.totalorder %s31, 0
      %s39 = ssub.s32 0, %s31
      %s40 = scalar_select %p38, %s39, %s31
      %s41 = sshrl.u32 %s40, 3
      %s42 = ssub.s32 0, %s41
      %s43 = scalar_select %p38, %s42, %s41
      %s44 = ssub.s32 %s37, %s43
      %p45 = scmp.eq.s32.totalorder %s44, 0
      %s47 = sadd.s32 %s46, 1
      %s48 = scalar_select %p45, %s46, %s47
      %p51 = pneg %p45
      %p52 = scmp.eq.s32.totalorder %s5, 1
      %p53 = por %p51, %p52
      %p54 = scmp.ne.s32.totalorder %s46, %s49
      %p55 = scmp.eq.s32.totalorder %s5, 0
      %p56 = por %p54, %p55
      %p57 = scmp.ne.s32.totalorder %s46, %s49
      %p58 = scmp.eq.s32.totalorder %s10, 1
      %p59 = por %p57, %p58
      %p60 = scmp.ne.s32.totalorder %s49, %s50
      %p61 = scmp.eq.s32.totalorder %s10, 0
      %p62 = por %p60, %p61
      %p63 = scmp.ne.s32.totalorder %s49, %s50
      %p64 = scmp.eq.s32.totalorder %s11, 1
      %p65 = por %p63, %p64
      %p67 = scmp.ne.s32.totalorder %s50, %s66
      %p68 = scmp.eq.s32.totalorder %s11, 0
      %p69 = por %p67, %p68
      %p70 = scmp.le.s32.totalorder 1, %s5
      %p71 = scmp.lt.s32.totalorder %s5, 3
      %p72 = pnand %p70, %p71
      %p73 = pneg %p72
      // Predicated region
      $region9: #{custom-call.10} parent=5 // pred_check
        _
      $region10: #{custom-call.10} parent=5 // pred_check_branch
        %75 = sbr.rel (%p72) target = $region12
      $region11: #{custom-call.10} parent=5 // pred_region
        %s76 = ssub.s32 %s5, 1
      $region12: #{custom-call.10} parent=5 // pred_fallthru
        _
      %p77 = scmp.lt.s32.totalorder %s5, 2
      // Predicated region
      $region13: #{custom-call.10} parent=5 // pred_check
        %p78 = pneg %p77
      $region14: #{custom-call.10} parent=5 // pred_check_branch
        %80 = sbr.rel (%p78) target = $region16
      $region15: #{custom-call.10} parent=5 // pred_region
        %s81 = sand.u32 %s5, 1
        %s82 = sand.u32 %s5, 1
        %s83 = smul.addr %s82, 16
        %s84 = scalar_lea.vmem [#allocation0], %s83
        %s85 = smul.u32 2, %s13
        %s86 = sadd.s32 %s14, %s85
        %s87 = smul.addr %s12, 2
        %s88 = sadd.s32 %s86, %s87
        %s89 = smul.addr %s88, 8
        %s90 = scalar_lea.vmem %s0, %s89
        // Predicated region
        $region17: #{custom-call.10} parent=15 // pred_check
          _
        $region18: #{custom-call.10} parent=15 // pred_check_branch
          %92 = sbr.rel (0) target = $region20
        $region19: #{custom-call.10} parent=15 // pred_region
          // Predicated region
          $region21: #{custom-call.10} parent=19 // pred_check
            _
          $region22: #{custom-call.10} parent=19 // pred_check_branch
            %94 = sbr.rel (0) target = $region24
          $region23: #{custom-call.10} parent=19 // pred_region
            // Predicated region
            $region36: #{custom-call.10} parent=23 // pred_check
              _
            $region37: #{custom-call.10} parent=23 // pred_check_branch
              %111 = sbr.rel (0) target = $region39
            $region38: #{custom-call.10} parent=23 // pred_region
              loop: start=0, step=1, limit=1
              $region40: #{custom-call.10} parent=38 // loop_pre_header
                _
              $region41: #{custom-call.10} parent=38 // loop_header
                %s113 = sphi 0, %s117
                %p114 = scmp.ge.s32.totalorder %s113, 1
                %s118 = sphi %s90, %s90
                %s119 = sphi %s84, %s84
              $region42: #{custom-call.10} parent=38 // loop_header_branch
                %116 = sbr.rel (%p114) target = $region46
              $region43: #{custom-call.10} parent=38 // loop_body
                %v120 = vld [vmem:[%s118] sm:$0xff]
                %121 = vst [vmem:[%s119] sm:$0xff] %v120
                %v122 = vld [vmem:[%s118 + $0x8] sm:$0xff]
                %123 = vst [vmem:[%s119 + $0x8] sm:$0xff] %v122
              $region44: #{custom-call.10} parent=38 // loop_footer
                %s117 = sadd.s32 1, %s113
              $region45: #{custom-call.10} parent=38 // loop_footer_branch
                %112 = sbr.rel target = $region41
              $region46: #{custom-call.10} parent=38 // loop_exit
                _
            $region39: #{custom-call.10} parent=23 // pred_fallthru
              _
            // Predicated region
            $region47: #{custom-call.10} parent=23 // pred_check
              _
            $region48: #{custom-call.10} parent=23 // pred_check_branch
              %125 = sbr.rel target = $region50
            $region49: #{custom-call.10} parent=23 // pred_region
              _
            $region50: #{custom-call.10} parent=23 // pred_fallthru
              _
          $region24: #{custom-call.10} parent=19 // pred_fallthru
            _
          // Predicated region
          $region25: #{custom-call.10} parent=19 // pred_check
            _
          $region26: #{custom-call.10} parent=19 // pred_check_branch
            %96 = sbr.rel target = $region28
          $region27: #{custom-call.10} parent=19 // pred_region
            loop: start=0, step=1, limit=1
            $region29: #{custom-call.10} parent=27 // loop_pre_header
              _
            $region30: #{custom-call.10} parent=27 // loop_header
              %s99 = sphi 0, %s103
              %p100 = scmp.ge.s32.totalorder %s99, 1
              %s104 = sphi %s90, %s90
              %s105 = sphi %s84, %s84
            $region31: #{custom-call.10} parent=27 // loop_header_branch
              %102 = sbr.rel (%p100) target = $region35
            $region32: #{custom-call.10} parent=27 // loop_body
              %v106 = vld [vmem:[%s104] sm:$0xff]
              %107 = vst [vmem:[%s105] sm:$0xff] %v106
              %v108 = vld [vmem:[%s104 + $0x8] sm:$0xff]
              %109 = vst [vmem:[%s105 + $0x8] sm:$0xff] %v108
            $region33: #{custom-call.10} parent=27 // loop_footer
              %s103 = sadd.s32 1, %s99
            $region34: #{custom-call.10} parent=27 // loop_footer_branch
              %98 = sbr.rel target = $region30
            $region35: #{custom-call.10} parent=27 // loop_exit
              _
          $region28: #{custom-call.10} parent=19 // pred_fallthru
            _
        $region20: #{custom-call.10} parent=15 // pred_fallthru
          _
        %126 = vnop
      $region16: #{custom-call.10} parent=5 // pred_fallthru
        _
      %p127 = scmp.le.s32.totalorder 1, %s5
      %p128 = scmp.lt.s32.totalorder %s5, 3
      %p129 = pnand %p127, %p128
      %p130 = pneg %p129
      // Predicated region
      $region51: #{custom-call.10} parent=5 // pred_check
        _
      $region52: #{custom-call.10} parent=5 // pred_check_branch
        %132 = sbr.rel (%p129) target = $region54
      $region53: #{custom-call.10} parent=5 // pred_region
        #allocation4 [shape = 'f32[16,128]{1,0}', space=vmem, size = 0x2000, scoped, tag = 'scratch for Householder reflectors']
        %s133 = ssub.s32 %s5, 1
        %s134 = sand.u32 %s10, 1
        %s135 = sand.u32 %s10, 1
        %s136 = smul.addr %s135, 16
        %s137 = scalar_lea.vmem [#allocation0], %s136
        %s138 = sand.u32 %s10, 1
        %s139 = sand.u32 %s10, 1
        %s140 = smul.addr %s139, 16
        %s141 = scalar_lea.vmem [#allocation0], %s140
        %s142 = sand.u32 %s10, 1
        %s143 = sand.u32 %s10, 1
        %s144 = smul.addr %s143, 16
        %s145 = scalar_lea.vmem [#allocation1], %s144
        %p146 = pneg %p62
        %p147 = pneg %p59
        %s148 = sand.u32 %s49, 1
        %s149 = sand.u32 %s49, 1
        %s150 = smul.addr %s149, 2
        %s151 = scalar_lea.vmem [#allocation3], %s150
        %s152 = smul.u32 2, %s16
        %s153 = smul.u32 2, %s16
        %p154 = scmp.lt.s32.totalorder %s15, 0
        %s155 = ssub.s32 0, %s15
        %s156 = scalar_select %p154, %s155, %s15
        %s157 = sshrl.u32 %s156, 3
        %s158 = ssub.s32 0, %s157
        %s159 = scalar_select %p154, %s158, %s157
        %s160 = sand.u32 %s15, 7
        %s161 = scalar_lea.vmem [#allocation2], %s160
        %v162 = vld [vmem:[%s137] sm:$0xff]
        %163 = vst [vmem:[%s145] sm:$0xff] %v162
        %s164 = scalar_lea.vmem %s145, 8 [#allocation1]
        %s165 = scalar_lea.vmem %s137, 8 [#allocation0]
        %v166 = vld [vmem:[%s165] sm:$0xff]
        %167 = vst [vmem:[%s164] sm:$0xff] %v166
        %168 = vst [vmem:[%s161] sm:$0x1] 0.0
        loop: start=0, step=1, limit=16
        $region55: #{custom-call.10} parent=53 // loop_pre_header
          _
        $region56: #{custom-call.10} parent=53 // loop_header
          %s170 = sphi 0, %s174
          %p171 = scmp.ge.s32.totalorder %s170, 16
        $region57: #{custom-call.10} parent=53 // loop_header_branch
          %173 = sbr.rel (%p171) target = $region61
        $region58: #{custom-call.10} parent=53 // loop_body
          %v175 = vld [vmem:[%s145] sm:$0xff]
          %v176 = vlaneseq
          %v177 = vshrl.u32 %v176, 7
          %v179 = vstv %s170
          %vm180 = vcmp.gt.s32.totalorder %v177, %v179
          %v181 = vsel %vm180, %v175, 0.0
          %v182 = vmul.f32 %v181, %v181
          %s183 = scalar_lea.vmem %s145, 8 [#allocation1]
          %v184 = vld [vmem:[%s183] sm:$0xff]
          %v185 = vlaneseq
          %v186 = vshrl.u32 %v185, 7
          %v187 = vadd.s32 %v186, 8
          %v188 = vstv %s170
          %vm189 = vcmp.gt.s32.totalorder %v187, %v188
          %vm190 = vcmp.lt.s32.totalorder %v187, 16
          %vm191 = vmand %vm189, %vm190
          %v192 = vsel %vm191, %v184, 0.0
          %v193 = vmul.f32 %v192, %v192
          %v194 = vadd.f32 %v182, %v193
          %v195 = vrot.slane %v194, 4
          %v196 = vadd.f32 %v194, %v195
          %v197 = vrot.slane %v196, 2
          %v198 = vadd.f32 %v196, %v197
          %v199 = vrot.slane %v198, 1
          %v200 = vadd.f32 %v198, %v199
          %v201 = vrsqrt.pop %v200
          %v202 = vmul.f32 %v200, %v201
          %vm203 = vcmp.eq.f32.partialorder %v200, inf
          %v204 = vsel %vm203, %v200, %v202
          %vm205 = vcmp.eq.f32.partialorder %v200, 0.0
          %v206 = vand.u32 %v200, 2147483648
          %v207 = vsel %vm205, %v206, %v204
          %vm208 = vcmp.eq.f32.partialorder %v200, 0.0
          %s209 = sshrl.u32 %s170, 3
          %s210 = sand.u32 %s170, 7
          %s211 = smul.addr %s209, 8
          %s212 = sadd.s32 %s210, %s211
          %s213 = scalar_lea.vmem %s145, %s212 [#allocation1]
          %v214 = vld [vmem:[%s213] ss:$0 sm:$0xff]
          %v215 = vand.u32 2147483647, %v214
          %v216 = vmax.f32 %v215, 0.0
          %v217 = vand.u32 2147483647, %v207
          %v218 = vmax.f32 %v216, %v217
          %v219 = vrcp.pop %v218
          %v220 = vmul.f32 %v215, %v219
          %v221 = vmul.f32 %v220, %v220
          %v222 = vrcp.pop %v218
          %v223 = vmul.f32 0.0, %v222
          %v224 = vmul.f32 %v223, %v223
          %v225 = vadd.f32 %v221, %v224
          %v226 = vrcp.pop %v218
          %v227 = vmul.f32 %v217, %v226
          %v228 = vmul.f32 %v227, %v227
          %v229 = vadd.f32 %v225, %v228
          %vm230 = vcmp.eq.f32.partialorder %v218, 0.0
          %v231 = vrsqrt.pop %v229
          %v232 = vmul.f32 %v229, %v231
          %vm233 = vcmp.eq.f32.partialorder %v229, inf
          %v234 = vsel %vm233, %v229, %v232
          %vm235 = vcmp.eq.f32.partialorder %v229, 0.0
          %v236 = vand.u32 %v229, 2147483648
          %v237 = vsel %vm235, %v236, %v234
          %v238 = vmul.f32 %v218, %v237
          %v239 = vsel %vm230, 0.0, %v238
          %vm240 = vcmp.lt.f32.partialorder %v214, 0.0
          %v241 = vxor.u32 %v239, 2147483648
          %v242 = vsel %vm240, %v239, %v241
          %v243 = vsub.f32 %v242, %v214
          %v244 = vrcp.pop %v242
          %v245 = vmul.f32 %v243, %v244
          %v246 = vsel %vm208, %v214, %v242
          %v247 = vsel %vm208, 0.0, %v245
          %v248 = vsub.f32 %v214, %v246
          %s249 = smov %s145
          %v250 = vlaneseq
          %v251 = vshrl.u32 %v250, 7
          %v252 = vmov %v251
          %v253 = vld [vmem:[%s249] sm:$0xff]
          %v255 = vstv %s170
          %vm256 = vcmp.gt.s32.totalorder %v252, %v255
          %v257 = vsel %vm256, %v253, 0.0
          %v258 = vrcp.pop %v248
          %v259 = vmul.f32 %v257, %v258
          %v260 = vsel %vm208, 0.0, %v259
          %v261 = vstv %s170
          %v262 = vlaneseq
          %v263 = vand.u32 %v262, 127
          %vm264 = vcmp.eq.s32.totalorder %v263, %v261
          %v265 = vsel %vm264, %v260, 0.0
          %266 = vadd.xlane.f32.xlu0 %v265
          %v267 = vpop.xlane.xlu0 %266
          %268 = vst [vmem:[#allocation4] sm:$0xff] %v267
          %s269 = scalar_lea.vmem %s249, 8
          %v270 = vld [vmem:[%s269] sm:$0xff]
          %v271 = vadd.s32 %v252, 8
          %v272 = vstv %s170
          %vm273 = vcmp.gt.s32.totalorder %v271, %v272
          %vm274 = vcmp.lt.s32.totalorder %v271, 16
          %vm275 = vmand %vm273, %vm274
          %v276 = vsel %vm275, %v270, 0.0
          %v277 = vrcp.pop %v248
          %v278 = vmul.f32 %v276, %v277
          %v279 = vsel %vm208, 0.0, %v278
          %v280 = vstv %s170
          %v281 = vlaneseq
          %v282 = vand.u32 %v281, 127
          %vm283 = vcmp.eq.s32.totalorder %v282, %v280
          %v284 = vsel %vm283, %v279, 0.0
          %285 = vadd.xlane.f32.xlu0 %v284
          %v286 = vpop.xlane.xlu0 %285
          %s287 = scalar_lea.vmem [#allocation4], 8
          %288 = vst [vmem:[%s287] sm:$0xff] %v286
          %s289 = scalar_lea.vmem [#allocation4], %s170
          %290 = vst [vmem:[%s289] sm:$0x1] 1.0
          %v291 = vstv %s170
          %v292 = vlaneseq
          %v293 = vand.u32 %v292, 127
          %vm294 = vcmp.eq.s32.totalorder %v293, %v291
          %v295 = vsel %vm294, %v247, 0.0
          %296 = vadd.xlane.f32.xlu0 %v295
          %v297 = vpop.xlane.xlu0 %296
          %v298 = vstv %s170
          %v299 = vlaneseq
          %v300 = vand.u32 %v299, 127
          %vm301 = vcmp.eq.s32.totalorder %v300, %v298
          %v302 = vld [vmem:[%s161] ss:$0 sm:$0xff]
          %v303 = vsel %vm301, %v297, %v302
          %304 = vst [vmem:[%s161] sm:$0x1] %v303
          %s305 = smov %s145
          %s306 = smov [#allocation4]
          %v307 = vlaneseq
          %v308 = vshrl.u32 %v307, 7
          %v309 = vmov %v308
          %v311 = vld [vmem:[%s306] sm:$0xff]
          %v312 = vld [vmem:[%s305] sm:$0xff]
          %v313 = vmul.f32 %v311, %v312
          %v314 = vadd.s32 %v309, 8
          %s315 = scalar_lea.vmem %s306, 8
          %v316 = vld [vmem:[%s315] sm:$0xff]
          %s317 = scalar_lea.vmem %s305, 8
          %v318 = vld [vmem:[%s317] sm:$0xff]
          %v319 = vmul.f32 %v316, %v318
          %vm320 = vcmp.lt.s32.totalorder %v314, 16
          %v321 = vsel %vm320, %v319, 0.0
          %v322 = vadd.f32 %v313, %v321
          %v323 = vrot.slane %v322, 4
          %v324 = vadd.f32 %v322, %v323
          %v325 = vrot.slane %v324, 2
          %v326 = vadd.f32 %v324, %v325
          %v327 = vrot.slane %v326, 1
          %v328 = vadd.f32 %v326, %v327
          %s329 = smov %s305
          %s330 = smov %s306
          %v331 = vlaneseq
          %v332 = vshrl.u32 %v331, 7
          %v333 = vmov %v332
          %v334 = vmul.f32 %v328, %v297
          %v336 = vlaneseq
          %v337 = vand.u32 %v336, 127
          %v338 = vld [vmem:[%s330] sm:$0xff]
          %v339 = vmul.f32 %v338, %v334
          %v340 = vld [vmem:[%s329] sm:$0xff]
          %v341 = vstv %s170
          %vm342 = vcmp.gt.s32.totalorder %v337, %v341
          %v343 = vsub.f32 %v340, %v339
          %v344 = vsel %vm342, %v343, %v340
          %v345 = vstv %s170
          %v346 = vlaneseq
          %v347 = vand.u32 %v346, 127
          %vm348 = vcmp.eq.s32.totalorder %v347, %v345
          %v349 = vstv %s170
          %vm350 = vcmp.ge.s32.totalorder %v333, %v349
          %vm351 = vmand %vm348, %vm350
          %v352 = vsel %vm351, %v338, %v344
          %353 = vst [vmem:[%s329] sm:$0xff] %v352
          %v354 = vadd.s32 %v333, 8
          %v355 = vlaneseq
          %v356 = vand.u32 %v355, 127
          %s357 = scalar_lea.vmem %s330, 8
          %v358 = vld [vmem:[%s357] sm:$0xff]
          %v359 = vmul.f32 %v358, %v334
          %s360 = scalar_lea.vmem %s329, 8
          %v361 = vld [vmem:[%s360] sm:$0xff]
          %v362 = vstv %s170
          %vm363 = vcmp.gt.s32.totalorder %v356, %v362
          %v364 = vsub.f32 %v361, %v359
          %v365 = vsel %vm363, %v364, %v361
          %v366 = vstv %s170
          %v367 = vlaneseq
          %v368 = vand.u32 %v367, 127
          %vm369 = vcmp.eq.s32.totalorder %v368, %v366
          %v370 = vstv %s170
          %vm371 = vcmp.ge.s32.totalorder %v354, %v370
          %vm372 = vmand %vm369, %vm371
          %v373 = vsel %vm372, %v358, %v365
          %374 = vst [vmem:[%s360] sm:$0xff] %v373
          %s375 = scalar_lea.vmem %s329, %s170
          %v376 = vld [vmem:[%s375] ss:$0 sm:$0xff]
          %v377 = vstv %s170
          %v378 = vlaneseq
          %v379 = vand.u32 %v378, 127
          %vm380 = vcmp.eq.s32.totalorder %v379, %v377
          %v381 = vsel %vm380, %v246, %v376
          %382 = vst [vmem:[%s375] sm:$0x1] %v381
        $region59: #{custom-call.10} parent=53 // loop_footer
          %s174 = sadd.s32 1, %s170
        $region60: #{custom-call.10} parent=53 // loop_footer_branch
          %169 = sbr.rel target = $region56
        $region61: #{custom-call.10} parent=53 // loop_exit
          _
        %s384 = sshllo.u32 0, 2
        %v386 = vld [vmem:[#allocation2] sm:%s384]
        %s387 = sshllo.u32 0, 2
        %388 = vst [vmem:[%s151] sm:%s387] %v386
        %s389 = sand.u32 %s10, 1
        %s390 = sand.u32 %s10, 1
        %s391 = smul.addr %s390, 16
        %s392 = scalar_lea.vmem [#allocation1], %s391
        %s393 = sand.u32 %s49, 1
        %s394 = sand.u32 %s49, 1
        %s395 = smul.addr %s394, 2
        %s396 = scalar_lea.vmem [#allocation3], %s395
        %s397 = smul.u32 2, %s16
        %s398 = sadd.s32 %s17, %s397
        %s399 = smul.addr %s15, 2
        %s400 = sadd.s32 %s398, %s399
        %s401 = smul.addr %s400, 8
        %s402 = scalar_lea.vmem %s1, %s401
        // Predicated region
        $region62: #{custom-call.10} parent=53 // pred_check
          _
        $region63: #{custom-call.10} parent=53 // pred_check_branch
          %404 = sbr.rel (0) target = $region65
        $region64: #{custom-call.10} parent=53 // pred_region
          // Predicated region
          $region66: #{custom-call.10} parent=64 // pred_check
            _
          $region67: #{custom-call.10} parent=64 // pred_check_branch
            %406 = sbr.rel (0) target = $region69
          $region68: #{custom-call.10} parent=64 // pred_region
            // Predicated region
            $region81: #{custom-call.10} parent=68 // pred_check
              _
            $region82: #{custom-call.10} parent=68 // pred_check_branch
              %423 = sbr.rel (0) target = $region84
            $region83: #{custom-call.10} parent=68 // pred_region
              loop: start=0, step=1, limit=1
              $region85: #{custom-call.10} parent=83 // loop_pre_header
                _
              $region86: #{custom-call.10} parent=83 // loop_header
                %s425 = sphi 0, %s429
                %p426 = scmp.ge.s32.totalorder %s425, 1
                %s430 = sphi %s392, %s392
                %s431 = sphi %s402, %s402
              $region87: #{custom-call.10} parent=83 // loop_header_branch
                %428 = sbr.rel (%p426) target = $region91
              $region88: #{custom-call.10} parent=83 // loop_body
                %v432 = vld [vmem:[%s430] sm:$0xff]
                %433 = vst [vmem:[%s431] sm:$0xff] %v432
                %v434 = vld [vmem:[%s430 + $0x8] sm:$0xff]
                %435 = vst [vmem:[%s431 + $0x8] sm:$0xff] %v434
              $region89: #{custom-call.10} parent=83 // loop_footer
                %s429 = sadd.s32 1, %s425
              $region90: #{custom-call.10} parent=83 // loop_footer_branch
                %424 = sbr.rel target = $region86
              $region91: #{custom-call.10} parent=83 // loop_exit
                _
            $region84: #{custom-call.10} parent=68 // pred_fallthru
              _
            // Predicated region
            $region92: #{custom-call.10} parent=68 // pred_check
              _
            $region93: #{custom-call.10} parent=68 // pred_check_branch
              %437 = sbr.rel target = $region95
            $region94: #{custom-call.10} parent=68 // pred_region
              _
            $region95: #{custom-call.10} parent=68 // pred_fallthru
              _
          $region69: #{custom-call.10} parent=64 // pred_fallthru
            _
          // Predicated region
          $region70: #{custom-call.10} parent=64 // pred_check
            _
          $region71: #{custom-call.10} parent=64 // pred_check_branch
            %408 = sbr.rel target = $region73
          $region72: #{custom-call.10} parent=64 // pred_region
            loop: start=0, step=1, limit=1
            $region74: #{custom-call.10} parent=72 // loop_pre_header
              _
            $region75: #{custom-call.10} parent=72 // loop_header
              %s411 = sphi 0, %s415
              %p412 = scmp.ge.s32.totalorder %s411, 1
              %s416 = sphi %s392, %s392
              %s417 = sphi %s402, %s402
            $region76: #{custom-call.10} parent=72 // loop_header_branch
              %414 = sbr.rel (%p412) target = $region80
            $region77: #{custom-call.10} parent=72 // loop_body
              %v418 = vld [vmem:[%s416] sm:$0xff]
              %419 = vst [vmem:[%s417] sm:$0xff] %v418
              %v420 = vld [vmem:[%s416 + $0x8] sm:$0xff]
              %421 = vst [vmem:[%s417 + $0x8] sm:$0xff] %v420
            $region78: #{custom-call.10} parent=72 // loop_footer
              %s415 = sadd.s32 1, %s411
            $region79: #{custom-call.10} parent=72 // loop_footer_branch
              %410 = sbr.rel target = $region75
            $region80: #{custom-call.10} parent=72 // loop_exit
              _
          $region73: #{custom-call.10} parent=64 // pred_fallthru
            _
        $region65: #{custom-call.10} parent=53 // pred_fallthru
          _
        %438 = vnop
        // Predicated region
        $region96: #{custom-call.10} parent=53 // pred_check
          %p439 = pneg %p59
        $region97: #{custom-call.10} parent=53 // pred_check_branch
          %441 = sbr.rel (%p439) target = $region99
        $region98: #{custom-call.10} parent=53 // pred_region
          %p442 = scmp.lt.s32.totalorder %s15, 0
          %s443 = ssub.s32 0, %s15
          %s444 = scalar_select %p442, %s443, %s15
          %s445 = sshrl.u32 %s444, 3
          %s446 = ssub.s32 0, %s445
          %s447 = scalar_select %p442, %s446, %s445
          %s448 = smul.addr %s447, 2
          %s449 = scalar_lea.vmem %s2, %s448
          // Predicated region
          $region100: #{custom-call.10} parent=98 // pred_check
            _
          $region101: #{custom-call.10} parent=98 // pred_check_branch
            %451 = sbr.rel (0) target = $region103
          $region102: #{custom-call.10} parent=98 // pred_region
            // Predicated region
            $region104: #{custom-call.10} parent=102 // pred_check
              _
            $region105: #{custom-call.10} parent=102 // pred_check_branch
              %453 = sbr.rel target = $region107
            $region106: #{custom-call.10} parent=102 // pred_region
              // Predicated region
              $region119: #{custom-call.10} parent=106 // pred_check
                _
              $region120: #{custom-call.10} parent=106 // pred_check_branch
                %468 = sbr.rel (0) target = $region122
              $region121: #{custom-call.10} parent=106 // pred_region
                loop: start=0, step=1, limit=1
                $region123: #{custom-call.10} parent=121 // loop_pre_header
                  _
                $region124: #{custom-call.10} parent=121 // loop_header
                  %s471 = sphi 0, %s475
                  %p472 = scmp.ge.s32.totalorder %s471, 1
                  %s476 = sphi %s396, %s396
                  %s477 = sphi %s449, %s449
                $region125: #{custom-call.10} parent=121 // loop_header_branch
                  %474 = sbr.rel (%p472) target = $region129
                $region126: #{custom-call.10} parent=121 // loop_body
                  %v478 = vld [vmem:[%s476] sm:$0x3]
                  %479 = vst [vmem:[%s477] sm:$0x3] %v478
                $region127: #{custom-call.10} parent=121 // loop_footer
                  %s475 = sadd.s32 1, %s471
                $region128: #{custom-call.10} parent=121 // loop_footer_branch
                  %470 = sbr.rel target = $region124
                $region129: #{custom-call.10} parent=121 // loop_exit
                  _
              $region122: #{custom-call.10} parent=106 // pred_fallthru
                _
            $region107: #{custom-call.10} parent=102 // pred_fallthru
              _
            // Predicated region
            $region108: #{custom-call.10} parent=102 // pred_check
              _
            $region109: #{custom-call.10} parent=102 // pred_check_branch
              %455 = sbr.rel (0) target = $region111
            $region110: #{custom-call.10} parent=102 // pred_region
              loop: start=0, step=1, limit=1
              $region112: #{custom-call.10} parent=110 // loop_pre_header
                _
              $region113: #{custom-call.10} parent=110 // loop_header
                %s458 = sphi 0, %s462
                %p459 = scmp.ge.s32.totalorder %s458, 1
                %s463 = sphi %s396, %s396
                %s464 = sphi %s449, %s449
              $region114: #{custom-call.10} parent=110 // loop_header_branch
                %461 = sbr.rel (%p459) target = $region118
              $region115: #{custom-call.10} parent=110 // loop_body
                %v465 = vld [vmem:[%s463] sm:$0x3]
                %466 = vst [vmem:[%s464] sm:$0x3] %v465
              $region116: #{custom-call.10} parent=110 // loop_footer
                %s462 = sadd.s32 1, %s458
              $region117: #{custom-call.10} parent=110 // loop_footer_branch
                %457 = sbr.rel target = $region113
              $region118: #{custom-call.10} parent=110 // loop_exit
                _
            $region111: #{custom-call.10} parent=102 // pred_fallthru
              _
          $region103: #{custom-call.10} parent=98 // pred_fallthru
            _
          %480 = vnop
        $region99: #{custom-call.10} parent=53 // pred_fallthru
          _
      $region54: #{custom-call.10} parent=5 // pred_fallthru
        _
      %p481 = scmp.le.s32.totalorder 2, %s5
      // Predicated region
      $region130: #{custom-call.10} parent=5 // pred_check
        %p482 = pneg %p481
      $region131: #{custom-call.10} parent=5 // pred_check_branch
        %484 = sbr.rel (%p482) target = $region133
      $region132: #{custom-call.10} parent=5 // pred_region
        %s485 = ssub.s32 %s5, 2
        %s486 = sand.u32 %s11, 1
        %s487 = sand.u32 %s11, 1
        %s488 = smul.addr %s487, 16
        %s489 = scalar_lea.vmem [#allocation1], %s488
        // Predicated region
        $region134: #{custom-call.10} parent=132 // pred_check
          %p490 = pneg %p65
        $region135: #{custom-call.10} parent=132 // pred_check_branch
          %492 = sbr.rel (%p490) target = $region137
        $region136: #{custom-call.10} parent=132 // pred_region
          %s493 = sand.u32 %s50, 1
          %s494 = sand.u32 %s50, 1
          %s495 = smul.addr %s494, 2
          %s496 = scalar_lea.vmem [#allocation3], %s495
        $region137: #{custom-call.10} parent=132 // pred_fallthru
          _
      $region133: #{custom-call.10} parent=5 // pred_fallthru
        _
    $region6: #{custom-call.10} parent=1 // loop_footer
      %s9 = sadd.s32 1, %s5
    $region7: #{custom-call.10} parent=1 // loop_footer_branch
      %4 = sbr.rel target = $region3
    $region8: #{custom-call.10} parent=1 // loop_exit
      _

// kernel: pinv_encoder_forward.1
$region0: #{pinv_encoder_forward.1}
  #allocation0 [shape = 'u32[]', space=smem, size = 0x4, offset = 0x4, fixed_abs, tag = 'smem constant byte address 0x4 - core index']
  #allocation1 [shape = 'u32[144,128]{1,0:T(1,128)}', space=vmem, size = 0x12000, scoped, tag = 'internal scratch']
  %s0 = inlined_call_operand.vmem [shape: bf16[2,3,32,129], index: 0, kind: input, shape index: {}]
  %s1 = inlined_call_operand.vmem [shape: bf16[32,32], index: 1, kind: input, shape index: {}]
  %s2 = inlined_call_operand.vmem [shape: f32[2,16,384], index: 2, kind: output, shape index: {}]
  %s3 = sld [smem:[#allocation0]]
  $region75: #{pinv_encoder_forward.1} parent=0
    _
  %s5 = ssub.s32 1, %s3
  %s6 = scalar_select 0, %s5, %s3
  $region1: #{pinv_encoder_forward.1} parent=0
    #allocation2 [shape = 'u8[16384]{0}', space=vmem, size = 0x4000, scoped, tag = 'output window, operand 0']
    loop: start=0, step=1, limit=8
    $region2: #{pinv_encoder_forward.1} parent=1 // loop_pre_header
      _
    $region3: #{pinv_encoder_forward.1} parent=1 // loop_header
      %s8 = sphi 0, %s12
      %p9 = scmp.ge.s32.totalorder %s8, 8
      %s15 = sphi 0, %s27
      %s16 = sphi 0, %s23
      %s17 = sphi 0, %s15
      %s18 = sphi 0, %s16
      %s19 = sphi 0, %s17
      %s20 = sphi 0, %s18
      %s32 = sphi 0, %s34
      %s35 = sphi 0, %s32
      %s36 = sphi 0, %s35
      %s52 = sphi 0, %s36
      %s56 = sphi 0, %s56
      %s58 = sphi 0, %s56
      %s59 = sphi 0, %s58
      %s73 = sphi 0, %s59
      %s81 = sphi 0, %s83
      %s84 = sphi 0, %s81
      %s85 = sphi 0, %s84
      %s101 = sphi 0, %s85
    $region4: #{pinv_encoder_forward.1} parent=1 // loop_header_branch
      %11 = sbr.rel (%p9) target = $region8
    $region5: #{pinv_encoder_forward.1} parent=1 // loop_body
      %s13 = ssub.s32 %s8, 1
      %s14 = ssub.s32 %s8, 2
      %s21 = sadd.s32 1, %s16
      %p22 = scmp.ge.s32.totalorder %s21, 3
      %s23 = scalar_select %p22, 0, %s21
      %s24 = sadd.s32 1, %s15
      %s25 = scalar_select %p22, %s24, %s15
      %p26 = scmp.ge.s32.totalorder %s25, 2
      %s27 = scalar_select %p26, 0, %s25
      %s28 = ssub.s32 %s15, %s27
      %s29 = ssub.s32 %s16, %s23
      %s30 = sor.u32 %s28, %s29
      %p31 = scmp.eq.s32.totalorder %s30, 0
      %s33 = sadd.s32 %s32, 1
      %s34 = scalar_select %p31, %s32, %s33
      %p37 = pneg %p31
      %p38 = scmp.eq.s32.totalorder %s8, 5
      %p39 = por %p37, %p38
      %p40 = scmp.ne.s32.totalorder %s32, %s35
      %p41 = scmp.eq.s32.totalorder %s8, 0
      %p42 = por %p40, %p41
      %p43 = scmp.ne.s32.totalorder %s32, %s35
      %p44 = scmp.eq.s32.totalorder %s13, 5
      %p45 = por %p43, %p44
      %p46 = scmp.ne.s32.totalorder %s35, %s36
      %p47 = scmp.eq.s32.totalorder %s13, 0
      %p48 = por %p46, %p47
      %p49 = scmp.ne.s32.totalorder %s35, %s36
      %p50 = scmp.eq.s32.totalorder %s14, 5
      %p51 = por %p49, %p50
      %p53 = scmp.ne.s32.totalorder %s36, %s52
      %p54 = scmp.eq.s32.totalorder %s14, 0
      %p55 = por %p53, %p54
      %s57 = sadd.s32 %s56, 1
      %p60 = scmp.eq.s32.totalorder %s8, 5
      %p61 = scmp.ne.s32.totalorder %s56, %s58
      %p62 = scmp.eq.s32.totalorder %s8, 0
      %p63 = por %p61, %p62
      %p64 = scmp.ne.s32.totalorder %s56, %s58
      %p65 = scmp.eq.s32.totalorder %s13, 5
      %p66 = por %p64, %p65
      %p67 = scmp.ne.s32.totalorder %s58, %s59
      %p68 = scmp.eq.s32.totalorder %s13, 0
      %p69 = por %p67, %p68
      %p70 = scmp.ne.s32.totalorder %s58, %s59
      %p71 = scmp.eq.s32.totalorder %s14, 5
      %p72 = por %p70, %p71
      %p74 = scmp.ne.s32.totalorder %s59, %s73
      %p75 = scmp.eq.s32.totalorder %s14, 0
      %p76 = por %p74, %p75
      %s77 = ssub.s32 %s15, %s27
      %s78 = ssub.s32 %s16, %s23
      %s79 = sor.u32 %s77, %s78
      %p80 = scmp.eq.s32.totalorder %s79, 0
      %s82 = sadd.s32 %s81, 1
      %s83 = scalar_select %p80, %s81, %s82
      %p86 = pneg %p80
      %p87 = scmp.eq.s32.totalorder %s8, 5
      %p88 = por %p86, %p87
      %p89 = scmp.ne.s32.totalorder %s81, %s84
      %p90 = scmp.eq.s32.totalorder %s8, 0
      %p91 = por %p89, %p90
      %p92 = scmp.ne.s32.totalorder %s81, %s84
      %p93 = scmp.eq.s32.totalorder %s13, 5
      %p94 = por %p92, %p93
      %p95 = scmp.ne.s32.totalorder %s84, %s85
      %p96 = scmp.eq.s32.totalorder %s13, 0
      %p97 = por %p95, %p96
      %p98 = scmp.ne.s32.totalorder %s84, %s85
      %p99 = scmp.eq.s32.totalorder %s14, 5
      %p100 = por %p98, %p99
      %p102 = scmp.ne.s32.totalorder %s85, %s101
      %p103 = scmp.eq.s32.totalorder %s14, 0
      %p104 = por %p102, %p103
      %p105 = scmp.le.s32.totalorder 1, %s8
      %p106 = scmp.lt.s32.totalorder %s8, 7
      %p107 = pnand %p105, %p106
      %p108 = pneg %p107
      // Predicated region
      $region9: #{pinv_encoder_forward.1} parent=5 // pred_check
        _
      $region10: #{pinv_encoder_forward.1} parent=5 // pred_check_branch
        %110 = sbr.rel (%p107) target = $region12
      $region11: #{pinv_encoder_forward.1} parent=5 // pred_region
        %s111 = ssub.s32 %s8, 1
        // Predicated region
        $region13: #{pinv_encoder_forward.1} parent=11 // pred_check
          %p112 = pneg %p69
        $region14: #{pinv_encoder_forward.1} parent=11 // pred_check_branch
          %114 = sbr.rel (%p112) target = $region16
        $region15: #{pinv_encoder_forward.1} parent=11 // pred_region
          _
        $region16: #{pinv_encoder_forward.1} parent=11 // pred_fallthru
          _
      $region12: #{pinv_encoder_forward.1} parent=5 // pred_fallthru
        _
      %p115 = scmp.lt.s32.totalorder %s8, 6
      // Predicated region
      $region17: #{pinv_encoder_forward.1} parent=5 // pred_check
        %p116 = pneg %p115
      $region18: #{pinv_encoder_forward.1} parent=5 // pred_check_branch
        %118 = sbr.rel (%p116) target = $region20
      $region19: #{pinv_encoder_forward.1} parent=5 // pred_region
        // Predicated region
        $region21: #{pinv_encoder_forward.1} parent=19 // pred_check
          %p119 = pneg %p42
        $region22: #{pinv_encoder_forward.1} parent=19 // pred_check_branch
          %121 = sbr.rel (%p119) target = $region24
        $region23: #{pinv_encoder_forward.1} parent=19 // pred_region
          %p122 = scmp.lt.s32.totalorder %s15, 1
          %s123 = scalar_select %p122, %s15, 1
          %p124 = scmp.lt.s32.totalorder %s16, 2
          %s125 = scalar_select %p124, %s16, 2
          %s126 = smul.addr %s125, 8
          %s127 = smul.addr %s123, 24
          %s128 = sadd.s32 %s126, %s127
          %s129 = smul.addr %s128, 4
          %s130 = scalar_lea.vmem %s0, %s129
        $region24: #{pinv_encoder_forward.1} parent=19 // pred_fallthru
          _
      $region20: #{pinv_encoder_forward.1} parent=5 // pred_fallthru
        _
      %p131 = scmp.le.s32.totalorder 1, %s8
      %p132 = scmp.lt.s32.totalorder %s8, 7
      %p133 = pnand %p131, %p132
      %p134 = pneg %p133
      // Predicated region
      $region25: #{pinv_encoder_forward.1} parent=5 // pred_check
        _
      $region26: #{pinv_encoder_forward.1} parent=5 // pred_check_branch
        %136 = sbr.rel (%p133) target = $region28
      $region27: #{pinv_encoder_forward.1} parent=5 // pred_region
        %s137 = ssub.s32 %s8, 1
        %p138 = scmp.lt.s32.totalorder %s17, 1
        %s139 = scalar_select %p138, %s17, 1
        %p140 = scmp.lt.s32.totalorder %s18, 2
        %s141 = scalar_select %p140, %s18, 2
        %s142 = smul.addr %s141, 8
        %s143 = smul.addr %s139, 24
        %s144 = sadd.s32 %s142, %s143
        %s145 = smul.addr %s144, 4
        %s146 = scalar_lea.vmem %s0, %s145
        %p147 = pneg %p48
        %p148 = pneg %p45
        %p149 = pneg %p69
        %p150 = pneg %p66
        %p151 = pneg %p97
        %p152 = pneg %p94
        %s153 = sand.u32 %s84, 1
        %s154 = sand.u32 %s84, 1
        %s155 = smul.addr %s154, 16
        %s156 = scalar_lea.vmem [#allocation2], %s155
        %p157 = scmp.lt.s32.totalorder %s17, 1
        %s158 = scalar_select %p157, %s17, 1
        %p159 = scmp.lt.s32.totalorder %s18, 2
        %s160 = scalar_select %p159, %s18, 2
        %s161 = smul.addr %s160, 8
        %s162 = smul.addr %s158, 24
        %s163 = sadd.s32 %s161, %s162
        %s164 = smul.addr %s163, 4
        %s165 = scalar_lea.vmem %s0, %s164
        %v167 = vld [vmem:[%s165] sm:$0xff]
        %v168 = vld [vmem:[%s165 + $0x8] sm:$0xff]
        %v169 = vld [vmem:[%s165 + $0x10] sm:$0xff]
        %v170 = vld [vmem:[%s165 + $0x18] sm:$0xff]
        %v171 = vld [vmem:[%s1] sm:$0xf]
        %v172 = vld [vmem:[%s1 + $0x4] sm:$0xf]
        %v173 = vld [vmem:[%s1 + $0x8] sm:$0xf]
        %v174 = vld [vmem:[%s1 + $0xc] sm:$0xf]
        %v179 = vunpack.c.l.b16 %v171
        %v180 = vunpack.c.l.b16 %v172
        %v181 = vunpack.c.l.b16 %v173
        %v182 = vunpack.c.l.b16 %v174
        %v183 = vpack.c.b16 %v180, %v179
        %v184 = vpack.c.b16 %v182, %v181
        %v189 = vunpack.c.l.b16 %v167
        %v190 = vunpack.c.h.b16 %v167
        %v191 = vunpack.c.l.b16 %v168
        %v192 = vunpack.c.h.b16 %v168
        %v193 = vunpack.c.l.b16 %v169
        %v194 = vunpack.c.h.b16 %v169
        %v195 = vunpack.c.l.b16 %v170
        %v196 = vunpack.c.h.b16 %v170
        %v197 = vpack.c.b16 %v191, %v189
        %v198 = vpack.c.b16 %v192, %v190
        %v199 = vpack.c.b16 %v195, %v193
        %v200 = vpack.c.b16 %v196, %v194
        %vm205 = vcmask 261120
        %v207 = vsel %vm205, %v183, 0
        %v210 = vsel %vm205, %v184, 0
        %212 = vmatprep.subr.bf16.mxu0 %v198
        %213 = vmatpush1.bf16.msra.mxu0 %v197
        %214 = vmatprep.subr.bf16.mxu0 %v200
        %215 = vmatpush1.bf16.msra.mxu0 %v199
        %216 = vmatprep.subr.bf16.mxu0 0
        %217 = vmatpush1.bf16.msra.mxu0 0
        %218 = vmatprep.subr.bf16.mxu0 0
        %219 = vmatpush1.bf16.msra.mxu0 0
        %220 = vmatprep.subr.bf16.mxu0 0
        %221 = vmatpush1.bf16.msra.mxu0 0
        %222 = vmatprep.subr.bf16.mxu0 0
        %223 = vmatpush1.bf16.msra.mxu0 0
        %224 = vmatprep.subr.bf16.mxu0 0
        %225 = vmatpush1.bf16.msra.mxu0 0
        %226 = vmatprep.subr.bf16.mxu0 0
        %227 = vmatpush1.bf16.msra.mxu0 0
        %228 = vmatprep.subr.bf16.mxu0 0
        %229 = vmatpush1.bf16.msra.mxu0 0
        %230 = vmatprep.subr.bf16.mxu0 0
        %231 = vmatpush1.bf16.msra.mxu0 0
        %232 = vmatprep.subr.bf16.mxu0 0
        %233 = vmatpush1.bf16.msra.mxu0 0
        %234 = vmatprep.subr.bf16.mxu0 0
        %235 = vmatpush1.bf16.msra.mxu0 0
        %236 = vmatprep.subr.bf16.mxu0 0
        %237 = vmatpush1.bf16.msra.mxu0 0
        %238 = vmatprep.subr.bf16.mxu0 0
        %239 = vmatpush1.bf16.msra.mxu0 0
        %240 = vmatprep.subr.bf16.mxu0 0
        %241 = vmatpush1.bf16.msra.mxu0 0
        %242 = vmatprep.subr.bf16.mxu0 0
        %243 = vmatpush1.bf16.msra.mxu0 0
        %244 = vmatprep.mubr.bf16.mxu0 0
        %245 = vmatmul.mubr.bf16.gmra.mrb[0].mxu0 %v207
        %v246 = vpop.f32.mrb[0].mxu0
        %v247 = vadd.f32 0.0, %v246
        %v248 = vpop.f32.mrb[0].mxu0
        %v249 = vadd.f32 0.0, %v248
        %v250 = vpop.f32.mrb[0].mxu0
        %v251 = vadd.f32 0.0, %v250
        %v252 = vpop.f32.mrb[0].mxu0
        %v253 = vadd.f32 0.0, %v252
        %254 = vmatprep.mubr.bf16.mxu0 0
        %255 = vmatmul.mubr.bf16.gmra.mrb[0].mxu0 %v210
        %v256 = vpop.f32.mrb[0].mxu0
        %v257 = vadd.f32 0.0, %v256
        %v258 = vpop.f32.mrb[0].mxu0
        %v259 = vpop.f32.mrb[0].mxu0
        %v260 = vadd.f32 0.0, %v259
        %v261 = vpop.f32.mrb[0].mxu0
        %262 = vdwg.mxu0
        %265 = vrot.lane.b32.xlu0 %v257, 1
        %v266 = vpop.permute.xlu0 %265
        %267 = vrot.lane.b32.xlu0 %v260, 1
        %v268 = vpop.permute.xlu0 %267
        %v271 = vadd.f32 %v247, %v266
        %v272 = vadd.f32 %v249, %v266
        %v273 = vadd.f32 %v251, %v268
        %v274 = vadd.f32 %v253, %v268
        %279 = vrot.lane.b32.xlu0 %v271, 127
        %v280 = vpop.permute.xlu0 %279
        %281 = vrot.lane.b32.xlu0 %v272, 127
        %v282 = vpop.permute.xlu0 %281
        %283 = vrot.lane.b32.xlu0 %v273, 127
        %v284 = vpop.permute.xlu0 %283
        %285 = vrot.lane.b32.xlu0 %v274, 127
        %v286 = vpop.permute.xlu0 %285
        %vm287 = vcmask 1039360
        %v288 = vsel %vm287, %v280, %v282
        %v289 = vsel %vm287, %v284, %v286
        %292 = vst [vmem:[%s156] sm:$0xff] %v288
        %293 = vst [vmem:[%s156 + $0x8] sm:$0xff] %v289
        %s294 = sand.u32 %s84, 1
        %s295 = sand.u32 %s84, 1
        %s296 = smul.addr %s295, 16
        %s297 = scalar_lea.vmem [#allocation2], %s296
        // Predicated region
        $region29: #{pinv_encoder_forward.1} parent=27 // pred_check
          %p298 = pneg %p94
        $region30: #{pinv_encoder_forward.1} parent=27 // pred_check_branch
          %300 = sbr.rel (%p298) target = $region32
        $region31: #{pinv_encoder_forward.1} parent=27 // pred_region
          %s301 = smul.addr %s17, 6
          %s302 = sadd.s32 %s18, %s301
          %s303 = smul.addr %s302, 8
          %s304 = scalar_lea.vmem %s2, %s303
          // Predicated region
          $region33: #{pinv_encoder_forward.1} parent=31 // pred_check
            _
          $region34: #{pinv_encoder_forward.1} parent=31 // pred_check_branch
            %306 = sbr.rel (0) target = $region36
          $region35: #{pinv_encoder_forward.1} parent=31 // pred_region
            // Predicated region
            $region37: #{pinv_encoder_forward.1} parent=35 // pred_check
              _
            $region38: #{pinv_encoder_forward.1} parent=35 // pred_check_branch
              %308 = sbr.rel (0) target = $region40
            $region39: #{pinv_encoder_forward.1} parent=35 // pred_region
              // Predicated region
              $region52: #{pinv_encoder_forward.1} parent=39 // pred_check
                _
              $region53: #{pinv_encoder_forward.1} parent=39 // pred_check_branch
                %325 = sbr.rel (0) target = $region55
              $region54: #{pinv_encoder_forward.1} parent=39 // pred_region
                loop: start=0, step=1, limit=1
                $region56: #{pinv_encoder_forward.1} parent=54 // loop_pre_header
                  _
                $region57: #{pinv_encoder_forward.1} parent=54 // loop_header
                  %s327 = sphi 0, %s331
                  %p328 = scmp.ge.s32.totalorder %s327, 1
                  %s332 = sphi %s297, %s297
                  %s333 = sphi %s304, %s304
                $region58: #{pinv_encoder_forward.1} parent=54 // loop_header_branch
                  %330 = sbr.rel (%p328) target = $region62
                $region59: #{pinv_encoder_forward.1} parent=54 // loop_body
                  %v334 = vld [vmem:[%s332] sm:$0xff]
                  %335 = vst [vmem:[%s333] sm:$0xff] %v334
                  %v336 = vld [vmem:[%s332 + $0x8] sm:$0xff]
                  %337 = vst [vmem:[%s333 + $0x18] sm:$0xff] %v336
                $region60: #{pinv_encoder_forward.1} parent=54 // loop_footer
                  %s331 = sadd.s32 1, %s327
                $region61: #{pinv_encoder_forward.1} parent=54 // loop_footer_branch
                  %326 = sbr.rel target = $region57
                $region62: #{pinv_encoder_forward.1} parent=54 // loop_exit
                  _
              $region55: #{pinv_encoder_forward.1} parent=39 // pred_fallthru
                _
              // Predicated region
              $region63: #{pinv_encoder_forward.1} parent=39 // pred_check
                _
              $region64: #{pinv_encoder_forward.1} parent=39 // pred_check_branch
                %339 = sbr.rel target = $region66
              $region65: #{pinv_encoder_forward.1} parent=39 // pred_region
                _
              $region66: #{pinv_encoder_forward.1} parent=39 // pred_fallthru
                _
            $region40: #{pinv_encoder_forward.1} parent=35 // pred_fallthru
              _
            // Predicated region
            $region41: #{pinv_encoder_forward.1} parent=35 // pred_check
              _
            $region42: #{pinv_encoder_forward.1} parent=35 // pred_check_branch
              %310 = sbr.rel target = $region44
            $region43: #{pinv_encoder_forward.1} parent=35 // pred_region
              loop: start=0, step=1, limit=1
              $region45: #{pinv_encoder_forward.1} parent=43 // loop_pre_header
                _
              $region46: #{pinv_encoder_forward.1} parent=43 // loop_header
                %s313 = sphi 0, %s317
                %p314 = scmp.ge.s32.totalorder %s313, 1
                %s318 = sphi %s297, %s297
                %s319 = sphi %s304, %s304
              $region47: #{pinv_encoder_forward.1} parent=43 // loop_header_branch
                %316 = sbr.rel (%p314) target = $region51
              $region48: #{pinv_encoder_forward.1} parent=43 // loop_body
                %v320 = vld [vmem:[%s318] sm:$0xff]
                %321 = vst [vmem:[%s319] sm:$0xff] %v320
                %v322 = vld [vmem:[%s318 + $0x8] sm:$0xff]
                %323 = vst [vmem:[%s319 + $0x18] sm:$0xff] %v322
              $region49: #{pinv_encoder_forward.1} parent=43 // loop_footer
                %s317 = sadd.s32 1, %s313
              $region50: #{pinv_encoder_forward.1} parent=43 // loop_footer_branch
                %312 = sbr.rel target = $region46
              $region51: #{pinv_encoder_forward.1} parent=43 // loop_exit
                _
            $region44: #{pinv_encoder_forward.1} parent=35 // pred_fallthru
              _
          $region36: #{pinv_encoder_forward.1} parent=31 // pred_fallthru
            _
          %340 = vnop
        $region32: #{pinv_encoder_forward.1} parent=27 // pred_fallthru
          _
      $region28: #{pinv_encoder_forward.1} parent=5 // pred_fallthru
        _
      %p341 = scmp.le.s32.totalorder 2, %s8
      // Predicated region
      $region67: #{pinv_encoder_forward.1} parent=5 // pred_check
        %p342 = pneg %p341
      $region68: #{pinv_encoder_forward.1} parent=5 // pred_check_branch
        %344 = sbr.rel (%p342) target = $region70
      $region69: #{pinv_encoder_forward.1} parent=5 // pred_region
        %s345 = ssub.s32 %s8, 2
        // Predicated region
        $region71: #{pinv_encoder_forward.1} parent=69 // pred_check
          %p346 = pneg %p100
        $region72: #{pinv_encoder_forward.1} parent=69 // pred_check_branch
          %348 = sbr.rel (%p346) target = $region74
        $region73: #{pinv_encoder_forward.1} parent=69 // pred_region
          %s349 = sand.u32 %s85, 1
          %s350 = sand.u32 %s85, 1
          %s351 = smul.addr %s350, 16
          %s352 = scalar_lea.vmem [#allocation2], %s351
        $region74: #{pinv_encoder_forward.1} parent=69 // pred_fallthru
          _
      $region70: #{pinv_encoder_forward.1} parent=5 // pred_fallthru
        _
    $region6: #{pinv_encoder_forward.1} parent=1 // loop_footer
      %s12 = sadd.s32 1, %s8
    $region7: #{pinv_encoder_forward.1} parent=1 // loop_footer_branch
      %7 = sbr.rel target = $region3
    $region8: #{pinv_encoder_forward.1} parent=1 // loop_exit
      _

</llo_original>
